<compile_context>
chip_gen: v6e
topology: v6e:2x2x1
jax: 0.10.0
libtpu: 0.0.40
codegen_flags: <defaults>
</compile_context>

<pallas_src>
import jax
import jax.numpy as jnp
from jax import lax
from jax.experimental import pallas as pl
from jax.experimental.pallas import tpu as pltpu


def _fused_kernel(x_ref, we_ref, s1_ref, b1_ref, b2_ref, rm_ref, o_ref):
    # x_ref  : (1, TC, H, W)      raw NCHW input channels of this tile
    # we_ref : (3, 3, TC, 1, W)   depthwise taps * BN2 scale, broadcast over W,
    #                             wrap-around border column pre-zeroed per dx
    # s1_ref, b1_ref, b2_ref : (TC, 1, W)  folded BN params, pre-broadcast on W
    # rm_ref : (2, 1, H, 1)       row-validity masks [h > 0, h < H - 1] (f32)
    # o_ref  : (1, TC, H, W)
    H = x_ref.shape[2]
    W = x_ref.shape[3]

    # BN1 (folded to scale/bias) + ReLU
    y = jnp.maximum(x_ref[0] * s1_ref[...] + b1_ref[...], 0.0)        # (TC,H,W)

    # Column (+-1 along W) shifts: lane rolls on the XLU.  Wrap-around columns
    # are zeroed by the pre-masked border columns inside we_ref.
    y_l = pltpu.roll(y, 1, axis=2)        # position w holds y[..., w-1]
    y_r = pltpu.roll(y, W - 1, axis=2)    # position w holds y[..., w+1]

    # Per-kernel-row weighted sum over the three column taps.
    def row_sum(dy):
        return (y_l * we_ref[dy, 0] + y * we_ref[dy, 1] + y_r * we_ref[dy, 2])

    s_top = row_sum(0)   # uses input row h-1
    s_mid = row_sum(1)   # uses input row h
    s_bot = row_sum(2)   # uses input row h+1

    # Row (+-1 along H) shifts: sublane rolls; out-of-image rows are zeroed by
    # the row-validity masks (zero padding happens after BN+ReLU, matching the
    # reference module).
    acc = s_mid
    acc = acc + pltpu.roll(s_top, 1, axis=1) * rm_ref[0]
    acc = acc + pltpu.roll(s_bot, H - 1, axis=1) * rm_ref[1]

    # BN2 (scale already folded into the taps) + bias + ReLU
    o_ref[0] = jnp.maximum(acc + b2_ref[...], 0.0).astype(o_ref.dtype)


def _pick_tile_c(N, C, H, W, max_block_bytes=1 << 20):
    """Largest sublane-aligned channel tile that fits the VMEM budget and still
    leaves >= 2 grid steps (so both v7x TensorCores get work)."""
    lanes = ((W + 127) // 128) * 128          # lane-padded footprint per row
    per_chan = H * lanes * 4
    cands = [d for d in range(8, C + 1, 8) if C % d == 0]
    if not cands:
        cands = [C]                           # fall back to the full-C block
    fitting = [d for d in cands if d * per_chan <= max_block_bytes] or [cands[0]]
    tile_c = fitting[-1]
    if N * (C // tile_c) < 2:
        for d in reversed(fitting):
            if N * (C // d) >= 2:
                tile_c = d
                break
    return tile_c


def fused_bn_relu_dwconv_bn_relu(x_nchw, w_dw, scale1, bias1, scale2, bias2,
                                 *, tile_c=None):
    """x_nchw: (N, C, H, W) float32.  w_dw: (C, 1, 3, 3) depthwise weights.
    scale/bias: BN folded to per-channel scale/bias (inference semantics)."""
    N, C, H, W = x_nchw.shape
    f32 = jnp.float32
    x = x_nchw.astype(f32)

    if tile_c is None:
        tile_c = _pick_tile_c(N, C, H, W)
    assert C % tile_c == 0, "tile_c must divide C"
    assert tile_c % 8 == 0 or tile_c == C, "channel tile must be sublane-aligned"
    nc = C // tile_c

    # Fold BN2 scale into the depthwise taps, broadcast each tap over W and
    # pre-zero the wrap-around border column of the shifted taps (this handles
    # conv zero-padding along W with no extra in-kernel masking).
    w33c = jnp.transpose(w_dw[:, 0, :, :], (1, 2, 0)).astype(f32)          # (3,3,C)
    w33c = w33c * scale2.astype(f32)[None, None, :]
    col = jnp.arange(W)
    colmask = jnp.stack([col > 0,                      # dx=0 tap: input at w-1
                         jnp.ones((W,), bool),         # dx=1 tap: no shift
                         col < W - 1], axis=0).astype(f32)   # dx=2: input at w+1
    w_eff = w33c[:, :, :, None, None] * colmask[None, :, None, None, :]    # (3,3,C,1,W)

    # BN params pre-broadcast over W -> in-kernel broadcasts are sublane-only.
    ones_w = jnp.ones((1, 1, W), f32)
    s1 = scale1.astype(f32)[:, None, None] * ones_w                        # (C,1,W)
    b1 = bias1.astype(f32)[:, None, None] * ones_w
    b2 = bias2.astype(f32)[:, None, None] * ones_w

    # Row-validity masks for the +-1 H shifts (zero-pad rows post BN+ReLU).
    h_idx = jnp.arange(H)
    rowmask = jnp.stack([h_idx > 0, h_idx < H - 1], axis=0).astype(f32)
    rowmask = rowmask.reshape(2, 1, H, 1)                                  # (2,1,H,1)

    out = pl.pallas_call(
        _fused_kernel,
        out_shape=jax.ShapeDtypeStruct((N, C, H, W), f32),
        grid_spec=pltpu.PrefetchScalarGridSpec(
            num_scalar_prefetch=0,
            grid=(N, nc),
            in_specs=[
                pl.BlockSpec((1, tile_c, H, W), lambda n, c: (n, c, 0, 0)),
                pl.BlockSpec((3, 3, tile_c, 1, W), lambda n, c: (0, 0, c, 0, 0)),
                pl.BlockSpec((tile_c, 1, W), lambda n, c: (c, 0, 0)),
                pl.BlockSpec((tile_c, 1, W), lambda n, c: (c, 0, 0)),
                pl.BlockSpec((tile_c, 1, W), lambda n, c: (c, 0, 0)),
                pl.BlockSpec((2, 1, H, 1), lambda n, c: (0, 0, 0, 0)),
            ],
            out_specs=pl.BlockSpec((1, tile_c, H, W), lambda n, c: (n, c, 0, 0)),
        ),
        compiler_params=pltpu.CompilerParams(
            dimension_semantics=("parallel", "parallel"),
            vmem_limit_bytes=32 * 1024 * 1024,
        ),
    )(x, w_eff, s1, b1, b2, rowmask)
    return out


def _reference(x_nchw, w_dw, scale1, bias1, scale2, bias2):
    # Pure-JAX reference for verification.
    C = x_nchw.shape[1]
    y = jnp.maximum(x_nchw * scale1[None, :, None, None]
                    + bias1[None, :, None, None], 0.0)
    z = lax.conv_general_dilated(
        y, w_dw, window_strides=(1, 1), padding=((1, 1), (1, 1)),
        dimension_numbers=("NCHW", "OIHW", "NCHW"), feature_group_count=C)
    return jnp.maximum(z * scale2[None, :, None, None]
                       + bias2[None, :, None, None], 0.0)


if __name__ == "__main__":
    # Channels fixed at 72 by the module; batch/spatial kept small.
    # tile_c=24 exercises the channel-tiled grid path that the real 56x56
    # input would use (grid = (2, 3), all "parallel").
    N, C, H, W = 2, 72, 16, 16
    eps = 0.001

    key = jax.random.PRNGKey(0)
    k = jax.random.split(key, 10)

    x = jax.random.normal(k[0], (N, C, H, W), dtype=jnp.float32)

    # BatchNorm2d #1 parameters (eval mode: running stats)
    gamma1 = jax.random.normal(k[1], (C,), dtype=jnp.float32) * 0.1 + 1.0
    beta1 = jax.random.normal(k[2], (C,), dtype=jnp.float32) * 0.1
    rmean1 = jax.random.normal(k[3], (C,), dtype=jnp.float32) * 0.1
    rvar1 = jnp.abs(jax.random.normal(k[4], (C,), dtype=jnp.float32)) * 0.1 + 1.0

    # Depthwise conv weight, PyTorch shape (out=C, in/groups=1, 3, 3)
    w_dw = jax.random.normal(k[5], (C, 1, 3, 3), dtype=jnp.float32) * 0.2

    # BatchNorm2d #2 parameters
    gamma2 = jax.random.normal(k[6], (C,), dtype=jnp.float32) * 0.1 + 1.0
    beta2 = jax.random.normal(k[7], (C,), dtype=jnp.float32) * 0.1
    rmean2 = jax.random.normal(k[8], (C,), dtype=jnp.float32) * 0.1
    rvar2 = jnp.abs(jax.random.normal(k[9], (C,), dtype=jnp.float32)) * 0.1 + 1.0

    # Fold BN into per-channel scale/bias (inference semantics)
    scale1 = gamma1 / jnp.sqrt(rvar1 + eps)
    bias1 = beta1 - rmean1 * scale1
    scale2 = gamma2 / jnp.sqrt(rvar2 + eps)
    bias2 = beta2 - rmean2 * scale2

    out = fused_bn_relu_dwconv_bn_relu(x, w_dw, scale1, bias1, scale2, bias2,
                                       tile_c=24)
    out = jax.block_until_ready(out)

    ref = _reference(x, w_dw, scale1, bias1, scale2, bias2)
    assert out.shape == (N, C, H, W)
    err = jnp.max(jnp.abs(out - ref))
    assert jnp.allclose(out, ref, atol=1e-4, rtol=1e-4), f"max abs err = {err}"

    print("KERNEL_OK")
</pallas_src>

<mosaic_0001>
module attributes {stable_mosaic.version = 11 : i64} {
  func.func @_fused_kernel(%arg0: i32, %arg1: i32, %arg2: memref<1x24x16x16xf32, #tpu.memory_space<vmem>>, %arg3: memref<3x3x24x1x16xf32, #tpu.memory_space<vmem>>, %arg4: memref<24x1x16xf32, #tpu.memory_space<vmem>>, %arg5: memref<24x1x16xf32, #tpu.memory_space<vmem>>, %arg6: memref<24x1x16xf32, #tpu.memory_space<vmem>>, %arg7: memref<2x1x16x1xf32, #tpu.memory_space<vmem>>, %arg8: memref<1x24x16x16xf32, #tpu.memory_space<vmem>>) attributes {dimension_semantics = [#tpu.dimension_semantics<parallel>, #tpu.dimension_semantics<parallel>], iteration_bounds = array<i64: 2, 3>, scalar_prefetch = 0 : i64, scratch_operands = 0 : i64, tpu.core_type = #tpu.core_type<tc>, window_params = [{transform_indices = @transform_0, window_bounds = array<i64: 1, 24, 16, 16>}, {transform_indices = @transform_1, window_bounds = array<i64: 3, 3, 24, 1, 16>}, {transform_indices = @transform_2, window_bounds = array<i64: 24, 1, 16>}, {transform_indices = @transform_3, window_bounds = array<i64: 24, 1, 16>}, {transform_indices = @transform_4, window_bounds = array<i64: 24, 1, 16>}, {pipeline_mode = #tpu.pipeline_mode<synchronous>, transform_indices = @transform_5, window_bounds = array<i64: 2, 1, 16, 1>}, {transform_indices = @transform_6, window_bounds = array<i64: 1, 24, 16, 16>}]} {
    %c0 = arith.constant 0 : index
    %c0_0 = arith.constant 0 : index
    %c0_1 = arith.constant 0 : index
    %c0_2 = arith.constant 0 : index
    %0 = vector.load %arg2[%c0, %c0_0, %c0_1, %c0_2] : memref<1x24x16x16xf32, #tpu.memory_space<vmem>>, vector<1x24x16x16xf32>
    %1 = vector.shape_cast %0 : vector<1x24x16x16xf32> to vector<24x16x16xf32>
    %c0_3 = arith.constant 0 : index
    %c0_4 = arith.constant 0 : index
    %c0_5 = arith.constant 0 : index
    %2 = vector.load %arg4[%c0_3, %c0_4, %c0_5] : memref<24x1x16xf32, #tpu.memory_space<vmem>>, vector<24x1x16xf32>
    %3 = vector.broadcast %2 : vector<24x1x16xf32> to vector<24x16x16xf32>
    %4 = arith.mulf %1, %3 : vector<24x16x16xf32>
    %c0_6 = arith.constant 0 : index
    %c0_7 = arith.constant 0 : index
    %c0_8 = arith.constant 0 : index
    %5 = vector.load %arg5[%c0_6, %c0_7, %c0_8] : memref<24x1x16xf32, #tpu.memory_space<vmem>>, vector<24x1x16xf32>
    %6 = vector.broadcast %5 : vector<24x1x16xf32> to vector<24x16x16xf32>
    %7 = arith.addf %4, %6 : vector<24x16x16xf32>
    %cst = arith.constant 0.000000e+00 : f32
    %8 = vector.broadcast %cst : f32 to vector<24x16x16xf32>
    %9 = arith.maximumf %7, %8 : vector<24x16x16xf32>
    %c1_i32 = arith.constant 1 : i32
    %10 = tpu.dynamic_rotate %9 by %c1_i32 dim 2 : vector<24x16x16xf32>, i32 -> vector<24x16x16xf32>
    %c15_i32 = arith.constant 15 : i32
    %11 = tpu.dynamic_rotate %9 by %c15_i32 dim 2 : vector<24x16x16xf32>, i32 -> vector<24x16x16xf32>
    %c0_9 = arith.constant 0 : index
    %c0_10 = arith.constant 0 : index
    %c0_11 = arith.constant 0 : index
    %c0_12 = arith.constant 0 : index
    %c0_13 = arith.constant 0 : index
    %12 = vector.load %arg3[%c0_9, %c0_10, %c0_11, %c0_12, %c0_13] : memref<3x3x24x1x16xf32, #tpu.memory_space<vmem>>, vector<1x1x24x1x16xf32>
    %13 = vector.shape_cast %12 : vector<1x1x24x1x16xf32> to vector<24x1x16xf32>
    %14 = vector.broadcast %13 : vector<24x1x16xf32> to vector<24x16x16xf32>
    %15 = arith.mulf %10, %14 : vector<24x16x16xf32>
    %c0_14 = arith.constant 0 : index
    %c1 = arith.constant 1 : index
    %c0_15 = arith.constant 0 : index
    %c0_16 = arith.constant 0 : index
    %c0_17 = arith.constant 0 : index
    %16 = vector.load %arg3[%c0_14, %c1, %c0_15, %c0_16, %c0_17] : memref<3x3x24x1x16xf32, #tpu.memory_space<vmem>>, vector<1x1x24x1x16xf32>
    %17 = vector.shape_cast %16 : vector<1x1x24x1x16xf32> to vector<24x1x16xf32>
    %18 = vector.broadcast %17 : vector<24x1x16xf32> to vector<24x16x16xf32>
    %19 = arith.mulf %9, %18 : vector<24x16x16xf32>
    %20 = arith.addf %15, %19 : vector<24x16x16xf32>
    %c0_18 = arith.constant 0 : index
    %c2 = arith.constant 2 : index
    %c0_19 = arith.constant 0 : index
    %c0_20 = arith.constant 0 : index
    %c0_21 = arith.constant 0 : index
    %21 = vector.load %arg3[%c0_18, %c2, %c0_19, %c0_20, %c0_21] : memref<3x3x24x1x16xf32, #tpu.memory_space<vmem>>, vector<1x1x24x1x16xf32>
    %22 = vector.shape_cast %21 : vector<1x1x24x1x16xf32> to vector<24x1x16xf32>
    %23 = vector.broadcast %22 : vector<24x1x16xf32> to vector<24x16x16xf32>
    %24 = arith.mulf %11, %23 : vector<24x16x16xf32>
    %25 = arith.addf %20, %24 : vector<24x16x16xf32>
    %c1_22 = arith.constant 1 : index
    %c0_23 = arith.constant 0 : index
    %c0_24 = arith.constant 0 : index
    %c0_25 = arith.constant 0 : index
    %c0_26 = arith.constant 0 : index
    %26 = vector.load %arg3[%c1_22, %c0_23, %c0_24, %c0_25, %c0_26] : memref<3x3x24x1x16xf32, #tpu.memory_space<vmem>>, vector<1x1x24x1x16xf32>
    %27 = vector.shape_cast %26 : vector<1x1x24x1x16xf32> to vector<24x1x16xf32>
    %28 = vector.broadcast %27 : vector<24x1x16xf32> to vector<24x16x16xf32>
    %29 = arith.mulf %10, %28 : vector<24x16x16xf32>
    %c1_27 = arith.constant 1 : index
    %c1_28 = arith.constant 1 : index
    %c0_29 = arith.constant 0 : index
    %c0_30 = arith.constant 0 : index
    %c0_31 = arith.constant 0 : index
    %30 = vector.load %arg3[%c1_27, %c1_28, %c0_29, %c0_30, %c0_31] : memref<3x3x24x1x16xf32, #tpu.memory_space<vmem>>, vector<1x1x24x1x16xf32>
    %31 = vector.shape_cast %30 : vector<1x1x24x1x16xf32> to vector<24x1x16xf32>
    %32 = vector.broadcast %31 : vector<24x1x16xf32> to vector<24x16x16xf32>
    %33 = arith.mulf %9, %32 : vector<24x16x16xf32>
    %34 = arith.addf %29, %33 : vector<24x16x16xf32>
    %c1_32 = arith.constant 1 : index
    %c2_33 = arith.constant 2 : index
    %c0_34 = arith.constant 0 : index
    %c0_35 = arith.constant 0 : index
    %c0_36 = arith.constant 0 : index
    %35 = vector.load %arg3[%c1_32, %c2_33, %c0_34, %c0_35, %c0_36] : memref<3x3x24x1x16xf32, #tpu.memory_space<vmem>>, vector<1x1x24x1x16xf32>
    %36 = vector.shape_cast %35 : vector<1x1x24x1x16xf32> to vector<24x1x16xf32>
    %37 = vector.broadcast %36 : vector<24x1x16xf32> to vector<24x16x16xf32>
    %38 = arith.mulf %11, %37 : vector<24x16x16xf32>
    %39 = arith.addf %34, %38 : vector<24x16x16xf32>
    %c2_37 = arith.constant 2 : index
    %c0_38 = arith.constant 0 : index
    %c0_39 = arith.constant 0 : index
    %c0_40 = arith.constant 0 : index
    %c0_41 = arith.constant 0 : index
    %40 = vector.load %arg3[%c2_37, %c0_38, %c0_39, %c0_40, %c0_41] : memref<3x3x24x1x16xf32, #tpu.memory_space<vmem>>, vector<1x1x24x1x16xf32>
    %41 = vector.shape_cast %40 : vector<1x1x24x1x16xf32> to vector<24x1x16xf32>
    %42 = vector.broadcast %41 : vector<24x1x16xf32> to vector<24x16x16xf32>
    %43 = arith.mulf %10, %42 : vector<24x16x16xf32>
    %c2_42 = arith.constant 2 : index
    %c1_43 = arith.constant 1 : index
    %c0_44 = arith.constant 0 : index
    %c0_45 = arith.constant 0 : index
    %c0_46 = arith.constant 0 : index
    %44 = vector.load %arg3[%c2_42, %c1_43, %c0_44, %c0_45, %c0_46] : memref<3x3x24x1x16xf32, #tpu.memory_space<vmem>>, vector<1x1x24x1x16xf32>
    %45 = vector.shape_cast %44 : vector<1x1x24x1x16xf32> to vector<24x1x16xf32>
    %46 = vector.broadcast %45 : vector<24x1x16xf32> to vector<24x16x16xf32>
    %47 = arith.mulf %9, %46 : vector<24x16x16xf32>
    %48 = arith.addf %43, %47 : vector<24x16x16xf32>
    %c2_47 = arith.constant 2 : index
    %c2_48 = arith.constant 2 : index
    %c0_49 = arith.constant 0 : index
    %c0_50 = arith.constant 0 : index
    %c0_51 = arith.constant 0 : index
    %49 = vector.load %arg3[%c2_47, %c2_48, %c0_49, %c0_50, %c0_51] : memref<3x3x24x1x16xf32, #tpu.memory_space<vmem>>, vector<1x1x24x1x16xf32>
    %50 = vector.shape_cast %49 : vector<1x1x24x1x16xf32> to vector<24x1x16xf32>
    %51 = vector.broadcast %50 : vector<24x1x16xf32> to vector<24x16x16xf32>
    %52 = arith.mulf %11, %51 : vector<24x16x16xf32>
    %53 = arith.addf %48, %52 : vector<24x16x16xf32>
    %c1_i32_52 = arith.constant 1 : i32
    %54 = tpu.dynamic_rotate %25 by %c1_i32_52 dim 1 : vector<24x16x16xf32>, i32 -> vector<24x16x16xf32>
    %c0_53 = arith.constant 0 : index
    %c0_54 = arith.constant 0 : index
    %c0_55 = arith.constant 0 : index
    %c0_56 = arith.constant 0 : index
    %55 = vector.load %arg7[%c0_53, %c0_54, %c0_55, %c0_56] : memref<2x1x16x1xf32, #tpu.memory_space<vmem>>, vector<1x1x16x1xf32>
    %56 = vector.shape_cast %55 : vector<1x1x16x1xf32> to vector<1x16x1xf32>
    %57 = vector.broadcast %56 : vector<1x16x1xf32> to vector<24x16x16xf32>
    %58 = arith.mulf %54, %57 : vector<24x16x16xf32>
    %59 = arith.addf %39, %58 : vector<24x16x16xf32>
    %c15_i32_57 = arith.constant 15 : i32
    %60 = tpu.dynamic_rotate %53 by %c15_i32_57 dim 1 : vector<24x16x16xf32>, i32 -> vector<24x16x16xf32>
    %c1_58 = arith.constant 1 : index
    %c0_59 = arith.constant 0 : index
    %c0_60 = arith.constant 0 : index
    %c0_61 = arith.constant 0 : index
    %61 = vector.load %arg7[%c1_58, %c0_59, %c0_60, %c0_61] : memref<2x1x16x1xf32, #tpu.memory_space<vmem>>, vector<1x1x16x1xf32>
    %62 = vector.shape_cast %61 : vector<1x1x16x1xf32> to vector<1x16x1xf32>
    %63 = vector.broadcast %62 : vector<1x16x1xf32> to vector<24x16x16xf32>
    %64 = arith.mulf %60, %63 : vector<24x16x16xf32>
    %65 = arith.addf %59, %64 : vector<24x16x16xf32>
    %c0_62 = arith.constant 0 : index
    %c0_63 = arith.constant 0 : index
    %c0_64 = arith.constant 0 : index
    %66 = vector.load %arg6[%c0_62, %c0_63, %c0_64] : memref<24x1x16xf32, #tpu.memory_space<vmem>>, vector<24x1x16xf32>
    %67 = vector.broadcast %66 : vector<24x1x16xf32> to vector<24x16x16xf32>
    %68 = arith.addf %65, %67 : vector<24x16x16xf32>
    %cst_65 = arith.constant 0.000000e+00 : f32
    %69 = vector.broadcast %cst_65 : f32 to vector<24x16x16xf32>
    %70 = arith.maximumf %68, %69 : vector<24x16x16xf32>
    %c0_66 = arith.constant 0 : index
    %c0_67 = arith.constant 0 : index
    %c0_68 = arith.constant 0 : index
    %c0_69 = arith.constant 0 : index
    %71 = vector.load %arg8[%c0_66, %c0_67, %c0_68, %c0_69] : memref<1x24x16x16xf32, #tpu.memory_space<vmem>>, vector<1x24x16x16xf32>
    %72 = vector.shape_cast %71 : vector<1x24x16x16xf32> to vector<24x16x16xf32>
    %73 = vector.shape_cast %70 : vector<24x16x16xf32> to vector<1x24x16x16xf32>
    tpu.vector_store %arg8[%c0_66, %c0_67, %c0_68, %c0_69], %73 {strides = array<i32>} : memref<1x24x16x16xf32, #tpu.memory_space<vmem>>, vector<1x24x16x16xf32>,
    return
  }
  func.func @transform_0(%arg0: i32, %arg1: i32) -> (i32, i32, i32, i32) {
    %c0_i32 = arith.constant 0 : i32
    %c0_i32_0 = arith.constant 0 : i32
    %c0_i32_1 = arith.constant 0 : i32
    return %arg0, %arg1, %c0_i32, %c0_i32_0 : i32, i32, i32, i32
  }
  func.func @transform_1(%arg0: i32, %arg1: i32) -> (i32, i32, i32, i32, i32) {
    %c0_i32 = arith.constant 0 : i32
    %c0_i32_0 = arith.constant 0 : i32
    %c0_i32_1 = arith.constant 0 : i32
    %c0_i32_2 = arith.constant 0 : i32
    %c0_i32_3 = arith.constant 0 : i32
    return %c0_i32, %c0_i32_0, %arg1, %c0_i32_1, %c0_i32_2 : i32, i32, i32, i32, i32
  }
  func.func @transform_2(%arg0: i32, %arg1: i32) -> (i32, i32, i32) {
    %c0_i32 = arith.constant 0 : i32
    %c0_i32_0 = arith.constant 0 : i32
    %c0_i32_1 = arith.constant 0 : i32
    return %arg1, %c0_i32, %c0_i32_0 : i32, i32, i32
  }
  func.func @transform_3(%arg0: i32, %arg1: i32) -> (i32, i32, i32) {
    %c0_i32 = arith.constant 0 : i32
    %c0_i32_0 = arith.constant 0 : i32
    %c0_i32_1 = arith.constant 0 : i32
    return %arg1, %c0_i32, %c0_i32_0 : i32, i32, i32
  }
  func.func @transform_4(%arg0: i32, %arg1: i32) -> (i32, i32, i32) {
    %c0_i32 = arith.constant 0 : i32
    %c0_i32_0 = arith.constant 0 : i32
    %c0_i32_1 = arith.constant 0 : i32
    return %arg1, %c0_i32, %c0_i32_0 : i32, i32, i32
  }
  func.func @transform_5(%arg0: i32, %arg1: i32) -> (i32, i32, i32, i32) {
    %c0_i32 = arith.constant 0 : i32
    %c0_i32_0 = arith.constant 0 : i32
    %c0_i32_1 = arith.constant 0 : i32
    %c0_i32_2 = arith.constant 0 : i32
    %c0_i32_3 = arith.constant 0 : i32
    return %c0_i32, %c0_i32_0, %c0_i32_1, %c0_i32_2 : i32, i32, i32, i32
  }
  func.func @transform_6(%arg0: i32, %arg1: i32) -> (i32, i32, i32, i32) {
    %c0_i32 = arith.constant 0 : i32
    %c0_i32_0 = arith.constant 0 : i32
    %c0_i32_1 = arith.constant 0 : i32
    return %arg0, %arg1, %c0_i32, %c0_i32_0 : i32, i32, i32, i32
  }
}

</mosaic_0001>

<llo_original>
// kernel: tpu_custom_call.1
$region0: #{tpu_custom_call.1}
  #allocation0 [shape = 'u32[]', space=smem, size = 0x4, offset = 0x4, fixed_abs, tag = 'smem constant byte address 0x4 - core index']
  #allocation1 [shape = 'u32[144,128]{1,0:T(1,128)}', space=vmem, size = 0x12000, scoped, tag = 'internal scratch']
  %s0 = inlined_call_operand.vmem [shape: f32[2,72,16,16], index: 0, kind: input, shape index: {}]
  %s1 = inlined_call_operand.vmem [shape: f32[3,3,72,1,16], index: 1, kind: input, shape index: {}]
  %s2 = inlined_call_operand.vmem [shape: f32[72,1,16], index: 2, kind: input, shape index: {}]
  %s3 = inlined_call_operand.vmem [shape: f32[72,1,16], index: 3, kind: input, shape index: {}]
  %s4 = inlined_call_operand.vmem [shape: f32[72,1,16], index: 4, kind: input, shape index: {}]
  %s5 = inlined_call_operand.vmem [shape: f32[2,1,16,1], index: 5, kind: input, shape index: {}]
  %s6 = inlined_call_operand.vmem [shape: f32[2,72,16,16], index: 6, kind: output, shape index: {}]
  %s7 = sld [smem:[#allocation0]]
  $region80: #{tpu_custom_call.1} parent=0
    _
  %s9 = ssub.s32 1, %s7
  %s10 = scalar_select 0, %s9, %s7
  $region1: #{tpu_custom_call.1} parent=0
    #allocation2 [shape = 'u8[221184]{0}', space=vmem, size = 0x36000, scoped, tag = 'input window, operand 1']
    loop: start=0, step=1, limit=8
    $region2: #{tpu_custom_call.1} parent=1 // loop_pre_header
      _
    $region3: #{tpu_custom_call.1} parent=1 // loop_header
      %s12 = sphi 0, %s16
      %p13 = scmp.ge.s32.totalorder %s12, 8
      %s19 = sphi 0, %s31
      %s20 = sphi 0, %s27
      %s21 = sphi 0, %s19
      %s22 = sphi 0, %s20
      %s23 = sphi 0, %s21
      %s24 = sphi 0, %s22
      %s36 = sphi 0, %s38
      %s39 = sphi 0, %s36
      %s40 = sphi 0, %s39
      %s56 = sphi 0, %s40
      %s62 = sphi 0, %s64
      %s65 = sphi 0, %s62
      %s66 = sphi 0, %s65
      %s82 = sphi 0, %s66
      %s88 = sphi 0, %s90
      %s91 = sphi 0, %s88
      %s92 = sphi 0, %s91
      %s108 = sphi 0, %s92
      %s114 = sphi 0, %s116
      %s117 = sphi 0, %s114
      %s118 = sphi 0, %s117
      %s134 = sphi 0, %s118
      %s140 = sphi 0, %s142
      %s143 = sphi 0, %s140
      %s144 = sphi 0, %s143
      %s160 = sphi 0, %s144
      %s164 = sphi 0, %s164
      %s166 = sphi 0, %s164
      %s167 = sphi 0, %s166
      %s181 = sphi 0, %s167
      %s189 = sphi 0, %s191
      %s192 = sphi 0, %s189
      %s193 = sphi 0, %s192
      %s209 = sphi 0, %s193
    $region4: #{tpu_custom_call.1} parent=1 // loop_header_branch
      %15 = sbr.rel (%p13) target = $region8
    $region5: #{tpu_custom_call.1} parent=1 // loop_body
      %s17 = ssub.s32 %s12, 1
      %s18 = ssub.s32 %s12, 2
      %s25 = sadd.s32 1, %s20
      %p26 = scmp.ge.s32.totalorder %s25, 3
      %s27 = scalar_select %p26, 0, %s25
      %s28 = sadd.s32 1, %s19
      %s29 = scalar_select %p26, %s28, %s19
      %p30 = scmp.ge.s32.totalorder %s29, 2
      %s31 = scalar_select %p30, 0, %s29
      %s32 = ssub.s32 %s19, %s31
      %s33 = ssub.s32 %s20, %s27
      %s34 = sor.u32 %s32, %s33
      %p35 = scmp.eq.s32.totalorder %s34, 0
      %s37 = sadd.s32 %s36, 1
      %s38 = scalar_select %p35, %s36, %s37
      %p41 = pneg %p35
      %p42 = scmp.eq.s32.totalorder %s12, 5
      %p43 = por %p41, %p42
      %p44 = scmp.ne.s32.totalorder %s36, %s39
      %p45 = scmp.eq.s32.totalorder %s12, 0
      %p46 = por %p44, %p45
      %p47 = scmp.ne.s32.totalorder %s36, %s39
      %p48 = scmp.eq.s32.totalorder %s17, 5
      %p49 = por %p47, %p48
      %p50 = scmp.ne.s32.totalorder %s39, %s40
      %p51 = scmp.eq.s32.totalorder %s17, 0
      %p52 = por %p50, %p51
      %p53 = scmp.ne.s32.totalorder %s39, %s40
      %p54 = scmp.eq.s32.totalorder %s18, 5
      %p55 = por %p53, %p54
      %p57 = scmp.ne.s32.totalorder %s40, %s56
      %p58 = scmp.eq.s32.totalorder %s18, 0
      %p59 = por %p57, %p58
      %s60 = ssub.s32 %s20, %s27
      %p61 = scmp.eq.s32.totalorder %s60, 0
      %s63 = sadd.s32 %s62, 1
      %s64 = scalar_select %p61, %s62, %s63
      %p67 = pneg %p61
      %p68 = scmp.eq.s32.totalorder %s12, 5
      %p69 = por %p67, %p68
      %p70 = scmp.ne.s32.totalorder %s62, %s65
      %p71 = scmp.eq.s32.totalorder %s12, 0
      %p72 = por %p70, %p71
      %p73 = scmp.ne.s32.totalorder %s62, %s65
      %p74 = scmp.eq.s32.totalorder %s17, 5
      %p75 = por %p73, %p74
      %p76 = scmp.ne.s32.totalorder %s65, %s66
      %p77 = scmp.eq.s32.totalorder %s17, 0
      %p78 = por %p76, %p77
      %p79 = scmp.ne.s32.totalorder %s65, %s66
      %p80 = scmp.eq.s32.totalorder %s18, 5
      %p81 = por %p79, %p80
      %p83 = scmp.ne.s32.totalorder %s66, %s82
      %p84 = scmp.eq.s32.totalorder %s18, 0
      %p85 = por %p83, %p84
      %s86 = ssub.s32 %s20, %s27
      %p87 = scmp.eq.s32.totalorder %s86, 0
      %s89 = sadd.s32 %s88, 1
      %s90 = scalar_select %p87, %s88, %s89
      %p93 = pneg %p87
      %p94 = scmp.eq.s32.totalorder %s12, 5
      %p95 = por %p93, %p94
      %p96 = scmp.ne.s32.totalorder %s88, %s91
      %p97 = scmp.eq.s32.totalorder %s12, 0
      %p98 = por %p96, %p97
      %p99 = scmp.ne.s32.totalorder %s88, %s91
      %p100 = scmp.eq.s32.totalorder %s17, 5
      %p101 = por %p99, %p100
      %p102 = scmp.ne.s32.totalorder %s91, %s92
      %p103 = scmp.eq.s32.totalorder %s17, 0
      %p104 = por %p102, %p103
      %p105 = scmp.ne.s32.totalorder %s91, %s92
      %p106 = scmp.eq.s32.totalorder %s18, 5
      %p107 = por %p105, %p106
      %p109 = scmp.ne.s32.totalorder %s92, %s108
      %p110 = scmp.eq.s32.totalorder %s18, 0
      %p111 = por %p109, %p110
      %s112 = ssub.s32 %s20, %s27
      %p113 = scmp.eq.s32.totalorder %s112, 0
      %s115 = sadd.s32 %s114, 1
      %s116 = scalar_select %p113, %s114, %s115
      %p119 = pneg %p113
      %p120 = scmp.eq.s32.totalorder %s12, 5
      %p121 = por %p119, %p120
      %p122 = scmp.ne.s32.totalorder %s114, %s117
      %p123 = scmp.eq.s32.totalorder %s12, 0
      %p124 = por %p122, %p123
      %p125 = scmp.ne.s32.totalorder %s114, %s117
      %p126 = scmp.eq.s32.totalorder %s17, 5
      %p127 = por %p125, %p126
      %p128 = scmp.ne.s32.totalorder %s117, %s118
      %p129 = scmp.eq.s32.totalorder %s17, 0
      %p130 = por %p128, %p129
      %p131 = scmp.ne.s32.totalorder %s117, %s118
      %p132 = scmp.eq.s32.totalorder %s18, 5
      %p133 = por %p131, %p132
      %p135 = scmp.ne.s32.totalorder %s118, %s134
      %p136 = scmp.eq.s32.totalorder %s18, 0
      %p137 = por %p135, %p136
      %s138 = ssub.s32 %s20, %s27
      %p139 = scmp.eq.s32.totalorder %s138, 0
      %s141 = sadd.s32 %s140, 1
      %s142 = scalar_select %p139, %s140, %s141
      %p145 = pneg %p139
      %p146 = scmp.eq.s32.totalorder %s12, 5
      %p147 = por %p145, %p146
      %p148 = scmp.ne.s32.totalorder %s140, %s143
      %p149 = scmp.eq.s32.totalorder %s12, 0
      %p150 = por %p148, %p149
      %p151 = scmp.ne.s32.totalorder %s140, %s143
      %p152 = scmp.eq.s32.totalorder %s17, 5
      %p153 = por %p151, %p152
      %p154 = scmp.ne.s32.totalorder %s143, %s144
      %p155 = scmp.eq.s32.totalorder %s17, 0
      %p156 = por %p154, %p155
      %p157 = scmp.ne.s32.totalorder %s143, %s144
      %p158 = scmp.eq.s32.totalorder %s18, 5
      %p159 = por %p157, %p158
      %p161 = scmp.ne.s32.totalorder %s144, %s160
      %p162 = scmp.eq.s32.totalorder %s18, 0
      %p163 = por %p161, %p162
      %s165 = sadd.s32 %s164, 1
      %p168 = scmp.eq.s32.totalorder %s12, 5
      %p169 = scmp.ne.s32.totalorder %s164, %s166
      %p170 = scmp.eq.s32.totalorder %s12, 0
      %p171 = por %p169, %p170
      %p172 = scmp.ne.s32.totalorder %s164, %s166
      %p173 = scmp.eq.s32.totalorder %s17, 5
      %p174 = por %p172, %p173
      %p175 = scmp.ne.s32.totalorder %s166, %s167
      %p176 = scmp.eq.s32.totalorder %s17, 0
      %p177 = por %p175, %p176
      %p178 = scmp.ne.s32.totalorder %s166, %s167
      %p179 = scmp.eq.s32.totalorder %s18, 5
      %p180 = por %p178, %p179
      %p182 = scmp.ne.s32.totalorder %s167, %s181
      %p183 = scmp.eq.s32.totalorder %s18, 0
      %p184 = por %p182, %p183
      %s185 = ssub.s32 %s19, %s31
      %s186 = ssub.s32 %s20, %s27
      %s187 = sor.u32 %s185, %s186
      %p188 = scmp.eq.s32.totalorder %s187, 0
      %s190 = sadd.s32 %s189, 1
      %s191 = scalar_select %p188, %s189, %s190
      %p194 = pneg %p188
      %p195 = scmp.eq.s32.totalorder %s12, 5
      %p196 = por %p194, %p195
      %p197 = scmp.ne.s32.totalorder %s189, %s192
      %p198 = scmp.eq.s32.totalorder %s12, 0
      %p199 = por %p197, %p198
      %p200 = scmp.ne.s32.totalorder %s189, %s192
      %p201 = scmp.eq.s32.totalorder %s17, 5
      %p202 = por %p200, %p201
      %p203 = scmp.ne.s32.totalorder %s192, %s193
      %p204 = scmp.eq.s32.totalorder %s17, 0
      %p205 = por %p203, %p204
      %p206 = scmp.ne.s32.totalorder %s192, %s193
      %p207 = scmp.eq.s32.totalorder %s18, 5
      %p208 = por %p206, %p207
      %p210 = scmp.ne.s32.totalorder %s193, %s209
      %p211 = scmp.eq.s32.totalorder %s18, 0
      %p212 = por %p210, %p211
      %p213 = scmp.le.s32.totalorder 1, %s12
      %p214 = scmp.lt.s32.totalorder %s12, 7
      %p215 = pnand %p213, %p214
      %p216 = pneg %p215
      // Predicated region
      $region9: #{tpu_custom_call.1} parent=5 // pred_check
        _
      $region10: #{tpu_custom_call.1} parent=5 // pred_check_branch
        %218 = sbr.rel (%p215) target = $region12
      $region11: #{tpu_custom_call.1} parent=5 // pred_region
        %s219 = ssub.s32 %s12, 1
        // Predicated region
        $region13: #{tpu_custom_call.1} parent=11 // pred_check
          %p220 = pneg %p177
        $region14: #{tpu_custom_call.1} parent=11 // pred_check_branch
          %222 = sbr.rel (%p220) target = $region16
        $region15: #{tpu_custom_call.1} parent=11 // pred_region
          _
        $region16: #{tpu_custom_call.1} parent=11 // pred_fallthru
          _
      $region12: #{tpu_custom_call.1} parent=5 // pred_fallthru
        _
      %p223 = scmp.lt.s32.totalorder %s12, 6
      // Predicated region
      $region17: #{tpu_custom_call.1} parent=5 // pred_check
        %p224 = pneg %p223
      $region18: #{tpu_custom_call.1} parent=5 // pred_check_branch
        %226 = sbr.rel (%p224) target = $region20
      $region19: #{tpu_custom_call.1} parent=5 // pred_region
        // Predicated region
        $region21: #{tpu_custom_call.1} parent=19 // pred_check
          %p227 = pneg %p46
        $region22: #{tpu_custom_call.1} parent=19 // pred_check_branch
          %229 = sbr.rel (%p227) target = $region24
        $region23: #{tpu_custom_call.1} parent=19 // pred_region
          %s230 = smul.u32 24, %s20
          %p231 = scmp.lt.s32.totalorder %s19, 1
          %s232 = scalar_select %p231, %s19, 1
          %p233 = scmp.lt.s32.totalorder %s230, 71
          %s234 = scalar_select %p233, %s230, 71
          %s235 = smul.addr %s234, 2
          %s236 = smul.addr %s232, 144
          %s237 = sadd.s32 %s235, %s236
          %s238 = smul.addr %s237, 8
          %s239 = scalar_lea.vmem %s0, %s238
          %s240 = smul.u32 24, %s20
        $region24: #{tpu_custom_call.1} parent=19 // pred_fallthru
          _
        // Predicated region
        $region25: #{tpu_custom_call.1} parent=19 // pred_check
          %p241 = pneg %p72
        $region26: #{tpu_custom_call.1} parent=19 // pred_check_branch
          %243 = sbr.rel (%p241) target = $region28
        $region27: #{tpu_custom_call.1} parent=19 // pred_region
          %s244 = sand.u32 %s62, 1
          %s245 = sand.u32 %s62, 1
          %s246 = smul.addr %s245, 216
          %s247 = scalar_lea.vmem [#allocation2], %s246
          %s248 = smul.u32 24, %s20
          %s249 = scalar_lea.vmem %s1, %s248
          // Predicated region
          $region29: #{tpu_custom_call.1} parent=27 // pred_check
            _
          $region30: #{tpu_custom_call.1} parent=27 // pred_check_branch
            %251 = sbr.rel (0) target = $region32
          $region31: #{tpu_custom_call.1} parent=27 // pred_region
            // Predicated region
            $region33: #{tpu_custom_call.1} parent=31 // pred_check
              _
            $region34: #{tpu_custom_call.1} parent=31 // pred_check_branch
              %253 = sbr.rel (0) target = $region36
            $region35: #{tpu_custom_call.1} parent=31 // pred_region
              loop: start=0, step=1, limit=1
              $region37: #{tpu_custom_call.1} parent=35 // loop_pre_header
                _
              $region38: #{tpu_custom_call.1} parent=35 // loop_header
                %s255 = sphi 0, %s259
                %p256 = scmp.ge.s32.totalorder %s255, 1
                %s260 = sphi %s249, %s249
                %s261 = sphi %s247, %s247
              $region39: #{tpu_custom_call.1} parent=35 // loop_header_branch
                %258 = sbr.rel (%p256) target = $region43
              $region40: #{tpu_custom_call.1} parent=35 // loop_body
                %v262 = vld [vmem:[%s260] sm:$0xff]
                %263 = vst [vmem:[%s261] sm:$0xff] %v262
                %v264 = vld [vmem:[%s260 + $0x8] sm:$0xff]
                %265 = vst [vmem:[%s261 + $0x8] sm:$0xff] %v264
                %v266 = vld [vmem:[%s260 + $0x10] sm:$0xff]
                %267 = vst [vmem:[%s261 + $0x10] sm:$0xff] %v266
                %v268 = vld [vmem:[%s260 + $0x48] sm:$0xff]
                %269 = vst [vmem:[%s261 + $0x18] sm:$0xff] %v268
                %v270 = vld [vmem:[%s260 + $0x50] sm:$0xff]
                %271 = vst [vmem:[%s261 + $0x20] sm:$0xff] %v270
                %v272 = vld [vmem:[%s260 + $0x58] sm:$0xff]
                %273 = vst [vmem:[%s261 + $0x28] sm:$0xff] %v272
                %v274 = vld [vmem:[%s260 + $0x90] sm:$0xff]
                %275 = vst [vmem:[%s261 + $0x30] sm:$0xff] %v274
                %v276 = vld [vmem:[%s260 + $0x98] sm:$0xff]
                %277 = vst [vmem:[%s261 + $0x38] sm:$0xff] %v276
                %v278 = vld [vmem:[%s260 + $0xa0] sm:$0xff]
                %279 = vst [vmem:[%s261 + $0x40] sm:$0xff] %v278
                %v280 = vld [vmem:[%s260 + $0xd8] sm:$0xff]
                %281 = vst [vmem:[%s261 + $0x48] sm:$0xff] %v280
                %v282 = vld [vmem:[%s260 + $0xe0] sm:$0xff]
                %283 = vst [vmem:[%s261 + $0x50] sm:$0xff] %v282
                %v284 = vld [vmem:[%s260 + $0xe8] sm:$0xff]
                %285 = vst [vmem:[%s261 + $0x58] sm:$0xff] %v284
                %v286 = vld [vmem:[%s260 + $0x120] sm:$0xff]
                %287 = vst [vmem:[%s261 + $0x60] sm:$0xff] %v286
                %v288 = vld [vmem:[%s260 + $0x128] sm:$0xff]
                %289 = vst [vmem:[%s261 + $0x68] sm:$0xff] %v288
                %v290 = vld [vmem:[%s260 + $0x130] sm:$0xff]
                %291 = vst [vmem:[%s261 + $0x70] sm:$0xff] %v290
                %v292 = vld [vmem:[%s260 + $0x168] sm:$0xff]
                %293 = vst [vmem:[%s261 + $0x78] sm:$0xff] %v292
                %v294 = vld [vmem:[%s260 + $0x170] sm:$0xff]
                %295 = vst [vmem:[%s261 + $0x80] sm:$0xff] %v294
                %v296 = vld [vmem:[%s260 + $0x178] sm:$0xff]
                %297 = vst [vmem:[%s261 + $0x88] sm:$0xff] %v296
                %v298 = vld [vmem:[%s260 + $0x1b0] sm:$0xff]
                %299 = vst [vmem:[%s261 + $0x90] sm:$0xff] %v298
                %v300 = vld [vmem:[%s260 + $0x1b8] sm:$0xff]
                %301 = vst [vmem:[%s261 + $0x98] sm:$0xff] %v300
                %v302 = vld [vmem:[%s260 + $0x1c0] sm:$0xff]
                %303 = vst [vmem:[%s261 + $0xa0] sm:$0xff] %v302
                %v304 = vld [vmem:[%s260 + $0x1f8] sm:$0xff]
                %305 = vst [vmem:[%s261 + $0xa8] sm:$0xff] %v304
                %v306 = vld [vmem:[%s260 + $0x200] sm:$0xff]
                %307 = vst [vmem:[%s261 + $0xb0] sm:$0xff] %v306
                %v308 = vld [vmem:[%s260 + $0x208] sm:$0xff]
                %309 = vst [vmem:[%s261 + $0xb8] sm:$0xff] %v308
                %v310 = vld [vmem:[%s260 + $0x240] sm:$0xff]
                %311 = vst [vmem:[%s261 + $0xc0] sm:$0xff] %v310
                %v312 = vld [vmem:[%s260 + $0x248] sm:$0xff]
                %313 = vst [vmem:[%s261 + $0xc8] sm:$0xff] %v312
                %v314 = vld [vmem:[%s260 + $0x250] sm:$0xff]
                %315 = vst [vmem:[%s261 + $0xd0] sm:$0xff] %v314
              $region41: #{tpu_custom_call.1} parent=35 // loop_footer
                %s259 = sadd.s32 1, %s255
              $region42: #{tpu_custom_call.1} parent=35 // loop_footer_branch
                %254 = sbr.rel target = $region38
              $region43: #{tpu_custom_call.1} parent=35 // loop_exit
                _
            $region36: #{tpu_custom_call.1} parent=31 // pred_fallthru
              _
            // Predicated region
            $region44: #{tpu_custom_call.1} parent=31 // pred_check
              _
            $region45: #{tpu_custom_call.1} parent=31 // pred_check_branch
              %317 = sbr.rel target = $region47
            $region46: #{tpu_custom_call.1} parent=31 // pred_region
              _
            $region47: #{tpu_custom_call.1} parent=31 // pred_fallthru
              _
          $region32: #{tpu_custom_call.1} parent=27 // pred_fallthru
            _
          %318 = vnop
        $region28: #{tpu_custom_call.1} parent=19 // pred_fallthru
          _
        // Predicated region
        $region48: #{tpu_custom_call.1} parent=19 // pred_check
          %p319 = pneg %p98
        $region49: #{tpu_custom_call.1} parent=19 // pred_check_branch
          %321 = sbr.rel (%p319) target = $region51
        $region50: #{tpu_custom_call.1} parent=19 // pred_region
          %s322 = smul.u32 24, %s20
          %p323 = scmp.lt.s32.totalorder %s322, 71
          %s324 = scalar_select %p323, %s322, 71
          %s325 = scalar_lea.vmem %s2, %s324
          %s326 = smul.u32 24, %s20
        $region51: #{tpu_custom_call.1} parent=19 // pred_fallthru
          _
        // Predicated region
        $region52: #{tpu_custom_call.1} parent=19 // pred_check
          %p327 = pneg %p124
        $region53: #{tpu_custom_call.1} parent=19 // pred_check_branch
          %329 = sbr.rel (%p327) target = $region55
        $region54: #{tpu_custom_call.1} parent=19 // pred_region
          %s330 = smul.u32 24, %s20
          %p331 = scmp.lt.s32.totalorder %s330, 71
          %s332 = scalar_select %p331, %s330, 71
          %s333 = scalar_lea.vmem %s3, %s332
          %s334 = smul.u32 24, %s20
        $region55: #{tpu_custom_call.1} parent=19 // pred_fallthru
          _
        // Predicated region
        $region56: #{tpu_custom_call.1} parent=19 // pred_check
          %p335 = pneg %p150
        $region57: #{tpu_custom_call.1} parent=19 // pred_check_branch
          %337 = sbr.rel (%p335) target = $region59
        $region58: #{tpu_custom_call.1} parent=19 // pred_region
          %s338 = smul.u32 24, %s20
          %p339 = scmp.lt.s32.totalorder %s338, 71
          %s340 = scalar_select %p339, %s338, 71
          %s341 = scalar_lea.vmem %s4, %s340
          %s342 = smul.u32 24, %s20
        $region59: #{tpu_custom_call.1} parent=19 // pred_fallthru
          _
      $region20: #{tpu_custom_call.1} parent=5 // pred_fallthru
        _
      %p343 = scmp.le.s32.totalorder 1, %s12
      %p344 = scmp.lt.s32.totalorder %s12, 7
      %p345 = pnand %p343, %p344
      %p346 = pneg %p345
      // Predicated region
      $region60: #{tpu_custom_call.1} parent=5 // pred_check
        _
      $region61: #{tpu_custom_call.1} parent=5 // pred_check_branch
        %348 = sbr.rel (%p345) target = $region63
      $region62: #{tpu_custom_call.1} parent=5 // pred_region
        %s349 = ssub.s32 %s12, 1
        %s350 = sand.u32 %s65, 1
        %s351 = sand.u32 %s65, 1
        %s352 = smul.addr %s351, 216
        %s353 = scalar_lea.vmem [#allocation2], %s352
        // Predicated region
        $region64: #{tpu_custom_call.1} parent=62 // pred_check
          %p354 = pneg %p78
        $region65: #{tpu_custom_call.1} parent=62 // pred_check_branch
          %356 = sbr.rel (%p354) target = $region67
        $region66: #{tpu_custom_call.1} parent=62 // pred_region
          _
        $region67: #{tpu_custom_call.1} parent=62 // pred_fallthru
          _
        %s357 = smul.u32 24, %s22
        %p358 = scmp.lt.s32.totalorder %s21, 1
        %s359 = scalar_select %p358, %s21, 1
        %p360 = scmp.lt.s32.totalorder %s357, 71
        %s361 = scalar_select %p360, %s357, 71
        %s362 = smul.addr %s361, 2
        %s363 = smul.addr %s359, 144
        %s364 = sadd.s32 %s362, %s363
        %s365 = smul.addr %s364, 8
        %s366 = scalar_lea.vmem %s0, %s365
        %p367 = pneg %p52
        %p368 = pneg %p49
        %s369 = sand.u32 %s65, 1
        %s370 = sand.u32 %s65, 1
        %s371 = smul.addr %s370, 216
        %s372 = scalar_lea.vmem [#allocation2], %s371
        %p373 = pneg %p78
        %p374 = pneg %p75
        %s375 = smul.u32 24, %s22
        %p376 = scmp.lt.s32.totalorder %s375, 71
        %s377 = scalar_select %p376, %s375, 71
        %s378 = scalar_lea.vmem %s2, %s377
        %p379 = pneg %p104
        %p380 = pneg %p101
        %s381 = smul.u32 24, %s22
        %p382 = scmp.lt.s32.totalorder %s381, 71
        %s383 = scalar_select %p382, %s381, 71
        %s384 = scalar_lea.vmem %s3, %s383
        %p385 = pneg %p130
        %p386 = pneg %p127
        %s387 = smul.u32 24, %s22
        %p388 = scmp.lt.s32.totalorder %s387, 71
        %s389 = scalar_select %p388, %s387, 71
        %s390 = scalar_lea.vmem %s4, %s389
        %p391 = pneg %p156
        %p392 = pneg %p153
        %p393 = pneg %p177
        %p394 = pneg %p174
        %p395 = pneg %p205
        %p396 = pneg %p202
        %s397 = smul.u32 24, %s22
        %p398 = scmp.lt.s32.totalorder %s21, 1
        %s399 = scalar_select %p398, %s21, 1
        %p400 = scmp.lt.s32.totalorder %s397, 71
        %s401 = scalar_select %p400, %s397, 71
        %s402 = smul.addr %s401, 2
        %s403 = smul.addr %s399, 144
        %s404 = sadd.s32 %s402, %s403
        %s405 = smul.addr %s404, 8
        %s406 = scalar_lea.vmem %s6, %s405
        %s407 = smul.u32 24, %s22
        %p408 = scmp.lt.s32.totalorder %s21, 1
        %s409 = scalar_select %p408, %s21, 1
        %p410 = scmp.lt.s32.totalorder %s407, 71
        %s411 = scalar_select %p410, %s407, 71
        %s412 = smul.addr %s411, 2
        %s413 = smul.addr %s409, 144
        %s414 = sadd.s32 %s412, %s413
        %s415 = smul.addr %s414, 8
        %s416 = scalar_lea.vmem %s0, %s415
        %s417 = smul.u32 24, %s22
        %s418 = smul.u32 24, %s22
        %s419 = smul.u32 24, %s22
        %p420 = scmp.lt.s32.totalorder %s419, 71
        %s421 = scalar_select %p420, %s419, 71
        %s422 = scalar_lea.vmem %s2, %s421
        %s423 = smul.u32 24, %s22
        %s424 = smul.u32 24, %s22
        %p425 = scmp.lt.s32.totalorder %s424, 71
        %s426 = scalar_select %p425, %s424, 71
        %s427 = scalar_lea.vmem %s3, %s426
        %s428 = smul.u32 24, %s22
        %s429 = smul.u32 24, %s22
        %p430 = scmp.lt.s32.totalorder %s429, 71
        %s431 = scalar_select %p430, %s429, 71
        %s432 = scalar_lea.vmem %s4, %s431
        %s433 = smul.u32 24, %s22
        %s434 = smul.u32 24, %s22
        %p435 = scmp.lt.s32.totalorder %s21, 1
        %s436 = scalar_select %p435, %s21, 1
        %p437 = scmp.lt.s32.totalorder %s434, 71
        %s438 = scalar_select %p437, %s434, 71
        %s439 = smul.addr %s438, 2
        %s440 = smul.addr %s436, 144
        %s441 = sadd.s32 %s439, %s440
        %s442 = smul.addr %s441, 8
        %s443 = scalar_lea.vmem %s6, %s442
        %s444 = smul.u32 24, %s22
        %v445 = vld [vmem:[%s416] sm:$0xff]
        %v446 = vld [vmem:[%s416 + $0x8] sm:$0xff]
        %v447 = vld [vmem:[%s416 + $0x10] sm:$0xff]
        %v448 = vld [vmem:[%s416 + $0x18] sm:$0xff]
        %v449 = vld [vmem:[%s416 + $0x20] sm:$0xff]
        %v450 = vld [vmem:[%s416 + $0x28] sm:$0xff]
        %v451 = vld [vmem:[%s416 + $0x30] sm:$0xff]
        %v452 = vld [vmem:[%s416 + $0x38] sm:$0xff]
        %v453 = vld [vmem:[%s416 + $0x40] sm:$0xff]
        %v454 = vld [vmem:[%s416 + $0x48] sm:$0xff]
        %v455 = vld [vmem:[%s416 + $0x50] sm:$0xff]
        %v456 = vld [vmem:[%s416 + $0x58] sm:$0xff]
        %v457 = vld [vmem:[%s416 + $0x60] sm:$0xff]
        %v458 = vld [vmem:[%s416 + $0x68] sm:$0xff]
        %v459 = vld [vmem:[%s416 + $0x70] sm:$0xff]
        %v460 = vld [vmem:[%s416 + $0x78] sm:$0xff]
        %v461 = vld [vmem:[%s416 + $0x80] sm:$0xff]
        %v462 = vld [vmem:[%s416 + $0x88] sm:$0xff]
        %v463 = vld [vmem:[%s416 + $0x90] sm:$0xff]
        %v464 = vld [vmem:[%s416 + $0x98] sm:$0xff]
        %v465 = vld [vmem:[%s416 + $0xa0] sm:$0xff]
        %v466 = vld [vmem:[%s416 + $0xa8] sm:$0xff]
        %v467 = vld [vmem:[%s416 + $0xb0] sm:$0xff]
        %v468 = vld [vmem:[%s416 + $0xb8] sm:$0xff]
        %v469 = vld [vmem:[%s416 + $0xc0] sm:$0xff]
        %v470 = vld [vmem:[%s416 + $0xc8] sm:$0xff]
        %v471 = vld [vmem:[%s416 + $0xd0] sm:$0xff]
        %v472 = vld [vmem:[%s416 + $0xd8] sm:$0xff]
        %v473 = vld [vmem:[%s416 + $0xe0] sm:$0xff]
        %v474 = vld [vmem:[%s416 + $0xe8] sm:$0xff]
        %v475 = vld [vmem:[%s416 + $0xf0] sm:$0xff]
        %v476 = vld [vmem:[%s416 + $0xf8] sm:$0xff]
        %v477 = vld [vmem:[%s416 + $0x100] sm:$0xff]
        %v478 = vld [vmem:[%s416 + $0x108] sm:$0xff]
        %v479 = vld [vmem:[%s416 + $0x110] sm:$0xff]
        %v480 = vld [vmem:[%s416 + $0x118] sm:$0xff]
        %v481 = vld [vmem:[%s416 + $0x120] sm:$0xff]
        %v482 = vld [vmem:[%s416 + $0x128] sm:$0xff]
        %v483 = vld [vmem:[%s416 + $0x130] sm:$0xff]
        %v484 = vld [vmem:[%s416 + $0x138] sm:$0xff]
        %v485 = vld [vmem:[%s416 + $0x140] sm:$0xff]
        %v486 = vld [vmem:[%s416 + $0x148] sm:$0xff]
        %v487 = vld [vmem:[%s416 + $0x150] sm:$0xff]
        %v488 = vld [vmem:[%s416 + $0x158] sm:$0xff]
        %v489 = vld [vmem:[%s416 + $0x160] sm:$0xff]
        %v490 = vld [vmem:[%s416 + $0x168] sm:$0xff]
        %v491 = vld [vmem:[%s416 + $0x170] sm:$0xff]
        %v492 = vld [vmem:[%s416 + $0x178] sm:$0xff]
        %v493 = vld [vmem:[%s422] sm:$0x1]
        %v494 = vld [vmem:[%s422 + $0x1] sm:$0x1]
        %v495 = vld [vmem:[%s422 + $0x2] sm:$0x1]
        %v496 = vld [vmem:[%s422 + $0x3] sm:$0x1]
        %v497 = vld [vmem:[%s422 + $0x4] sm:$0x1]
        %v498 = vld [vmem:[%s422 + $0x5] sm:$0x1]
        %v499 = vld [vmem:[%s422 + $0x6] sm:$0x1]
        %v500 = vld [vmem:[%s422 + $0x7] sm:$0x1]
        %v501 = vld [vmem:[%s422 + $0x8] sm:$0x1]
        %v502 = vld [vmem:[%s422 + $0x9] sm:$0x1]
        %v503 = vld [vmem:[%s422 + $0xa] sm:$0x1]
        %v504 = vld [vmem:[%s422 + $0xb] sm:$0x1]
        %v505 = vld [vmem:[%s422 + $0xc] sm:$0x1]
        %v506 = vld [vmem:[%s422 + $0xd] sm:$0x1]
        %v507 = vld [vmem:[%s422 + $0xe] sm:$0x1]
        %v508 = vld [vmem:[%s422 + $0xf] sm:$0x1]
        %v509 = vld [vmem:[%s422 + $0x10] sm:$0x1]
        %v510 = vld [vmem:[%s422 + $0x11] sm:$0x1]
        %v511 = vld [vmem:[%s422 + $0x12] sm:$0x1]
        %v512 = vld [vmem:[%s422 + $0x13] sm:$0x1]
        %v513 = vld [vmem:[%s422 + $0x14] sm:$0x1]
        %v514 = vld [vmem:[%s422 + $0x15] sm:$0x1]
        %v515 = vld [vmem:[%s422 + $0x16] sm:$0x1]
        %v516 = vld [vmem:[%s422 + $0x17] sm:$0x1]
        %v541 = vlaneseq
        %v542 = vshrl.u32 %v541, 7
        %v543 = vsub.s32 0, %v542
        %v544 = vrot.slane %v493, %v543
        %v545 = vlaneseq
        %v546 = vshrl.u32 %v545, 7
        %v547 = vsub.s32 0, %v546
        %v548 = vrot.slane %v494, %v547
        %v549 = vlaneseq
        %v550 = vshrl.u32 %v549, 7
        %v551 = vsub.s32 0, %v550
        %v552 = vrot.slane %v495, %v551
        %v553 = vlaneseq
        %v554 = vshrl.u32 %v553, 7
        %v555 = vsub.s32 0, %v554
        %v556 = vrot.slane %v496, %v555
        %v557 = vlaneseq
        %v558 = vshrl.u32 %v557, 7
        %v559 = vsub.s32 0, %v558
        %v560 = vrot.slane %v497, %v559
        %v561 = vlaneseq
        %v562 = vshrl.u32 %v561, 7
        %v563 = vsub.s32 0, %v562
        %v564 = vrot.slane %v498, %v563
        %v565 = vlaneseq
        %v566 = vshrl.u32 %v565, 7
        %v567 = vsub.s32 0, %v566
        %v568 = vrot.slane %v499, %v567
        %v569 = vlaneseq
        %v570 = vshrl.u32 %v569, 7
        %v571 = vsub.s32 0, %v570
        %v572 = vrot.slane %v500, %v571
        %v573 = vlaneseq
        %v574 = vshrl.u32 %v573, 7
        %v575 = vsub.s32 0, %v574
        %v576 = vrot.slane %v501, %v575
        %v577 = vlaneseq
        %v578 = vshrl.u32 %v577, 7
        %v579 = vsub.s32 0, %v578
        %v580 = vrot.slane %v502, %v579
        %v581 = vlaneseq
        %v582 = vshrl.u32 %v581, 7
        %v583 = vsub.s32 0, %v582
        %v584 = vrot.slane %v503, %v583
        %v585 = vlaneseq
        %v586 = vshrl.u32 %v585, 7
        %v587 = vsub.s32 0, %v586
        %v588 = vrot.slane %v504, %v587
        %v589 = vlaneseq
        %v590 = vshrl.u32 %v589, 7
        %v591 = vsub.s32 0, %v590
        %v592 = vrot.slane %v505, %v591
        %v593 = vlaneseq
        %v594 = vshrl.u32 %v593, 7
        %v595 = vsub.s32 0, %v594
        %v596 = vrot.slane %v506, %v595
        %v597 = vlaneseq
        %v598 = vshrl.u32 %v597, 7
        %v599 = vsub.s32 0, %v598
        %v600 = vrot.slane %v507, %v599
        %v601 = vlaneseq
        %v602 = vshrl.u32 %v601, 7
        %v603 = vsub.s32 0, %v602
        %v604 = vrot.slane %v508, %v603
        %v605 = vlaneseq
        %v606 = vshrl.u32 %v605, 7
        %v607 = vsub.s32 0, %v606
        %v608 = vrot.slane %v509, %v607
        %v609 = vlaneseq
        %v610 = vshrl.u32 %v609, 7
        %v611 = vsub.s32 0, %v610
        %v612 = vrot.slane %v510, %v611
        %v613 = vlaneseq
        %v614 = vshrl.u32 %v613, 7
        %v615 = vsub.s32 0, %v614
        %v616 = vrot.slane %v511, %v615
        %v617 = vlaneseq
        %v618 = vshrl.u32 %v617, 7
        %v619 = vsub.s32 0, %v618
        %v620 = vrot.slane %v512, %v619
        %v621 = vlaneseq
        %v622 = vshrl.u32 %v621, 7
        %v623 = vsub.s32 0, %v622
        %v624 = vrot.slane %v513, %v623
        %v625 = vlaneseq
        %v626 = vshrl.u32 %v625, 7
        %v627 = vsub.s32 0, %v626
        %v628 = vrot.slane %v514, %v627
        %v629 = vlaneseq
        %v630 = vshrl.u32 %v629, 7
        %v631 = vsub.s32 0, %v630
        %v632 = vrot.slane %v515, %v631
        %v633 = vlaneseq
        %v634 = vshrl.u32 %v633, 7
        %v635 = vsub.s32 0, %v634
        %v636 = vrot.slane %v516, %v635
        %v661 = vmul.f32 %v445, %v544
        %v662 = vmul.f32 %v446, %v544
        %v663 = vmul.f32 %v447, %v548
        %v664 = vmul.f32 %v448, %v548
        %v665 = vmul.f32 %v449, %v552
        %v666 = vmul.f32 %v450, %v552
        %v667 = vmul.f32 %v451, %v556
        %v668 = vmul.f32 %v452, %v556
        %v669 = vmul.f32 %v453, %v560
        %v670 = vmul.f32 %v454, %v560
        %v671 = vmul.f32 %v455, %v564
        %v672 = vmul.f32 %v456, %v564
        %v673 = vmul.f32 %v457, %v568
        %v674 = vmul.f32 %v458, %v568
        %v675 = vmul.f32 %v459, %v572
        %v676 = vmul.f32 %v460, %v572
        %v677 = vmul.f32 %v461, %v576
        %v678 = vmul.f32 %v462, %v576
        %v679 = vmul.f32 %v463, %v580
        %v680 = vmul.f32 %v464, %v580
        %v681 = vmul.f32 %v465, %v584
        %v682 = vmul.f32 %v466, %v584
        %v683 = vmul.f32 %v467, %v588
        %v684 = vmul.f32 %v468, %v588
        %v685 = vmul.f32 %v469, %v592
        %v686 = vmul.f32 %v470, %v592
        %v687 = vmul.f32 %v471, %v596
        %v688 = vmul.f32 %v472, %v596
        %v689 = vmul.f32 %v473, %v600
        %v690 = vmul.f32 %v474, %v600
        %v691 = vmul.f32 %v475, %v604
        %v692 = vmul.f32 %v476, %v604
        %v693 = vmul.f32 %v477, %v608
        %v694 = vmul.f32 %v478, %v608
        %v695 = vmul.f32 %v479, %v612
        %v696 = vmul.f32 %v480, %v612
        %v697 = vmul.f32 %v481, %v616
        %v698 = vmul.f32 %v482, %v616
        %v699 = vmul.f32 %v483, %v620
        %v700 = vmul.f32 %v484, %v620
        %v701 = vmul.f32 %v485, %v624
        %v702 = vmul.f32 %v486, %v624
        %v703 = vmul.f32 %v487, %v628
        %v704 = vmul.f32 %v488, %v628
        %v705 = vmul.f32 %v489, %v632
        %v706 = vmul.f32 %v490, %v632
        %v707 = vmul.f32 %v491, %v636
        %v708 = vmul.f32 %v492, %v636
        %v709 = vld [vmem:[%s427] sm:$0x1]
        %v710 = vld [vmem:[%s427 + $0x1] sm:$0x1]
        %v711 = vld [vmem:[%s427 + $0x2] sm:$0x1]
        %v712 = vld [vmem:[%s427 + $0x3] sm:$0x1]
        %v713 = vld [vmem:[%s427 + $0x4] sm:$0x1]
        %v714 = vld [vmem:[%s427 + $0x5] sm:$0x1]
        %v715 = vld [vmem:[%s427 + $0x6] sm:$0x1]
        %v716 = vld [vmem:[%s427 + $0x7] sm:$0x1]
        %v717 = vld [vmem:[%s427 + $0x8] sm:$0x1]
        %v718 = vld [vmem:[%s427 + $0x9] sm:$0x1]
        %v719 = vld [vmem:[%s427 + $0xa] sm:$0x1]
        %v720 = vld [vmem:[%s427 + $0xb] sm:$0x1]
        %v721 = vld [vmem:[%s427 + $0xc] sm:$0x1]
        %v722 = vld [vmem:[%s427 + $0xd] sm:$0x1]
        %v723 = vld [vmem:[%s427 + $0xe] sm:$0x1]
        %v724 = vld [vmem:[%s427 + $0xf] sm:$0x1]
        %v725 = vld [vmem:[%s427 + $0x10] sm:$0x1]
        %v726 = vld [vmem:[%s427 + $0x11] sm:$0x1]
        %v727 = vld [vmem:[%s427 + $0x12] sm:$0x1]
        %v728 = vld [vmem:[%s427 + $0x13] sm:$0x1]
        %v729 = vld [vmem:[%s427 + $0x14] sm:$0x1]
        %v730 = vld [vmem:[%s427 + $0x15] sm:$0x1]
        %v731 = vld [vmem:[%s427 + $0x16] sm:$0x1]
        %v732 = vld [vmem:[%s427 + $0x17] sm:$0x1]
        %v757 = vlaneseq
        %v758 = vshrl.u32 %v757, 7
        %v759 = vsub.s32 0, %v758
        %v760 = vrot.slane %v709, %v759
        %v761 = vlaneseq
        %v762 = vshrl.u32 %v761, 7
        %v763 = vsub.s32 0, %v762
        %v764 = vrot.slane %v710, %v763
        %v765 = vlaneseq
        %v766 = vshrl.u32 %v765, 7
        %v767 = vsub.s32 0, %v766
        %v768 = vrot.slane %v711, %v767
        %v769 = vlaneseq
        %v770 = vshrl.u32 %v769, 7
        %v771 = vsub.s32 0, %v770
        %v772 = vrot.slane %v712, %v771
        %v773 = vlaneseq
        %v774 = vshrl.u32 %v773, 7
        %v775 = vsub.s32 0, %v774
        %v776 = vrot.slane %v713, %v775
        %v777 = vlaneseq
        %v778 = vshrl.u32 %v777, 7
        %v779 = vsub.s32 0, %v778
        %v780 = vrot.slane %v714, %v779
        %v781 = vlaneseq
        %v782 = vshrl.u32 %v781, 7
        %v783 = vsub.s32 0, %v782
        %v784 = vrot.slane %v715, %v783
        %v785 = vlaneseq
        %v786 = vshrl.u32 %v785, 7
        %v787 = vsub.s32 0, %v786
        %v788 = vrot.slane %v716, %v787
        %v789 = vlaneseq
        %v790 = vshrl.u32 %v789, 7
        %v791 = vsub.s32 0, %v790
        %v792 = vrot.slane %v717, %v791
        %v793 = vlaneseq
        %v794 = vshrl.u32 %v793, 7
        %v795 = vsub.s32 0, %v794
        %v796 = vrot.slane %v718, %v795
        %v797 = vlaneseq
        %v798 = vshrl.u32 %v797, 7
        %v799 = vsub.s32 0, %v798
        %v800 = vrot.slane %v719, %v799
        %v801 = vlaneseq
        %v802 = vshrl.u32 %v801, 7
        %v803 = vsub.s32 0, %v802
        %v804 = vrot.slane %v720, %v803
        %v805 = vlaneseq
        %v806 = vshrl.u32 %v805, 7
        %v807 = vsub.s32 0, %v806
        %v808 = vrot.slane %v721, %v807
        %v809 = vlaneseq
        %v810 = vshrl.u32 %v809, 7
        %v811 = vsub.s32 0, %v810
        %v812 = vrot.slane %v722, %v811
        %v813 = vlaneseq
        %v814 = vshrl.u32 %v813, 7
        %v815 = vsub.s32 0, %v814
        %v816 = vrot.slane %v723, %v815
        %v817 = vlaneseq
        %v818 = vshrl.u32 %v817, 7
        %v819 = vsub.s32 0, %v818
        %v820 = vrot.slane %v724, %v819
        %v821 = vlaneseq
        %v822 = vshrl.u32 %v821, 7
        %v823 = vsub.s32 0, %v822
        %v824 = vrot.slane %v725, %v823
        %v825 = vlaneseq
        %v826 = vshrl.u32 %v825, 7
        %v827 = vsub.s32 0, %v826
        %v828 = vrot.slane %v726, %v827
        %v829 = vlaneseq
        %v830 = vshrl.u32 %v829, 7
        %v831 = vsub.s32 0, %v830
        %v832 = vrot.slane %v727, %v831
        %v833 = vlaneseq
        %v834 = vshrl.u32 %v833, 7
        %v835 = vsub.s32 0, %v834
        %v836 = vrot.slane %v728, %v835
        %v837 = vlaneseq
        %v838 = vshrl.u32 %v837, 7
        %v839 = vsub.s32 0, %v838
        %v840 = vrot.slane %v729, %v839
        %v841 = vlaneseq
        %v842 = vshrl.u32 %v841, 7
        %v843 = vsub.s32 0, %v842
        %v844 = vrot.slane %v730, %v843
        %v845 = vlaneseq
        %v846 = vshrl.u32 %v845, 7
        %v847 = vsub.s32 0, %v846
        %v848 = vrot.slane %v731, %v847
        %v849 = vlaneseq
        %v850 = vshrl.u32 %v849, 7
        %v851 = vsub.s32 0, %v850
        %v852 = vrot.slane %v732, %v851
        %v877 = vadd.f32 %v661, %v760
        %v878 = vadd.f32 %v662, %v760
        %v879 = vadd.f32 %v663, %v764
        %v880 = vadd.f32 %v664, %v764
        %v881 = vadd.f32 %v665, %v768
        %v882 = vadd.f32 %v666, %v768
        %v883 = vadd.f32 %v667, %v772
        %v884 = vadd.f32 %v668, %v772
        %v885 = vadd.f32 %v669, %v776
        %v886 = vadd.f32 %v670, %v776
        %v887 = vadd.f32 %v671, %v780
        %v888 = vadd.f32 %v672, %v780
        %v889 = vadd.f32 %v673, %v784
        %v890 = vadd.f32 %v674, %v784
        %v891 = vadd.f32 %v675, %v788
        %v892 = vadd.f32 %v676, %v788
        %v893 = vadd.f32 %v677, %v792
        %v894 = vadd.f32 %v678, %v792
        %v895 = vadd.f32 %v679, %v796
        %v896 = vadd.f32 %v680, %v796
        %v897 = vadd.f32 %v681, %v800
        %v898 = vadd.f32 %v682, %v800
        %v899 = vadd.f32 %v683, %v804
        %v900 = vadd.f32 %v684, %v804
        %v901 = vadd.f32 %v685, %v808
        %v902 = vadd.f32 %v686, %v808
        %v903 = vadd.f32 %v687, %v812
        %v904 = vadd.f32 %v688, %v812
        %v905 = vadd.f32 %v689, %v816
        %v906 = vadd.f32 %v690, %v816
        %v907 = vadd.f32 %v691, %v820
        %v908 = vadd.f32 %v692, %v820
        %v909 = vadd.f32 %v693, %v824
        %v910 = vadd.f32 %v694, %v824
        %v911 = vadd.f32 %v695, %v828
        %v912 = vadd.f32 %v696, %v828
        %v913 = vadd.f32 %v697, %v832
        %v914 = vadd.f32 %v698, %v832
        %v915 = vadd.f32 %v699, %v836
        %v916 = vadd.f32 %v700, %v836
        %v917 = vadd.f32 %v701, %v840
        %v918 = vadd.f32 %v702, %v840
        %v919 = vadd.f32 %v703, %v844
        %v920 = vadd.f32 %v704, %v844
        %v921 = vadd.f32 %v705, %v848
        %v922 = vadd.f32 %v706, %v848
        %v923 = vadd.f32 %v707, %v852
        %v924 = vadd.f32 %v708, %v852
        %v925 = vmax.f32 %v877, 0.0
        %v926 = vmax.f32 %v878, 0.0
        %v927 = vmax.f32 %v879, 0.0
        %v928 = vmax.f32 %v880, 0.0
        %v929 = vmax.f32 %v881, 0.0
        %v930 = vmax.f32 %v882, 0.0
        %v931 = vmax.f32 %v883, 0.0
        %v932 = vmax.f32 %v884, 0.0
        %v933 = vmax.f32 %v885, 0.0
        %v934 = vmax.f32 %v886, 0.0
        %v935 = vmax.f32 %v887, 0.0
        %v936 = vmax.f32 %v888, 0.0
        %v937 = vmax.f32 %v889, 0.0
        %v938 = vmax.f32 %v890, 0.0
        %v939 = vmax.f32 %v891, 0.0
        %v940 = vmax.f32 %v892, 0.0
        %v941 = vmax.f32 %v893, 0.0
        %v942 = vmax.f32 %v894, 0.0
        %v943 = vmax.f32 %v895, 0.0
        %v944 = vmax.f32 %v896, 0.0
        %v945 = vmax.f32 %v897, 0.0
        %v946 = vmax.f32 %v898, 0.0
        %v947 = vmax.f32 %v899, 0.0
        %v948 = vmax.f32 %v900, 0.0
        %v949 = vmax.f32 %v901, 0.0
        %v950 = vmax.f32 %v902, 0.0
        %v951 = vmax.f32 %v903, 0.0
        %v952 = vmax.f32 %v904, 0.0
        %v953 = vmax.f32 %v905, 0.0
        %v954 = vmax.f32 %v906, 0.0
        %v955 = vmax.f32 %v907, 0.0
        %v956 = vmax.f32 %v908, 0.0
        %v957 = vmax.f32 %v909, 0.0
        %v958 = vmax.f32 %v910, 0.0
        %v959 = vmax.f32 %v911, 0.0
        %v960 = vmax.f32 %v912, 0.0
        %v961 = vmax.f32 %v913, 0.0
        %v962 = vmax.f32 %v914, 0.0
        %v963 = vmax.f32 %v915, 0.0
        %v964 = vmax.f32 %v916, 0.0
        %v965 = vmax.f32 %v917, 0.0
        %v966 = vmax.f32 %v918, 0.0
        %v967 = vmax.f32 %v919, 0.0
        %v968 = vmax.f32 %v920, 0.0
        %v969 = vmax.f32 %v921, 0.0
        %v970 = vmax.f32 %v922, 0.0
        %v971 = vmax.f32 %v923, 0.0
        %v972 = vmax.f32 %v924, 0.0
        %vm973 = vcmask 1047680
        %974 = vrot.lane.b32.xlu0 %v925, 16
        %v975 = vpop.permute.xlu0 %974
        %v976 = vsel %vm973, %v975, %v925
        %977 = vrot.lane.b32.xlu0 %v926, 16
        %v978 = vpop.permute.xlu0 %977
        %v979 = vsel %vm973, %v978, %v926
        %980 = vrot.lane.b32.xlu0 %v927, 16
        %v981 = vpop.permute.xlu0 %980
        %v982 = vsel %vm973, %v981, %v927
        %983 = vrot.lane.b32.xlu0 %v928, 16
        %v984 = vpop.permute.xlu0 %983
        %v985 = vsel %vm973, %v984, %v928
        %986 = vrot.lane.b32.xlu0 %v929, 16
        %v987 = vpop.permute.xlu0 %986
        %v988 = vsel %vm973, %v987, %v929
        %989 = vrot.lane.b32.xlu0 %v930, 16
        %v990 = vpop.permute.xlu0 %989
        %v991 = vsel %vm973, %v990, %v930
        %992 = vrot.lane.b32.xlu0 %v931, 16
        %v993 = vpop.permute.xlu0 %992
        %v994 = vsel %vm973, %v993, %v931
        %995 = vrot.lane.b32.xlu0 %v932, 16
        %v996 = vpop.permute.xlu0 %995
        %v997 = vsel %vm973, %v996, %v932
        %998 = vrot.lane.b32.xlu0 %v933, 16
        %v999 = vpop.permute.xlu0 %998
        %v1000 = vsel %vm973, %v999, %v933
        %1001 = vrot.lane.b32.xlu0 %v934, 16
        %v1002 = vpop.permute.xlu0 %1001
        %v1003 = vsel %vm973, %v1002, %v934
        %1004 = vrot.lane.b32.xlu0 %v935, 16
        %v1005 = vpop.permute.xlu0 %1004
        %v1006 = vsel %vm973, %v1005, %v935
        %1007 = vrot.lane.b32.xlu0 %v936, 16
        %v1008 = vpop.permute.xlu0 %1007
        %v1009 = vsel %vm973, %v1008, %v936
        %1010 = vrot.lane.b32.xlu0 %v937, 16
        %v1011 = vpop.permute.xlu0 %1010
        %v1012 = vsel %vm973, %v1011, %v937
        %1013 = vrot.lane.b32.xlu0 %v938, 16
        %v1014 = vpop.permute.xlu0 %1013
        %v1015 = vsel %vm973, %v1014, %v938
        %1016 = vrot.lane.b32.xlu0 %v939, 16
        %v1017 = vpop.permute.xlu0 %1016
        %v1018 = vsel %vm973, %v1017, %v939
        %1019 = vrot.lane.b32.xlu0 %v940, 16
        %v1020 = vpop.permute.xlu0 %1019
        %v1021 = vsel %vm973, %v1020, %v940
        %1022 = vrot.lane.b32.xlu0 %v941, 16
        %v1023 = vpop.permute.xlu0 %1022
        %v1024 = vsel %vm973, %v1023, %v941
        %1025 = vrot.lane.b32.xlu0 %v942, 16
        %v1026 = vpop.permute.xlu0 %1025
        %v1027 = vsel %vm973, %v1026, %v942
        %1028 = vrot.lane.b32.xlu0 %v943, 16
        %v1029 = vpop.permute.xlu0 %1028
        %v1030 = vsel %vm973, %v1029, %v943
        %1031 = vrot.lane.b32.xlu0 %v944, 16
        %v1032 = vpop.permute.xlu0 %1031
        %v1033 = vsel %vm973, %v1032, %v944
        %1034 = vrot.lane.b32.xlu0 %v945, 16
        %v1035 = vpop.permute.xlu0 %1034
        %v1036 = vsel %vm973, %v1035, %v945
        %1037 = vrot.lane.b32.xlu0 %v946, 16
        %v1038 = vpop.permute.xlu0 %1037
        %v1039 = vsel %vm973, %v1038, %v946
        %1040 = vrot.lane.b32.xlu0 %v947, 16
        %v1041 = vpop.permute.xlu0 %1040
        %v1042 = vsel %vm973, %v1041, %v947
        %1043 = vrot.lane.b32.xlu0 %v948, 16
        %v1044 = vpop.permute.xlu0 %1043
        %v1045 = vsel %vm973, %v1044, %v948
        %1046 = vrot.lane.b32.xlu0 %v949, 16
        %v1047 = vpop.permute.xlu0 %1046
        %v1048 = vsel %vm973, %v1047, %v949
        %1049 = vrot.lane.b32.xlu0 %v950, 16
        %v1050 = vpop.permute.xlu0 %1049
        %v1051 = vsel %vm973, %v1050, %v950
        %1052 = vrot.lane.b32.xlu0 %v951, 16
        %v1053 = vpop.permute.xlu0 %1052
        %v1054 = vsel %vm973, %v1053, %v951
        %1055 = vrot.lane.b32.xlu0 %v952, 16
        %v1056 = vpop.permute.xlu0 %1055
        %v1057 = vsel %vm973, %v1056, %v952
        %1058 = vrot.lane.b32.xlu0 %v953, 16
        %v1059 = vpop.permute.xlu0 %1058
        %v1060 = vsel %vm973, %v1059, %v953
        %1061 = vrot.lane.b32.xlu0 %v954, 16
        %v1062 = vpop.permute.xlu0 %1061
        %v1063 = vsel %vm973, %v1062, %v954
        %1064 = vrot.lane.b32.xlu0 %v955, 16
        %v1065 = vpop.permute.xlu0 %1064
        %v1066 = vsel %vm973, %v1065, %v955
        %1067 = vrot.lane.b32.xlu0 %v956, 16
        %v1068 = vpop.permute.xlu0 %1067
        %v1069 = vsel %vm973, %v1068, %v956
        %1070 = vrot.lane.b32.xlu0 %v957, 16
        %v1071 = vpop.permute.xlu0 %1070
        %v1072 = vsel %vm973, %v1071, %v957
        %1073 = vrot.lane.b32.xlu0 %v958, 16
        %v1074 = vpop.permute.xlu0 %1073
        %v1075 = vsel %vm973, %v1074, %v958
        %1076 = vrot.lane.b32.xlu0 %v959, 16
        %v1077 = vpop.permute.xlu0 %1076
        %v1078 = vsel %vm973, %v1077, %v959
        %1079 = vrot.lane.b32.xlu0 %v960, 16
        %v1080 = vpop.permute.xlu0 %1079
        %v1081 = vsel %vm973, %v1080, %v960
        %1082 = vrot.lane.b32.xlu0 %v961, 16
        %v1083 = vpop.permute.xlu0 %1082
        %v1084 = vsel %vm973, %v1083, %v961
        %1085 = vrot.lane.b32.xlu0 %v962, 16
        %v1086 = vpop.permute.xlu0 %1085
        %v1087 = vsel %vm973, %v1086, %v962
        %1088 = vrot.lane.b32.xlu0 %v963, 16
        %v1089 = vpop.permute.xlu0 %1088
        %v1090 = vsel %vm973, %v1089, %v963
        %1091 = vrot.lane.b32.xlu0 %v964, 16
        %v1092 = vpop.permute.xlu0 %1091
        %v1093 = vsel %vm973, %v1092, %v964
        %1094 = vrot.lane.b32.xlu0 %v965, 16
        %v1095 = vpop.permute.xlu0 %1094
        %v1096 = vsel %vm973, %v1095, %v965
        %1097 = vrot.lane.b32.xlu0 %v966, 16
        %v1098 = vpop.permute.xlu0 %1097
        %v1099 = vsel %vm973, %v1098, %v966
        %1100 = vrot.lane.b32.xlu0 %v967, 16
        %v1101 = vpop.permute.xlu0 %1100
        %v1102 = vsel %vm973, %v1101, %v967
        %1103 = vrot.lane.b32.xlu0 %v968, 16
        %v1104 = vpop.permute.xlu0 %1103
        %v1105 = vsel %vm973, %v1104, %v968
        %1106 = vrot.lane.b32.xlu0 %v969, 16
        %v1107 = vpop.permute.xlu0 %1106
        %v1108 = vsel %vm973, %v1107, %v969
        %1109 = vrot.lane.b32.xlu0 %v970, 16
        %v1110 = vpop.permute.xlu0 %1109
        %v1111 = vsel %vm973, %v1110, %v970
        %1112 = vrot.lane.b32.xlu0 %v971, 16
        %v1113 = vpop.permute.xlu0 %1112
        %v1114 = vsel %vm973, %v1113, %v971
        %1115 = vrot.lane.b32.xlu0 %v972, 16
        %v1116 = vpop.permute.xlu0 %1115
        %v1117 = vsel %vm973, %v1116, %v972
        %1118 = vrot.lane.b32.xlu0 %v976, 16
        %v1119 = vpop.permute.xlu0 %1118
        %1120 = vrot.lane.b32.xlu0 %v979, 16
        %v1121 = vpop.permute.xlu0 %1120
        %1122 = vrot.lane.b32.xlu0 %v982, 16
        %v1123 = vpop.permute.xlu0 %1122
        %1124 = vrot.lane.b32.xlu0 %v985, 16
        %v1125 = vpop.permute.xlu0 %1124
        %1126 = vrot.lane.b32.xlu0 %v988, 16
        %v1127 = vpop.permute.xlu0 %1126
        %1128 = vrot.lane.b32.xlu0 %v991, 16
        %v1129 = vpop.permute.xlu0 %1128
        %1130 = vrot.lane.b32.xlu0 %v994, 16
        %v1131 = vpop.permute.xlu0 %1130
        %1132 = vrot.lane.b32.xlu0 %v997, 16
        %v1133 = vpop.permute.xlu0 %1132
        %1134 = vrot.lane.b32.xlu0 %v1000, 16
        %v1135 = vpop.permute.xlu0 %1134
        %1136 = vrot.lane.b32.xlu0 %v1003, 16
        %v1137 = vpop.permute.xlu0 %1136
        %1138 = vrot.lane.b32.xlu0 %v1006, 16
        %v1139 = vpop.permute.xlu0 %1138
        %1140 = vrot.lane.b32.xlu0 %v1009, 16
        %v1141 = vpop.permute.xlu0 %1140
        %1142 = vrot.lane.b32.xlu0 %v1012, 16
        %v1143 = vpop.permute.xlu0 %1142
        %1144 = vrot.lane.b32.xlu0 %v1015, 16
        %v1145 = vpop.permute.xlu0 %1144
        %1146 = vrot.lane.b32.xlu0 %v1018, 16
        %v1147 = vpop.permute.xlu0 %1146
        %1148 = vrot.lane.b32.xlu0 %v1021, 16
        %v1149 = vpop.permute.xlu0 %1148
        %1150 = vrot.lane.b32.xlu0 %v1024, 16
        %v1151 = vpop.permute.xlu0 %1150
        %1152 = vrot.lane.b32.xlu0 %v1027, 16
        %v1153 = vpop.permute.xlu0 %1152
        %1154 = vrot.lane.b32.xlu0 %v1030, 16
        %v1155 = vpop.permute.xlu0 %1154
        %1156 = vrot.lane.b32.xlu0 %v1033, 16
        %v1157 = vpop.permute.xlu0 %1156
        %1158 = vrot.lane.b32.xlu0 %v1036, 16
        %v1159 = vpop.permute.xlu0 %1158
        %1160 = vrot.lane.b32.xlu0 %v1039, 16
        %v1161 = vpop.permute.xlu0 %1160
        %1162 = vrot.lane.b32.xlu0 %v1042, 16
        %v1163 = vpop.permute.xlu0 %1162
        %1164 = vrot.lane.b32.xlu0 %v1045, 16
        %v1165 = vpop.permute.xlu0 %1164
        %1166 = vrot.lane.b32.xlu0 %v1048, 16
        %v1167 = vpop.permute.xlu0 %1166
        %1168 = vrot.lane.b32.xlu0 %v1051, 16
        %v1169 = vpop.permute.xlu0 %1168
        %1170 = vrot.lane.b32.xlu0 %v1054, 16
        %v1171 = vpop.permute.xlu0 %1170
        %1172 = vrot.lane.b32.xlu0 %v1057, 16
        %v1173 = vpop.permute.xlu0 %1172
        %1174 = vrot.lane.b32.xlu0 %v1060, 16
        %v1175 = vpop.permute.xlu0 %1174
        %1176 = vrot.lane.b32.xlu0 %v1063, 16
        %v1177 = vpop.permute.xlu0 %1176
        %1178 = vrot.lane.b32.xlu0 %v1066, 16
        %v1179 = vpop.permute.xlu0 %1178
        %1180 = vrot.lane.b32.xlu0 %v1069, 16
        %v1181 = vpop.permute.xlu0 %1180
        %1182 = vrot.lane.b32.xlu0 %v1072, 16
        %v1183 = vpop.permute.xlu0 %1182
        %1184 = vrot.lane.b32.xlu0 %v1075, 16
        %v1185 = vpop.permute.xlu0 %1184
        %1186 = vrot.lane.b32.xlu0 %v1078, 16
        %v1187 = vpop.permute.xlu0 %1186
        %1188 = vrot.lane.b32.xlu0 %v1081, 16
        %v1189 = vpop.permute.xlu0 %1188
        %1190 = vrot.lane.b32.xlu0 %v1084, 16
        %v1191 = vpop.permute.xlu0 %1190
        %1192 = vrot.lane.b32.xlu0 %v1087, 16
        %v1193 = vpop.permute.xlu0 %1192
        %1194 = vrot.lane.b32.xlu0 %v1090, 16
        %v1195 = vpop.permute.xlu0 %1194
        %1196 = vrot.lane.b32.xlu0 %v1093, 16
        %v1197 = vpop.permute.xlu0 %1196
        %1198 = vrot.lane.b32.xlu0 %v1096, 16
        %v1199 = vpop.permute.xlu0 %1198
        %1200 = vrot.lane.b32.xlu0 %v1099, 16
        %v1201 = vpop.permute.xlu0 %1200
        %1202 = vrot.lane.b32.xlu0 %v1102, 16
        %v1203 = vpop.permute.xlu0 %1202
        %1204 = vrot.lane.b32.xlu0 %v1105, 16
        %v1205 = vpop.permute.xlu0 %1204
        %1206 = vrot.lane.b32.xlu0 %v1108, 16
        %v1207 = vpop.permute.xlu0 %1206
        %1208 = vrot.lane.b32.xlu0 %v1111, 16
        %v1209 = vpop.permute.xlu0 %1208
        %1210 = vrot.lane.b32.xlu0 %v1114, 16
        %v1211 = vpop.permute.xlu0 %1210
        %1212 = vrot.lane.b32.xlu0 %v1117, 16
        %v1213 = vpop.permute.xlu0 %1212
        %v1214 = vsel %vm973, %v1119, %v925
        %v1215 = vsel %vm973, %v1121, %v926
        %v1216 = vsel %vm973, %v1123, %v927
        %v1217 = vsel %vm973, %v1125, %v928
        %v1218 = vsel %vm973, %v1127, %v929
        %v1219 = vsel %vm973, %v1129, %v930
        %v1220 = vsel %vm973, %v1131, %v931
        %v1221 = vsel %vm973, %v1133, %v932
        %v1222 = vsel %vm973, %v1135, %v933
        %v1223 = vsel %vm973, %v1137, %v934
        %v1224 = vsel %vm973, %v1139, %v935
        %v1225 = vsel %vm973, %v1141, %v936
        %v1226 = vsel %vm973, %v1143, %v937
        %v1227 = vsel %vm973, %v1145, %v938
        %v1228 = vsel %vm973, %v1147, %v939
        %v1229 = vsel %vm973, %v1149, %v940
        %v1230 = vsel %vm973, %v1151, %v941
        %v1231 = vsel %vm973, %v1153, %v942
        %v1232 = vsel %vm973, %v1155, %v943
        %v1233 = vsel %vm973, %v1157, %v944
        %v1234 = vsel %vm973, %v1159, %v945
        %v1235 = vsel %vm973, %v1161, %v946
        %v1236 = vsel %vm973, %v1163, %v947
        %v1237 = vsel %vm973, %v1165, %v948
        %v1238 = vsel %vm973, %v1167, %v949
        %v1239 = vsel %vm973, %v1169, %v950
        %v1240 = vsel %vm973, %v1171, %v951
        %v1241 = vsel %vm973, %v1173, %v952
        %v1242 = vsel %vm973, %v1175, %v953
        %v1243 = vsel %vm973, %v1177, %v954
        %v1244 = vsel %vm973, %v1179, %v955
        %v1245 = vsel %vm973, %v1181, %v956
        %v1246 = vsel %vm973, %v1183, %v957
        %v1247 = vsel %vm973, %v1185, %v958
        %v1248 = vsel %vm973, %v1187, %v959
        %v1249 = vsel %vm973, %v1189, %v960
        %v1250 = vsel %vm973, %v1191, %v961
        %v1251 = vsel %vm973, %v1193, %v962
        %v1252 = vsel %vm973, %v1195, %v963
        %v1253 = vsel %vm973, %v1197, %v964
        %v1254 = vsel %vm973, %v1199, %v965
        %v1255 = vsel %vm973, %v1201, %v966
        %v1256 = vsel %vm973, %v1203, %v967
        %v1257 = vsel %vm973, %v1205, %v968
        %v1258 = vsel %vm973, %v1207, %v969
        %v1259 = vsel %vm973, %v1209, %v970
        %v1260 = vsel %vm973, %v1211, %v971
        %v1261 = vsel %vm973, %v1213, %v972
        %v1262 = vld [vmem:[%s353] sm:$0x1]
        %v1263 = vld [vmem:[%s353 + $0x1] sm:$0x1]
        %v1264 = vld [vmem:[%s353 + $0x2] sm:$0x1]
        %v1265 = vld [vmem:[%s353 + $0x3] sm:$0x1]
        %v1266 = vld [vmem:[%s353 + $0x4] sm:$0x1]
        %v1267 = vld [vmem:[%s353 + $0x5] sm:$0x1]
        %v1268 = vld [vmem:[%s353 + $0x6] sm:$0x1]
        %v1269 = vld [vmem:[%s353 + $0x7] sm:$0x1]
        %v1270 = vld [vmem:[%s353 + $0x8] sm:$0x1]
        %v1271 = vld [vmem:[%s353 + $0x9] sm:$0x1]
        %v1272 = vld [vmem:[%s353 + $0xa] sm:$0x1]
        %v1273 = vld [vmem:[%s353 + $0xb] sm:$0x1]
        %v1274 = vld [vmem:[%s353 + $0xc] sm:$0x1]
        %v1275 = vld [vmem:[%s353 + $0xd] sm:$0x1]
        %v1276 = vld [vmem:[%s353 + $0xe] sm:$0x1]
        %v1277 = vld [vmem:[%s353 + $0xf] sm:$0x1]
        %v1278 = vld [vmem:[%s353 + $0x10] sm:$0x1]
        %v1279 = vld [vmem:[%s353 + $0x11] sm:$0x1]
        %v1280 = vld [vmem:[%s353 + $0x12] sm:$0x1]
        %v1281 = vld [vmem:[%s353 + $0x13] sm:$0x1]
        %v1282 = vld [vmem:[%s353 + $0x14] sm:$0x1]
        %v1283 = vld [vmem:[%s353 + $0x15] sm:$0x1]
        %v1284 = vld [vmem:[%s353 + $0x16] sm:$0x1]
        %v1285 = vld [vmem:[%s353 + $0x17] sm:$0x1]
        %v1310 = vlaneseq
        %v1311 = vshrl.u32 %v1310, 7
        %v1312 = vsub.s32 0, %v1311
        %v1313 = vrot.slane %v1262, %v1312
        %v1314 = vlaneseq
        %v1315 = vshrl.u32 %v1314, 7
        %v1316 = vsub.s32 0, %v1315
        %v1317 = vrot.slane %v1263, %v1316
        %v1318 = vlaneseq
        %v1319 = vshrl.u32 %v1318, 7
        %v1320 = vsub.s32 0, %v1319
        %v1321 = vrot.slane %v1264, %v1320
        %v1322 = vlaneseq
        %v1323 = vshrl.u32 %v1322, 7
        %v1324 = vsub.s32 0, %v1323
        %v1325 = vrot.slane %v1265, %v1324
        %v1326 = vlaneseq
        %v1327 = vshrl.u32 %v1326, 7
        %v1328 = vsub.s32 0, %v1327
        %v1329 = vrot.slane %v1266, %v1328
        %v1330 = vlaneseq
        %v1331 = vshrl.u32 %v1330, 7
        %v1332 = vsub.s32 0, %v1331
        %v1333 = vrot.slane %v1267, %v1332
        %v1334 = vlaneseq
        %v1335 = vshrl.u32 %v1334, 7
        %v1336 = vsub.s32 0, %v1335
        %v1337 = vrot.slane %v1268, %v1336
        %v1338 = vlaneseq
        %v1339 = vshrl.u32 %v1338, 7
        %v1340 = vsub.s32 0, %v1339
        %v1341 = vrot.slane %v1269, %v1340
        %v1342 = vlaneseq
        %v1343 = vshrl.u32 %v1342, 7
        %v1344 = vsub.s32 0, %v1343
        %v1345 = vrot.slane %v1270, %v1344
        %v1346 = vlaneseq
        %v1347 = vshrl.u32 %v1346, 7
        %v1348 = vsub.s32 0, %v1347
        %v1349 = vrot.slane %v1271, %v1348
        %v1350 = vlaneseq
        %v1351 = vshrl.u32 %v1350, 7
        %v1352 = vsub.s32 0, %v1351
        %v1353 = vrot.slane %v1272, %v1352
        %v1354 = vlaneseq
        %v1355 = vshrl.u32 %v1354, 7
        %v1356 = vsub.s32 0, %v1355
        %v1357 = vrot.slane %v1273, %v1356
        %v1358 = vlaneseq
        %v1359 = vshrl.u32 %v1358, 7
        %v1360 = vsub.s32 0, %v1359
        %v1361 = vrot.slane %v1274, %v1360
        %v1362 = vlaneseq
        %v1363 = vshrl.u32 %v1362, 7
        %v1364 = vsub.s32 0, %v1363
        %v1365 = vrot.slane %v1275, %v1364
        %v1366 = vlaneseq
        %v1367 = vshrl.u32 %v1366, 7
        %v1368 = vsub.s32 0, %v1367
        %v1369 = vrot.slane %v1276, %v1368
        %v1370 = vlaneseq
        %v1371 = vshrl.u32 %v1370, 7
        %v1372 = vsub.s32 0, %v1371
        %v1373 = vrot.slane %v1277, %v1372
        %v1374 = vlaneseq
        %v1375 = vshrl.u32 %v1374, 7
        %v1376 = vsub.s32 0, %v1375
        %v1377 = vrot.slane %v1278, %v1376
        %v1378 = vlaneseq
        %v1379 = vshrl.u32 %v1378, 7
        %v1380 = vsub.s32 0, %v1379
        %v1381 = vrot.slane %v1279, %v1380
        %v1382 = vlaneseq
        %v1383 = vshrl.u32 %v1382, 7
        %v1384 = vsub.s32 0, %v1383
        %v1385 = vrot.slane %v1280, %v1384
        %v1386 = vlaneseq
        %v1387 = vshrl.u32 %v1386, 7
        %v1388 = vsub.s32 0, %v1387
        %v1389 = vrot.slane %v1281, %v1388
        %v1390 = vlaneseq
        %v1391 = vshrl.u32 %v1390, 7
        %v1392 = vsub.s32 0, %v1391
        %v1393 = vrot.slane %v1282, %v1392
        %v1394 = vlaneseq
        %v1395 = vshrl.u32 %v1394, 7
        %v1396 = vsub.s32 0, %v1395
        %v1397 = vrot.slane %v1283, %v1396
        %v1398 = vlaneseq
        %v1399 = vshrl.u32 %v1398, 7
        %v1400 = vsub.s32 0, %v1399
        %v1401 = vrot.slane %v1284, %v1400
        %v1402 = vlaneseq
        %v1403 = vshrl.u32 %v1402, 7
        %v1404 = vsub.s32 0, %v1403
        %v1405 = vrot.slane %v1285, %v1404
        %1406 = vrot.lane.b32.xlu0 %v1313, 15
        %v1407 = vpop.permute.xlu0 %1406
        %1408 = vrot.lane.b32.xlu0 %v1317, 15
        %v1409 = vpop.permute.xlu0 %1408
        %1410 = vrot.lane.b32.xlu0 %v1321, 15
        %v1411 = vpop.permute.xlu0 %1410
        %1412 = vrot.lane.b32.xlu0 %v1325, 15
        %v1413 = vpop.permute.xlu0 %1412
        %1414 = vrot.lane.b32.xlu0 %v1329, 15
        %v1415 = vpop.permute.xlu0 %1414
        %1416 = vrot.lane.b32.xlu0 %v1333, 15
        %v1417 = vpop.permute.xlu0 %1416
        %1418 = vrot.lane.b32.xlu0 %v1337, 15
        %v1419 = vpop.permute.xlu0 %1418
        %1420 = vrot.lane.b32.xlu0 %v1341, 15
        %v1421 = vpop.permute.xlu0 %1420
        %1422 = vrot.lane.b32.xlu0 %v1345, 15
        %v1423 = vpop.permute.xlu0 %1422
        %1424 = vrot.lane.b32.xlu0 %v1349, 15
        %v1425 = vpop.permute.xlu0 %1424
        %1426 = vrot.lane.b32.xlu0 %v1353, 15
        %v1427 = vpop.permute.xlu0 %1426
        %1428 = vrot.lane.b32.xlu0 %v1357, 15
        %v1429 = vpop.permute.xlu0 %1428
        %1430 = vrot.lane.b32.xlu0 %v1361, 15
        %v1431 = vpop.permute.xlu0 %1430
        %1432 = vrot.lane.b32.xlu0 %v1365, 15
        %v1433 = vpop.permute.xlu0 %1432
        %1434 = vrot.lane.b32.xlu0 %v1369, 15
        %v1435 = vpop.permute.xlu0 %1434
        %1436 = vrot.lane.b32.xlu0 %v1373, 15
        %v1437 = vpop.permute.xlu0 %1436
        %1438 = vrot.lane.b32.xlu0 %v1377, 15
        %v1439 = vpop.permute.xlu0 %1438
        %1440 = vrot.lane.b32.xlu0 %v1381, 15
        %v1441 = vpop.permute.xlu0 %1440
        %1442 = vrot.lane.b32.xlu0 %v1385, 15
        %v1443 = vpop.permute.xlu0 %1442
        %1444 = vrot.lane.b32.xlu0 %v1389, 15
        %v1445 = vpop.permute.xlu0 %1444
        %1446 = vrot.lane.b32.xlu0 %v1393, 15
        %v1447 = vpop.permute.xlu0 %1446
        %1448 = vrot.lane.b32.xlu0 %v1397, 15
        %v1449 = vpop.permute.xlu0 %1448
        %1450 = vrot.lane.b32.xlu0 %v1401, 15
        %v1451 = vpop.permute.xlu0 %1450
        %1452 = vrot.lane.b32.xlu0 %v1405, 15
        %v1453 = vpop.permute.xlu0 %1452
        %v1478 = vmul.f32 %v1214, %v1407
        %v1479 = vmul.f32 %v1215, %v1407
        %v1480 = vmul.f32 %v1216, %v1409
        %v1481 = vmul.f32 %v1217, %v1409
        %v1482 = vmul.f32 %v1218, %v1411
        %v1483 = vmul.f32 %v1219, %v1411
        %v1484 = vmul.f32 %v1220, %v1413
        %v1485 = vmul.f32 %v1221, %v1413
        %v1486 = vmul.f32 %v1222, %v1415
        %v1487 = vmul.f32 %v1223, %v1415
        %v1488 = vmul.f32 %v1224, %v1417
        %v1489 = vmul.f32 %v1225, %v1417
        %v1490 = vmul.f32 %v1226, %v1419
        %v1491 = vmul.f32 %v1227, %v1419
        %v1492 = vmul.f32 %v1228, %v1421
        %v1493 = vmul.f32 %v1229, %v1421
        %v1494 = vmul.f32 %v1230, %v1423
        %v1495 = vmul.f32 %v1231, %v1423
        %v1496 = vmul.f32 %v1232, %v1425
        %v1497 = vmul.f32 %v1233, %v1425
        %v1498 = vmul.f32 %v1234, %v1427
        %v1499 = vmul.f32 %v1235, %v1427
        %v1500 = vmul.f32 %v1236, %v1429
        %v1501 = vmul.f32 %v1237, %v1429
        %v1502 = vmul.f32 %v1238, %v1431
        %v1503 = vmul.f32 %v1239, %v1431
        %v1504 = vmul.f32 %v1240, %v1433
        %v1505 = vmul.f32 %v1241, %v1433
        %v1506 = vmul.f32 %v1242, %v1435
        %v1507 = vmul.f32 %v1243, %v1435
        %v1508 = vmul.f32 %v1244, %v1437
        %v1509 = vmul.f32 %v1245, %v1437
        %v1510 = vmul.f32 %v1246, %v1439
        %v1511 = vmul.f32 %v1247, %v1439
        %v1512 = vmul.f32 %v1248, %v1441
        %v1513 = vmul.f32 %v1249, %v1441
        %v1514 = vmul.f32 %v1250, %v1443
        %v1515 = vmul.f32 %v1251, %v1443
        %v1516 = vmul.f32 %v1252, %v1445
        %v1517 = vmul.f32 %v1253, %v1445
        %v1518 = vmul.f32 %v1254, %v1447
        %v1519 = vmul.f32 %v1255, %v1447
        %v1520 = vmul.f32 %v1256, %v1449
        %v1521 = vmul.f32 %v1257, %v1449
        %v1522 = vmul.f32 %v1258, %v1451
        %v1523 = vmul.f32 %v1259, %v1451
        %v1524 = vmul.f32 %v1260, %v1453
        %v1525 = vmul.f32 %v1261, %v1453
        %s1526 = scalar_lea.vmem %s353, 24 [#allocation2]
        %v1527 = vld [vmem:[%s1526] sm:$0x1]
        %v1528 = vld [vmem:[%s1526 + $0x1] sm:$0x1]
        %v1529 = vld [vmem:[%s1526 + $0x2] sm:$0x1]
        %v1530 = vld [vmem:[%s1526 + $0x3] sm:$0x1]
        %v1531 = vld [vmem:[%s1526 + $0x4] sm:$0x1]
        %v1532 = vld [vmem:[%s1526 + $0x5] sm:$0x1]
        %v1533 = vld [vmem:[%s1526 + $0x6] sm:$0x1]
        %v1534 = vld [vmem:[%s1526 + $0x7] sm:$0x1]
        %v1535 = vld [vmem:[%s1526 + $0x8] sm:$0x1]
        %v1536 = vld [vmem:[%s1526 + $0x9] sm:$0x1]
        %v1537 = vld [vmem:[%s1526 + $0xa] sm:$0x1]
        %v1538 = vld [vmem:[%s1526 + $0xb] sm:$0x1]
        %v1539 = vld [vmem:[%s1526 + $0xc] sm:$0x1]
        %v1540 = vld [vmem:[%s1526 + $0xd] sm:$0x1]
        %v1541 = vld [vmem:[%s1526 + $0xe] sm:$0x1]
        %v1542 = vld [vmem:[%s1526 + $0xf] sm:$0x1]
        %v1543 = vld [vmem:[%s1526 + $0x10] sm:$0x1]
        %v1544 = vld [vmem:[%s1526 + $0x11] sm:$0x1]
        %v1545 = vld [vmem:[%s1526 + $0x12] sm:$0x1]
        %v1546 = vld [vmem:[%s1526 + $0x13] sm:$0x1]
        %v1547 = vld [vmem:[%s1526 + $0x14] sm:$0x1]
        %v1548 = vld [vmem:[%s1526 + $0x15] sm:$0x1]
        %v1549 = vld [vmem:[%s1526 + $0x16] sm:$0x1]
        %v1550 = vld [vmem:[%s1526 + $0x17] sm:$0x1]
        %v1575 = vlaneseq
        %v1576 = vshrl.u32 %v1575, 7
        %v1577 = vsub.s32 0, %v1576
        %v1578 = vrot.slane %v1527, %v1577
        %v1579 = vlaneseq
        %v1580 = vshrl.u32 %v1579, 7
        %v1581 = vsub.s32 0, %v1580
        %v1582 = vrot.slane %v1528, %v1581
        %v1583 = vlaneseq
        %v1584 = vshrl.u32 %v1583, 7
        %v1585 = vsub.s32 0, %v1584
        %v1586 = vrot.slane %v1529, %v1585
        %v1587 = vlaneseq
        %v1588 = vshrl.u32 %v1587, 7
        %v1589 = vsub.s32 0, %v1588
        %v1590 = vrot.slane %v1530, %v1589
        %v1591 = vlaneseq
        %v1592 = vshrl.u32 %v1591, 7
        %v1593 = vsub.s32 0, %v1592
        %v1594 = vrot.slane %v1531, %v1593
        %v1595 = vlaneseq
        %v1596 = vshrl.u32 %v1595, 7
        %v1597 = vsub.s32 0, %v1596
        %v1598 = vrot.slane %v1532, %v1597
        %v1599 = vlaneseq
        %v1600 = vshrl.u32 %v1599, 7
        %v1601 = vsub.s32 0, %v1600
        %v1602 = vrot.slane %v1533, %v1601
        %v1603 = vlaneseq
        %v1604 = vshrl.u32 %v1603, 7
        %v1605 = vsub.s32 0, %v1604
        %v1606 = vrot.slane %v1534, %v1605
        %v1607 = vlaneseq
        %v1608 = vshrl.u32 %v1607, 7
        %v1609 = vsub.s32 0, %v1608
        %v1610 = vrot.slane %v1535, %v1609
        %v1611 = vlaneseq
        %v1612 = vshrl.u32 %v1611, 7
        %v1613 = vsub.s32 0, %v1612
        %v1614 = vrot.slane %v1536, %v1613
        %v1615 = vlaneseq
        %v1616 = vshrl.u32 %v1615, 7
        %v1617 = vsub.s32 0, %v1616
        %v1618 = vrot.slane %v1537, %v1617
        %v1619 = vlaneseq
        %v1620 = vshrl.u32 %v1619, 7
        %v1621 = vsub.s32 0, %v1620
        %v1622 = vrot.slane %v1538, %v1621
        %v1623 = vlaneseq
        %v1624 = vshrl.u32 %v1623, 7
        %v1625 = vsub.s32 0, %v1624
        %v1626 = vrot.slane %v1539, %v1625
        %v1627 = vlaneseq
        %v1628 = vshrl.u32 %v1627, 7
        %v1629 = vsub.s32 0, %v1628
        %v1630 = vrot.slane %v1540, %v1629
        %v1631 = vlaneseq
        %v1632 = vshrl.u32 %v1631, 7
        %v1633 = vsub.s32 0, %v1632
        %v1634 = vrot.slane %v1541, %v1633
        %v1635 = vlaneseq
        %v1636 = vshrl.u32 %v1635, 7
        %v1637 = vsub.s32 0, %v1636
        %v1638 = vrot.slane %v1542, %v1637
        %v1639 = vlaneseq
        %v1640 = vshrl.u32 %v1639, 7
        %v1641 = vsub.s32 0, %v1640
        %v1642 = vrot.slane %v1543, %v1641
        %v1643 = vlaneseq
        %v1644 = vshrl.u32 %v1643, 7
        %v1645 = vsub.s32 0, %v1644
        %v1646 = vrot.slane %v1544, %v1645
        %v1647 = vlaneseq
        %v1648 = vshrl.u32 %v1647, 7
        %v1649 = vsub.s32 0, %v1648
        %v1650 = vrot.slane %v1545, %v1649
        %v1651 = vlaneseq
        %v1652 = vshrl.u32 %v1651, 7
        %v1653 = vsub.s32 0, %v1652
        %v1654 = vrot.slane %v1546, %v1653
        %v1655 = vlaneseq
        %v1656 = vshrl.u32 %v1655, 7
        %v1657 = vsub.s32 0, %v1656
        %v1658 = vrot.slane %v1547, %v1657
        %v1659 = vlaneseq
        %v1660 = vshrl.u32 %v1659, 7
        %v1661 = vsub.s32 0, %v1660
        %v1662 = vrot.slane %v1548, %v1661
        %v1663 = vlaneseq
        %v1664 = vshrl.u32 %v1663, 7
        %v1665 = vsub.s32 0, %v1664
        %v1666 = vrot.slane %v1549, %v1665
        %v1667 = vlaneseq
        %v1668 = vshrl.u32 %v1667, 7
        %v1669 = vsub.s32 0, %v1668
        %v1670 = vrot.slane %v1550, %v1669
        %v1695 = vmul.f32 %v925, %v1578
        %v1696 = vmul.f32 %v926, %v1578
        %v1697 = vmul.f32 %v927, %v1582
        %v1698 = vmul.f32 %v928, %v1582
        %v1699 = vmul.f32 %v929, %v1586
        %v1700 = vmul.f32 %v930, %v1586
        %v1701 = vmul.f32 %v931, %v1590
        %v1702 = vmul.f32 %v932, %v1590
        %v1703 = vmul.f32 %v933, %v1594
        %v1704 = vmul.f32 %v934, %v1594
        %v1705 = vmul.f32 %v935, %v1598
        %v1706 = vmul.f32 %v936, %v1598
        %v1707 = vmul.f32 %v937, %v1602
        %v1708 = vmul.f32 %v938, %v1602
        %v1709 = vmul.f32 %v939, %v1606
        %v1710 = vmul.f32 %v940, %v1606
        %v1711 = vmul.f32 %v941, %v1610
        %v1712 = vmul.f32 %v942, %v1610
        %v1713 = vmul.f32 %v943, %v1614
        %v1714 = vmul.f32 %v944, %v1614
        %v1715 = vmul.f32 %v945, %v1618
        %v1716 = vmul.f32 %v946, %v1618
        %v1717 = vmul.f32 %v947, %v1622
        %v1718 = vmul.f32 %v948, %v1622
        %v1719 = vmul.f32 %v949, %v1626
        %v1720 = vmul.f32 %v950, %v1626
        %v1721 = vmul.f32 %v951, %v1630
        %v1722 = vmul.f32 %v952, %v1630
        %v1723 = vmul.f32 %v953, %v1634
        %v1724 = vmul.f32 %v954, %v1634
        %v1725 = vmul.f32 %v955, %v1638
        %v1726 = vmul.f32 %v956, %v1638
        %v1727 = vmul.f32 %v957, %v1642
        %v1728 = vmul.f32 %v958, %v1642
        %v1729 = vmul.f32 %v959, %v1646
        %v1730 = vmul.f32 %v960, %v1646
        %v1731 = vmul.f32 %v961, %v1650
        %v1732 = vmul.f32 %v962, %v1650
        %v1733 = vmul.f32 %v963, %v1654
        %v1734 = vmul.f32 %v964, %v1654
        %v1735 = vmul.f32 %v965, %v1658
        %v1736 = vmul.f32 %v966, %v1658
        %v1737 = vmul.f32 %v967, %v1662
        %v1738 = vmul.f32 %v968, %v1662
        %v1739 = vmul.f32 %v969, %v1666
        %v1740 = vmul.f32 %v970, %v1666
        %v1741 = vmul.f32 %v971, %v1670
        %v1742 = vmul.f32 %v972, %v1670
        %1791 = vrot.lane.b32.xlu0 %v1695, 15
        %v1792 = vpop.permute.xlu0 %1791
        %1793 = vrot.lane.b32.xlu0 %v1696, 15
        %v1794 = vpop.permute.xlu0 %1793
        %1795 = vrot.lane.b32.xlu0 %v1697, 15
        %v1796 = vpop.permute.xlu0 %1795
        %1797 = vrot.lane.b32.xlu0 %v1698, 15
        %v1798 = vpop.permute.xlu0 %1797
        %1799 = vrot.lane.b32.xlu0 %v1699, 15
        %v1800 = vpop.permute.xlu0 %1799
        %1801 = vrot.lane.b32.xlu0 %v1700, 15
        %v1802 = vpop.permute.xlu0 %1801
        %1803 = vrot.lane.b32.xlu0 %v1701, 15
        %v1804 = vpop.permute.xlu0 %1803
        %1805 = vrot.lane.b32.xlu0 %v1702, 15
        %v1806 = vpop.permute.xlu0 %1805
        %1807 = vrot.lane.b32.xlu0 %v1703, 15
        %v1808 = vpop.permute.xlu0 %1807
        %1809 = vrot.lane.b32.xlu0 %v1704, 15
        %v1810 = vpop.permute.xlu0 %1809
        %1811 = vrot.lane.b32.xlu0 %v1705, 15
        %v1812 = vpop.permute.xlu0 %1811
        %1813 = vrot.lane.b32.xlu0 %v1706, 15
        %v1814 = vpop.permute.xlu0 %1813
        %1815 = vrot.lane.b32.xlu0 %v1707, 15
        %v1816 = vpop.permute.xlu0 %1815
        %1817 = vrot.lane.b32.xlu0 %v1708, 15
        %v1818 = vpop.permute.xlu0 %1817
        %1819 = vrot.lane.b32.xlu0 %v1709, 15
        %v1820 = vpop.permute.xlu0 %1819
        %1821 = vrot.lane.b32.xlu0 %v1710, 15
        %v1822 = vpop.permute.xlu0 %1821
        %1823 = vrot.lane.b32.xlu0 %v1711, 15
        %v1824 = vpop.permute.xlu0 %1823
        %1825 = vrot.lane.b32.xlu0 %v1712, 15
        %v1826 = vpop.permute.xlu0 %1825
        %1827 = vrot.lane.b32.xlu0 %v1713, 15
        %v1828 = vpop.permute.xlu0 %1827
        %1829 = vrot.lane.b32.xlu0 %v1714, 15
        %v1830 = vpop.permute.xlu0 %1829
        %1831 = vrot.lane.b32.xlu0 %v1715, 15
        %v1832 = vpop.permute.xlu0 %1831
        %1833 = vrot.lane.b32.xlu0 %v1716, 15
        %v1834 = vpop.permute.xlu0 %1833
        %1835 = vrot.lane.b32.xlu0 %v1717, 15
        %v1836 = vpop.permute.xlu0 %1835
        %1837 = vrot.lane.b32.xlu0 %v1718, 15
        %v1838 = vpop.permute.xlu0 %1837
        %1839 = vrot.lane.b32.xlu0 %v1719, 15
        %v1840 = vpop.permute.xlu0 %1839
        %1841 = vrot.lane.b32.xlu0 %v1720, 15
        %v1842 = vpop.permute.xlu0 %1841
        %1843 = vrot.lane.b32.xlu0 %v1721, 15
        %v1844 = vpop.permute.xlu0 %1843
        %1845 = vrot.lane.b32.xlu0 %v1722, 15
        %v1846 = vpop.permute.xlu0 %1845
        %1847 = vrot.lane.b32.xlu0 %v1723, 15
        %v1848 = vpop.permute.xlu0 %1847
        %1849 = vrot.lane.b32.xlu0 %v1724, 15
        %v1850 = vpop.permute.xlu0 %1849
        %1851 = vrot.lane.b32.xlu0 %v1725, 15
        %v1852 = vpop.permute.xlu0 %1851
        %1853 = vrot.lane.b32.xlu0 %v1726, 15
        %v1854 = vpop.permute.xlu0 %1853
        %1855 = vrot.lane.b32.xlu0 %v1727, 15
        %v1856 = vpop.permute.xlu0 %1855
        %1857 = vrot.lane.b32.xlu0 %v1728, 15
        %v1858 = vpop.permute.xlu0 %1857
        %1859 = vrot.lane.b32.xlu0 %v1729, 15
        %v1860 = vpop.permute.xlu0 %1859
        %1861 = vrot.lane.b32.xlu0 %v1730, 15
        %v1862 = vpop.permute.xlu0 %1861
        %1863 = vrot.lane.b32.xlu0 %v1731, 15
        %v1864 = vpop.permute.xlu0 %1863
        %1865 = vrot.lane.b32.xlu0 %v1732, 15
        %v1866 = vpop.permute.xlu0 %1865
        %1867 = vrot.lane.b32.xlu0 %v1733, 15
        %v1868 = vpop.permute.xlu0 %1867
        %1869 = vrot.lane.b32.xlu0 %v1734, 15
        %v1870 = vpop.permute.xlu0 %1869
        %1871 = vrot.lane.b32.xlu0 %v1735, 15
        %v1872 = vpop.permute.xlu0 %1871
        %1873 = vrot.lane.b32.xlu0 %v1736, 15
        %v1874 = vpop.permute.xlu0 %1873
        %1875 = vrot.lane.b32.xlu0 %v1737, 15
        %v1876 = vpop.permute.xlu0 %1875
        %1877 = vrot.lane.b32.xlu0 %v1738, 15
        %v1878 = vpop.permute.xlu0 %1877
        %1879 = vrot.lane.b32.xlu0 %v1739, 15
        %v1880 = vpop.permute.xlu0 %1879
        %1881 = vrot.lane.b32.xlu0 %v1740, 15
        %v1882 = vpop.permute.xlu0 %1881
        %1883 = vrot.lane.b32.xlu0 %v1741, 15
        %v1884 = vpop.permute.xlu0 %1883
        %1885 = vrot.lane.b32.xlu0 %v1742, 15
        %v1886 = vpop.permute.xlu0 %1885
        %v1935 = vadd.f32 %v1478, %v1792
        %v1936 = vadd.f32 %v1479, %v1794
        %v1937 = vadd.f32 %v1480, %v1796
        %v1938 = vadd.f32 %v1481, %v1798
        %v1939 = vadd.f32 %v1482, %v1800
        %v1940 = vadd.f32 %v1483, %v1802
        %v1941 = vadd.f32 %v1484, %v1804
        %v1942 = vadd.f32 %v1485, %v1806
        %v1943 = vadd.f32 %v1486, %v1808
        %v1944 = vadd.f32 %v1487, %v1810
        %v1945 = vadd.f32 %v1488, %v1812
        %v1946 = vadd.f32 %v1489, %v1814
        %v1947 = vadd.f32 %v1490, %v1816
        %v1948 = vadd.f32 %v1491, %v1818
        %v1949 = vadd.f32 %v1492, %v1820
        %v1950 = vadd.f32 %v1493, %v1822
        %v1951 = vadd.f32 %v1494, %v1824
        %v1952 = vadd.f32 %v1495, %v1826
        %v1953 = vadd.f32 %v1496, %v1828
        %v1954 = vadd.f32 %v1497, %v1830
        %v1955 = vadd.f32 %v1498, %v1832
        %v1956 = vadd.f32 %v1499, %v1834
        %v1957 = vadd.f32 %v1500, %v1836
        %v1958 = vadd.f32 %v1501, %v1838
        %v1959 = vadd.f32 %v1502, %v1840
        %v1960 = vadd.f32 %v1503, %v1842
        %v1961 = vadd.f32 %v1504, %v1844
        %v1962 = vadd.f32 %v1505, %v1846
        %v1963 = vadd.f32 %v1506, %v1848
        %v1964 = vadd.f32 %v1507, %v1850
        %v1965 = vadd.f32 %v1508, %v1852
        %v1966 = vadd.f32 %v1509, %v1854
        %v1967 = vadd.f32 %v1510, %v1856
        %v1968 = vadd.f32 %v1511, %v1858
        %v1969 = vadd.f32 %v1512, %v1860
        %v1970 = vadd.f32 %v1513, %v1862
        %v1971 = vadd.f32 %v1514, %v1864
        %v1972 = vadd.f32 %v1515, %v1866
        %v1973 = vadd.f32 %v1516, %v1868
        %v1974 = vadd.f32 %v1517, %v1870
        %v1975 = vadd.f32 %v1518, %v1872
        %v1976 = vadd.f32 %v1519, %v1874
        %v1977 = vadd.f32 %v1520, %v1876
        %v1978 = vadd.f32 %v1521, %v1878
        %v1979 = vadd.f32 %v1522, %v1880
        %v1980 = vadd.f32 %v1523, %v1882
        %v1981 = vadd.f32 %v1524, %v1884
        %v1982 = vadd.f32 %v1525, %v1886
        %s1983 = scalar_lea.vmem %s353, 48 [#allocation2]
        %v1984 = vld [vmem:[%s1983] sm:$0x1]
        %v1985 = vld [vmem:[%s1983 + $0x1] sm:$0x1]
        %v1986 = vld [vmem:[%s1983 + $0x2] sm:$0x1]
        %v1987 = vld [vmem:[%s1983 + $0x3] sm:$0x1]
        %v1988 = vld [vmem:[%s1983 + $0x4] sm:$0x1]
        %v1989 = vld [vmem:[%s1983 + $0x5] sm:$0x1]
        %v1990 = vld [vmem:[%s1983 + $0x6] sm:$0x1]
        %v1991 = vld [vmem:[%s1983 + $0x7] sm:$0x1]
        %v1992 = vld [vmem:[%s1983 + $0x8] sm:$0x1]
        %v1993 = vld [vmem:[%s1983 + $0x9] sm:$0x1]
        %v1994 = vld [vmem:[%s1983 + $0xa] sm:$0x1]
        %v1995 = vld [vmem:[%s1983 + $0xb] sm:$0x1]
        %v1996 = vld [vmem:[%s1983 + $0xc] sm:$0x1]
        %v1997 = vld [vmem:[%s1983 + $0xd] sm:$0x1]
        %v1998 = vld [vmem:[%s1983 + $0xe] sm:$0x1]
        %v1999 = vld [vmem:[%s1983 + $0xf] sm:$0x1]
        %v2000 = vld [vmem:[%s1983 + $0x10] sm:$0x1]
        %v2001 = vld [vmem:[%s1983 + $0x11] sm:$0x1]
        %v2002 = vld [vmem:[%s1983 + $0x12] sm:$0x1]
        %v2003 = vld [vmem:[%s1983 + $0x13] sm:$0x1]
        %v2004 = vld [vmem:[%s1983 + $0x14] sm:$0x1]
        %v2005 = vld [vmem:[%s1983 + $0x15] sm:$0x1]
        %v2006 = vld [vmem:[%s1983 + $0x16] sm:$0x1]
        %v2007 = vld [vmem:[%s1983 + $0x17] sm:$0x1]
        %v2032 = vlaneseq
        %v2033 = vshrl.u32 %v2032, 7
        %v2034 = vsub.s32 0, %v2033
        %v2035 = vrot.slane %v1984, %v2034
        %v2036 = vlaneseq
        %v2037 = vshrl.u32 %v2036, 7
        %v2038 = vsub.s32 0, %v2037
        %v2039 = vrot.slane %v1985, %v2038
        %v2040 = vlaneseq
        %v2041 = vshrl.u32 %v2040, 7
        %v2042 = vsub.s32 0, %v2041
        %v2043 = vrot.slane %v1986, %v2042
        %v2044 = vlaneseq
        %v2045 = vshrl.u32 %v2044, 7
        %v2046 = vsub.s32 0, %v2045
        %v2047 = vrot.slane %v1987, %v2046
        %v2048 = vlaneseq
        %v2049 = vshrl.u32 %v2048, 7
        %v2050 = vsub.s32 0, %v2049
        %v2051 = vrot.slane %v1988, %v2050
        %v2052 = vlaneseq
        %v2053 = vshrl.u32 %v2052, 7
        %v2054 = vsub.s32 0, %v2053
        %v2055 = vrot.slane %v1989, %v2054
        %v2056 = vlaneseq
        %v2057 = vshrl.u32 %v2056, 7
        %v2058 = vsub.s32 0, %v2057
        %v2059 = vrot.slane %v1990, %v2058
        %v2060 = vlaneseq
        %v2061 = vshrl.u32 %v2060, 7
        %v2062 = vsub.s32 0, %v2061
        %v2063 = vrot.slane %v1991, %v2062
        %v2064 = vlaneseq
        %v2065 = vshrl.u32 %v2064, 7
        %v2066 = vsub.s32 0, %v2065
        %v2067 = vrot.slane %v1992, %v2066
        %v2068 = vlaneseq
        %v2069 = vshrl.u32 %v2068, 7
        %v2070 = vsub.s32 0, %v2069
        %v2071 = vrot.slane %v1993, %v2070
        %v2072 = vlaneseq
        %v2073 = vshrl.u32 %v2072, 7
        %v2074 = vsub.s32 0, %v2073
        %v2075 = vrot.slane %v1994, %v2074
        %v2076 = vlaneseq
        %v2077 = vshrl.u32 %v2076, 7
        %v2078 = vsub.s32 0, %v2077
        %v2079 = vrot.slane %v1995, %v2078
        %v2080 = vlaneseq
        %v2081 = vshrl.u32 %v2080, 7
        %v2082 = vsub.s32 0, %v2081
        %v2083 = vrot.slane %v1996, %v2082
        %v2084 = vlaneseq
        %v2085 = vshrl.u32 %v2084, 7
        %v2086 = vsub.s32 0, %v2085
        %v2087 = vrot.slane %v1997, %v2086
        %v2088 = vlaneseq
        %v2089 = vshrl.u32 %v2088, 7
        %v2090 = vsub.s32 0, %v2089
        %v2091 = vrot.slane %v1998, %v2090
        %v2092 = vlaneseq
        %v2093 = vshrl.u32 %v2092, 7
        %v2094 = vsub.s32 0, %v2093
        %v2095 = vrot.slane %v1999, %v2094
        %v2096 = vlaneseq
        %v2097 = vshrl.u32 %v2096, 7
        %v2098 = vsub.s32 0, %v2097
        %v2099 = vrot.slane %v2000, %v2098
        %v2100 = vlaneseq
        %v2101 = vshrl.u32 %v2100, 7
        %v2102 = vsub.s32 0, %v2101
        %v2103 = vrot.slane %v2001, %v2102
        %v2104 = vlaneseq
        %v2105 = vshrl.u32 %v2104, 7
        %v2106 = vsub.s32 0, %v2105
        %v2107 = vrot.slane %v2002, %v2106
        %v2108 = vlaneseq
        %v2109 = vshrl.u32 %v2108, 7
        %v2110 = vsub.s32 0, %v2109
        %v2111 = vrot.slane %v2003, %v2110
        %v2112 = vlaneseq
        %v2113 = vshrl.u32 %v2112, 7
        %v2114 = vsub.s32 0, %v2113
        %v2115 = vrot.slane %v2004, %v2114
        %v2116 = vlaneseq
        %v2117 = vshrl.u32 %v2116, 7
        %v2118 = vsub.s32 0, %v2117
        %v2119 = vrot.slane %v2005, %v2118
        %v2120 = vlaneseq
        %v2121 = vshrl.u32 %v2120, 7
        %v2122 = vsub.s32 0, %v2121
        %v2123 = vrot.slane %v2006, %v2122
        %v2124 = vlaneseq
        %v2125 = vshrl.u32 %v2124, 7
        %v2126 = vsub.s32 0, %v2125
        %v2127 = vrot.slane %v2007, %v2126
        %2128 = vrot.lane.b32.xlu0 %v2035, 1
        %v2129 = vpop.permute.xlu0 %2128
        %2130 = vrot.lane.b32.xlu0 %v2039, 1
        %v2131 = vpop.permute.xlu0 %2130
        %2132 = vrot.lane.b32.xlu0 %v2043, 1
        %v2133 = vpop.permute.xlu0 %2132
        %2134 = vrot.lane.b32.xlu0 %v2047, 1
        %v2135 = vpop.permute.xlu0 %2134
        %2136 = vrot.lane.b32.xlu0 %v2051, 1
        %v2137 = vpop.permute.xlu0 %2136
        %2138 = vrot.lane.b32.xlu0 %v2055, 1
        %v2139 = vpop.permute.xlu0 %2138
        %2140 = vrot.lane.b32.xlu0 %v2059, 1
        %v2141 = vpop.permute.xlu0 %2140
        %2142 = vrot.lane.b32.xlu0 %v2063, 1
        %v2143 = vpop.permute.xlu0 %2142
        %2144 = vrot.lane.b32.xlu0 %v2067, 1
        %v2145 = vpop.permute.xlu0 %2144
        %2146 = vrot.lane.b32.xlu0 %v2071, 1
        %v2147 = vpop.permute.xlu0 %2146
        %2148 = vrot.lane.b32.xlu0 %v2075, 1
        %v2149 = vpop.permute.xlu0 %2148
        %2150 = vrot.lane.b32.xlu0 %v2079, 1
        %v2151 = vpop.permute.xlu0 %2150
        %2152 = vrot.lane.b32.xlu0 %v2083, 1
        %v2153 = vpop.permute.xlu0 %2152
        %2154 = vrot.lane.b32.xlu0 %v2087, 1
        %v2155 = vpop.permute.xlu0 %2154
        %2156 = vrot.lane.b32.xlu0 %v2091, 1
        %v2157 = vpop.permute.xlu0 %2156
        %2158 = vrot.lane.b32.xlu0 %v2095, 1
        %v2159 = vpop.permute.xlu0 %2158
        %2160 = vrot.lane.b32.xlu0 %v2099, 1
        %v2161 = vpop.permute.xlu0 %2160
        %2162 = vrot.lane.b32.xlu0 %v2103, 1
        %v2163 = vpop.permute.xlu0 %2162
        %2164 = vrot.lane.b32.xlu0 %v2107, 1
        %v2165 = vpop.permute.xlu0 %2164
        %2166 = vrot.lane.b32.xlu0 %v2111, 1
        %v2167 = vpop.permute.xlu0 %2166
        %2168 = vrot.lane.b32.xlu0 %v2115, 1
        %v2169 = vpop.permute.xlu0 %2168
        %2170 = vrot.lane.b32.xlu0 %v2119, 1
        %v2171 = vpop.permute.xlu0 %2170
        %2172 = vrot.lane.b32.xlu0 %v2123, 1
        %v2173 = vpop.permute.xlu0 %2172
        %2174 = vrot.lane.b32.xlu0 %v2127, 1
        %v2175 = vpop.permute.xlu0 %2174
        %v2200 = vmul.f32 %v1214, %v2129
        %v2201 = vmul.f32 %v1215, %v2129
        %v2202 = vmul.f32 %v1216, %v2131
        %v2203 = vmul.f32 %v1217, %v2131
        %v2204 = vmul.f32 %v1218, %v2133
        %v2205 = vmul.f32 %v1219, %v2133
        %v2206 = vmul.f32 %v1220, %v2135
        %v2207 = vmul.f32 %v1221, %v2135
        %v2208 = vmul.f32 %v1222, %v2137
        %v2209 = vmul.f32 %v1223, %v2137
        %v2210 = vmul.f32 %v1224, %v2139
        %v2211 = vmul.f32 %v1225, %v2139
        %v2212 = vmul.f32 %v1226, %v2141
        %v2213 = vmul.f32 %v1227, %v2141
        %v2214 = vmul.f32 %v1228, %v2143
        %v2215 = vmul.f32 %v1229, %v2143
        %v2216 = vmul.f32 %v1230, %v2145
        %v2217 = vmul.f32 %v1231, %v2145
        %v2218 = vmul.f32 %v1232, %v2147
        %v2219 = vmul.f32 %v1233, %v2147
        %v2220 = vmul.f32 %v1234, %v2149
        %v2221 = vmul.f32 %v1235, %v2149
        %v2222 = vmul.f32 %v1236, %v2151
        %v2223 = vmul.f32 %v1237, %v2151
        %v2224 = vmul.f32 %v1238, %v2153
        %v2225 = vmul.f32 %v1239, %v2153
        %v2226 = vmul.f32 %v1240, %v2155
        %v2227 = vmul.f32 %v1241, %v2155
        %v2228 = vmul.f32 %v1242, %v2157
        %v2229 = vmul.f32 %v1243, %v2157
        %v2230 = vmul.f32 %v1244, %v2159
        %v2231 = vmul.f32 %v1245, %v2159
        %v2232 = vmul.f32 %v1246, %v2161
        %v2233 = vmul.f32 %v1247, %v2161
        %v2234 = vmul.f32 %v1248, %v2163
        %v2235 = vmul.f32 %v1249, %v2163
        %v2236 = vmul.f32 %v1250, %v2165
        %v2237 = vmul.f32 %v1251, %v2165
        %v2238 = vmul.f32 %v1252, %v2167
        %v2239 = vmul.f32 %v1253, %v2167
        %v2240 = vmul.f32 %v1254, %v2169
        %v2241 = vmul.f32 %v1255, %v2169
        %v2242 = vmul.f32 %v1256, %v2171
        %v2243 = vmul.f32 %v1257, %v2171
        %v2244 = vmul.f32 %v1258, %v2173
        %v2245 = vmul.f32 %v1259, %v2173
        %v2246 = vmul.f32 %v1260, %v2175
        %v2247 = vmul.f32 %v1261, %v2175
        %2296 = vrot.lane.b32.xlu0 %v2200, 14
        %v2297 = vpop.permute.xlu0 %2296
        %2298 = vrot.lane.b32.xlu0 %v2201, 14
        %v2299 = vpop.permute.xlu0 %2298
        %2300 = vrot.lane.b32.xlu0 %v2202, 14
        %v2301 = vpop.permute.xlu0 %2300
        %2302 = vrot.lane.b32.xlu0 %v2203, 14
        %v2303 = vpop.permute.xlu0 %2302
        %2304 = vrot.lane.b32.xlu0 %v2204, 14
        %v2305 = vpop.permute.xlu0 %2304
        %2306 = vrot.lane.b32.xlu0 %v2205, 14
        %v2307 = vpop.permute.xlu0 %2306
        %2308 = vrot.lane.b32.xlu0 %v2206, 14
        %v2309 = vpop.permute.xlu0 %2308
        %2310 = vrot.lane.b32.xlu0 %v2207, 14
        %v2311 = vpop.permute.xlu0 %2310
        %2312 = vrot.lane.b32.xlu0 %v2208, 14
        %v2313 = vpop.permute.xlu0 %2312
        %2314 = vrot.lane.b32.xlu0 %v2209, 14
        %v2315 = vpop.permute.xlu0 %2314
        %2316 = vrot.lane.b32.xlu0 %v2210, 14
        %v2317 = vpop.permute.xlu0 %2316
        %2318 = vrot.lane.b32.xlu0 %v2211, 14
        %v2319 = vpop.permute.xlu0 %2318
        %2320 = vrot.lane.b32.xlu0 %v2212, 14
        %v2321 = vpop.permute.xlu0 %2320
        %2322 = vrot.lane.b32.xlu0 %v2213, 14
        %v2323 = vpop.permute.xlu0 %2322
        %2324 = vrot.lane.b32.xlu0 %v2214, 14
        %v2325 = vpop.permute.xlu0 %2324
        %2326 = vrot.lane.b32.xlu0 %v2215, 14
        %v2327 = vpop.permute.xlu0 %2326
        %2328 = vrot.lane.b32.xlu0 %v2216, 14
        %v2329 = vpop.permute.xlu0 %2328
        %2330 = vrot.lane.b32.xlu0 %v2217, 14
        %v2331 = vpop.permute.xlu0 %2330
        %2332 = vrot.lane.b32.xlu0 %v2218, 14
        %v2333 = vpop.permute.xlu0 %2332
        %2334 = vrot.lane.b32.xlu0 %v2219, 14
        %v2335 = vpop.permute.xlu0 %2334
        %2336 = vrot.lane.b32.xlu0 %v2220, 14
        %v2337 = vpop.permute.xlu0 %2336
        %2338 = vrot.lane.b32.xlu0 %v2221, 14
        %v2339 = vpop.permute.xlu0 %2338
        %2340 = vrot.lane.b32.xlu0 %v2222, 14
        %v2341 = vpop.permute.xlu0 %2340
        %2342 = vrot.lane.b32.xlu0 %v2223, 14
        %v2343 = vpop.permute.xlu0 %2342
        %2344 = vrot.lane.b32.xlu0 %v2224, 14
        %v2345 = vpop.permute.xlu0 %2344
        %2346 = vrot.lane.b32.xlu0 %v2225, 14
        %v2347 = vpop.permute.xlu0 %2346
        %2348 = vrot.lane.b32.xlu0 %v2226, 14
        %v2349 = vpop.permute.xlu0 %2348
        %2350 = vrot.lane.b32.xlu0 %v2227, 14
        %v2351 = vpop.permute.xlu0 %2350
        %2352 = vrot.lane.b32.xlu0 %v2228, 14
        %v2353 = vpop.permute.xlu0 %2352
        %2354 = vrot.lane.b32.xlu0 %v2229, 14
        %v2355 = vpop.permute.xlu0 %2354
        %2356 = vrot.lane.b32.xlu0 %v2230, 14
        %v2357 = vpop.permute.xlu0 %2356
        %2358 = vrot.lane.b32.xlu0 %v2231, 14
        %v2359 = vpop.permute.xlu0 %2358
        %2360 = vrot.lane.b32.xlu0 %v2232, 14
        %v2361 = vpop.permute.xlu0 %2360
        %2362 = vrot.lane.b32.xlu0 %v2233, 14
        %v2363 = vpop.permute.xlu0 %2362
        %2364 = vrot.lane.b32.xlu0 %v2234, 14
        %v2365 = vpop.permute.xlu0 %2364
        %2366 = vrot.lane.b32.xlu0 %v2235, 14
        %v2367 = vpop.permute.xlu0 %2366
        %2368 = vrot.lane.b32.xlu0 %v2236, 14
        %v2369 = vpop.permute.xlu0 %2368
        %2370 = vrot.lane.b32.xlu0 %v2237, 14
        %v2371 = vpop.permute.xlu0 %2370
        %2372 = vrot.lane.b32.xlu0 %v2238, 14
        %v2373 = vpop.permute.xlu0 %2372
        %2374 = vrot.lane.b32.xlu0 %v2239, 14
        %v2375 = vpop.permute.xlu0 %2374
        %2376 = vrot.lane.b32.xlu0 %v2240, 14
        %v2377 = vpop.permute.xlu0 %2376
        %2378 = vrot.lane.b32.xlu0 %v2241, 14
        %v2379 = vpop.permute.xlu0 %2378
        %2380 = vrot.lane.b32.xlu0 %v2242, 14
        %v2381 = vpop.permute.xlu0 %2380
        %2382 = vrot.lane.b32.xlu0 %v2243, 14
        %v2383 = vpop.permute.xlu0 %2382
        %2384 = vrot.lane.b32.xlu0 %v2244, 14
        %v2385 = vpop.permute.xlu0 %2384
        %2386 = vrot.lane.b32.xlu0 %v2245, 14
        %v2387 = vpop.permute.xlu0 %2386
        %2388 = vrot.lane.b32.xlu0 %v2246, 14
        %v2389 = vpop.permute.xlu0 %2388
        %2390 = vrot.lane.b32.xlu0 %v2247, 14
        %v2391 = vpop.permute.xlu0 %2390
        %v2440 = vadd.f32 %v1935, %v2297
        %v2441 = vadd.f32 %v1936, %v2299
        %v2442 = vadd.f32 %v1937, %v2301
        %v2443 = vadd.f32 %v1938, %v2303
        %v2444 = vadd.f32 %v1939, %v2305
        %v2445 = vadd.f32 %v1940, %v2307
        %v2446 = vadd.f32 %v1941, %v2309
        %v2447 = vadd.f32 %v1942, %v2311
        %v2448 = vadd.f32 %v1943, %v2313
        %v2449 = vadd.f32 %v1944, %v2315
        %v2450 = vadd.f32 %v1945, %v2317
        %v2451 = vadd.f32 %v1946, %v2319
        %v2452 = vadd.f32 %v1947, %v2321
        %v2453 = vadd.f32 %v1948, %v2323
        %v2454 = vadd.f32 %v1949, %v2325
        %v2455 = vadd.f32 %v1950, %v2327
        %v2456 = vadd.f32 %v1951, %v2329
        %v2457 = vadd.f32 %v1952, %v2331
        %v2458 = vadd.f32 %v1953, %v2333
        %v2459 = vadd.f32 %v1954, %v2335
        %v2460 = vadd.f32 %v1955, %v2337
        %v2461 = vadd.f32 %v1956, %v2339
        %v2462 = vadd.f32 %v1957, %v2341
        %v2463 = vadd.f32 %v1958, %v2343
        %v2464 = vadd.f32 %v1959, %v2345
        %v2465 = vadd.f32 %v1960, %v2347
        %v2466 = vadd.f32 %v1961, %v2349
        %v2467 = vadd.f32 %v1962, %v2351
        %v2468 = vadd.f32 %v1963, %v2353
        %v2469 = vadd.f32 %v1964, %v2355
        %v2470 = vadd.f32 %v1965, %v2357
        %v2471 = vadd.f32 %v1966, %v2359
        %v2472 = vadd.f32 %v1967, %v2361
        %v2473 = vadd.f32 %v1968, %v2363
        %v2474 = vadd.f32 %v1969, %v2365
        %v2475 = vadd.f32 %v1970, %v2367
        %v2476 = vadd.f32 %v1971, %v2369
        %v2477 = vadd.f32 %v1972, %v2371
        %v2478 = vadd.f32 %v1973, %v2373
        %v2479 = vadd.f32 %v1974, %v2375
        %v2480 = vadd.f32 %v1975, %v2377
        %v2481 = vadd.f32 %v1976, %v2379
        %v2482 = vadd.f32 %v1977, %v2381
        %v2483 = vadd.f32 %v1978, %v2383
        %v2484 = vadd.f32 %v1979, %v2385
        %v2485 = vadd.f32 %v1980, %v2387
        %v2486 = vadd.f32 %v1981, %v2389
        %v2487 = vadd.f32 %v1982, %v2391
        %s2488 = scalar_lea.vmem %s353, 72 [#allocation2]
        %v2489 = vld [vmem:[%s2488] sm:$0x1]
        %v2490 = vld [vmem:[%s2488 + $0x1] sm:$0x1]
        %v2491 = vld [vmem:[%s2488 + $0x2] sm:$0x1]
        %v2492 = vld [vmem:[%s2488 + $0x3] sm:$0x1]
        %v2493 = vld [vmem:[%s2488 + $0x4] sm:$0x1]
        %v2494 = vld [vmem:[%s2488 + $0x5] sm:$0x1]
        %v2495 = vld [vmem:[%s2488 + $0x6] sm:$0x1]
        %v2496 = vld [vmem:[%s2488 + $0x7] sm:$0x1]
        %v2497 = vld [vmem:[%s2488 + $0x8] sm:$0x1]
        %v2498 = vld [vmem:[%s2488 + $0x9] sm:$0x1]
        %v2499 = vld [vmem:[%s2488 + $0xa] sm:$0x1]
        %v2500 = vld [vmem:[%s2488 + $0xb] sm:$0x1]
        %v2501 = vld [vmem:[%s2488 + $0xc] sm:$0x1]
        %v2502 = vld [vmem:[%s2488 + $0xd] sm:$0x1]
        %v2503 = vld [vmem:[%s2488 + $0xe] sm:$0x1]
        %v2504 = vld [vmem:[%s2488 + $0xf] sm:$0x1]
        %v2505 = vld [vmem:[%s2488 + $0x10] sm:$0x1]
        %v2506 = vld [vmem:[%s2488 + $0x11] sm:$0x1]
        %v2507 = vld [vmem:[%s2488 + $0x12] sm:$0x1]
        %v2508 = vld [vmem:[%s2488 + $0x13] sm:$0x1]
        %v2509 = vld [vmem:[%s2488 + $0x14] sm:$0x1]
        %v2510 = vld [vmem:[%s2488 + $0x15] sm:$0x1]
        %v2511 = vld [vmem:[%s2488 + $0x16] sm:$0x1]
        %v2512 = vld [vmem:[%s2488 + $0x17] sm:$0x1]
        %v2537 = vlaneseq
        %v2538 = vshrl.u32 %v2537, 7
        %v2539 = vsub.s32 0, %v2538
        %v2540 = vrot.slane %v2489, %v2539
        %v2541 = vlaneseq
        %v2542 = vshrl.u32 %v2541, 7
        %v2543 = vsub.s32 0, %v2542
        %v2544 = vrot.slane %v2490, %v2543
        %v2545 = vlaneseq
        %v2546 = vshrl.u32 %v2545, 7
        %v2547 = vsub.s32 0, %v2546
        %v2548 = vrot.slane %v2491, %v2547
        %v2549 = vlaneseq
        %v2550 = vshrl.u32 %v2549, 7
        %v2551 = vsub.s32 0, %v2550
        %v2552 = vrot.slane %v2492, %v2551
        %v2553 = vlaneseq
        %v2554 = vshrl.u32 %v2553, 7
        %v2555 = vsub.s32 0, %v2554
        %v2556 = vrot.slane %v2493, %v2555
        %v2557 = vlaneseq
        %v2558 = vshrl.u32 %v2557, 7
        %v2559 = vsub.s32 0, %v2558
        %v2560 = vrot.slane %v2494, %v2559
        %v2561 = vlaneseq
        %v2562 = vshrl.u32 %v2561, 7
        %v2563 = vsub.s32 0, %v2562
        %v2564 = vrot.slane %v2495, %v2563
        %v2565 = vlaneseq
        %v2566 = vshrl.u32 %v2565, 7
        %v2567 = vsub.s32 0, %v2566
        %v2568 = vrot.slane %v2496, %v2567
        %v2569 = vlaneseq
        %v2570 = vshrl.u32 %v2569, 7
        %v2571 = vsub.s32 0, %v2570
        %v2572 = vrot.slane %v2497, %v2571
        %v2573 = vlaneseq
        %v2574 = vshrl.u32 %v2573, 7
        %v2575 = vsub.s32 0, %v2574
        %v2576 = vrot.slane %v2498, %v2575
        %v2577 = vlaneseq
        %v2578 = vshrl.u32 %v2577, 7
        %v2579 = vsub.s32 0, %v2578
        %v2580 = vrot.slane %v2499, %v2579
        %v2581 = vlaneseq
        %v2582 = vshrl.u32 %v2581, 7
        %v2583 = vsub.s32 0, %v2582
        %v2584 = vrot.slane %v2500, %v2583
        %v2585 = vlaneseq
        %v2586 = vshrl.u32 %v2585, 7
        %v2587 = vsub.s32 0, %v2586
        %v2588 = vrot.slane %v2501, %v2587
        %v2589 = vlaneseq
        %v2590 = vshrl.u32 %v2589, 7
        %v2591 = vsub.s32 0, %v2590
        %v2592 = vrot.slane %v2502, %v2591
        %v2593 = vlaneseq
        %v2594 = vshrl.u32 %v2593, 7
        %v2595 = vsub.s32 0, %v2594
        %v2596 = vrot.slane %v2503, %v2595
        %v2597 = vlaneseq
        %v2598 = vshrl.u32 %v2597, 7
        %v2599 = vsub.s32 0, %v2598
        %v2600 = vrot.slane %v2504, %v2599
        %v2601 = vlaneseq
        %v2602 = vshrl.u32 %v2601, 7
        %v2603 = vsub.s32 0, %v2602
        %v2604 = vrot.slane %v2505, %v2603
        %v2605 = vlaneseq
        %v2606 = vshrl.u32 %v2605, 7
        %v2607 = vsub.s32 0, %v2606
        %v2608 = vrot.slane %v2506, %v2607
        %v2609 = vlaneseq
        %v2610 = vshrl.u32 %v2609, 7
        %v2611 = vsub.s32 0, %v2610
        %v2612 = vrot.slane %v2507, %v2611
        %v2613 = vlaneseq
        %v2614 = vshrl.u32 %v2613, 7
        %v2615 = vsub.s32 0, %v2614
        %v2616 = vrot.slane %v2508, %v2615
        %v2617 = vlaneseq
        %v2618 = vshrl.u32 %v2617, 7
        %v2619 = vsub.s32 0, %v2618
        %v2620 = vrot.slane %v2509, %v2619
        %v2621 = vlaneseq
        %v2622 = vshrl.u32 %v2621, 7
        %v2623 = vsub.s32 0, %v2622
        %v2624 = vrot.slane %v2510, %v2623
        %v2625 = vlaneseq
        %v2626 = vshrl.u32 %v2625, 7
        %v2627 = vsub.s32 0, %v2626
        %v2628 = vrot.slane %v2511, %v2627
        %v2629 = vlaneseq
        %v2630 = vshrl.u32 %v2629, 7
        %v2631 = vsub.s32 0, %v2630
        %v2632 = vrot.slane %v2512, %v2631
        %2633 = vrot.lane.b32.xlu0 %v2540, 15
        %v2634 = vpop.permute.xlu0 %2633
        %2635 = vrot.lane.b32.xlu0 %v2544, 15
        %v2636 = vpop.permute.xlu0 %2635
        %2637 = vrot.lane.b32.xlu0 %v2548, 15
        %v2638 = vpop.permute.xlu0 %2637
        %2639 = vrot.lane.b32.xlu0 %v2552, 15
        %v2640 = vpop.permute.xlu0 %2639
        %2641 = vrot.lane.b32.xlu0 %v2556, 15
        %v2642 = vpop.permute.xlu0 %2641
        %2643 = vrot.lane.b32.xlu0 %v2560, 15
        %v2644 = vpop.permute.xlu0 %2643
        %2645 = vrot.lane.b32.xlu0 %v2564, 15
        %v2646 = vpop.permute.xlu0 %2645
        %2647 = vrot.lane.b32.xlu0 %v2568, 15
        %v2648 = vpop.permute.xlu0 %2647
        %2649 = vrot.lane.b32.xlu0 %v2572, 15
        %v2650 = vpop.permute.xlu0 %2649
        %2651 = vrot.lane.b32.xlu0 %v2576, 15
        %v2652 = vpop.permute.xlu0 %2651
        %2653 = vrot.lane.b32.xlu0 %v2580, 15
        %v2654 = vpop.permute.xlu0 %2653
        %2655 = vrot.lane.b32.xlu0 %v2584, 15
        %v2656 = vpop.permute.xlu0 %2655
        %2657 = vrot.lane.b32.xlu0 %v2588, 15
        %v2658 = vpop.permute.xlu0 %2657
        %2659 = vrot.lane.b32.xlu0 %v2592, 15
        %v2660 = vpop.permute.xlu0 %2659
        %2661 = vrot.lane.b32.xlu0 %v2596, 15
        %v2662 = vpop.permute.xlu0 %2661
        %2663 = vrot.lane.b32.xlu0 %v2600, 15
        %v2664 = vpop.permute.xlu0 %2663
        %2665 = vrot.lane.b32.xlu0 %v2604, 15
        %v2666 = vpop.permute.xlu0 %2665
        %2667 = vrot.lane.b32.xlu0 %v2608, 15
        %v2668 = vpop.permute.xlu0 %2667
        %2669 = vrot.lane.b32.xlu0 %v2612, 15
        %v2670 = vpop.permute.xlu0 %2669
        %2671 = vrot.lane.b32.xlu0 %v2616, 15
        %v2672 = vpop.permute.xlu0 %2671
        %2673 = vrot.lane.b32.xlu0 %v2620, 15
        %v2674 = vpop.permute.xlu0 %2673
        %2675 = vrot.lane.b32.xlu0 %v2624, 15
        %v2676 = vpop.permute.xlu0 %2675
        %2677 = vrot.lane.b32.xlu0 %v2628, 15
        %v2678 = vpop.permute.xlu0 %2677
        %2679 = vrot.lane.b32.xlu0 %v2632, 15
        %v2680 = vpop.permute.xlu0 %2679
        %v2705 = vmul.f32 %v1214, %v2634
        %v2706 = vmul.f32 %v1215, %v2634
        %v2707 = vmul.f32 %v1216, %v2636
        %v2708 = vmul.f32 %v1217, %v2636
        %v2709 = vmul.f32 %v1218, %v2638
        %v2710 = vmul.f32 %v1219, %v2638
        %v2711 = vmul.f32 %v1220, %v2640
        %v2712 = vmul.f32 %v1221, %v2640
        %v2713 = vmul.f32 %v1222, %v2642
        %v2714 = vmul.f32 %v1223, %v2642
        %v2715 = vmul.f32 %v1224, %v2644
        %v2716 = vmul.f32 %v1225, %v2644
        %v2717 = vmul.f32 %v1226, %v2646
        %v2718 = vmul.f32 %v1227, %v2646
        %v2719 = vmul.f32 %v1228, %v2648
        %v2720 = vmul.f32 %v1229, %v2648
        %v2721 = vmul.f32 %v1230, %v2650
        %v2722 = vmul.f32 %v1231, %v2650
        %v2723 = vmul.f32 %v1232, %v2652
        %v2724 = vmul.f32 %v1233, %v2652
        %v2725 = vmul.f32 %v1234, %v2654
        %v2726 = vmul.f32 %v1235, %v2654
        %v2727 = vmul.f32 %v1236, %v2656
        %v2728 = vmul.f32 %v1237, %v2656
        %v2729 = vmul.f32 %v1238, %v2658
        %v2730 = vmul.f32 %v1239, %v2658
        %v2731 = vmul.f32 %v1240, %v2660
        %v2732 = vmul.f32 %v1241, %v2660
        %v2733 = vmul.f32 %v1242, %v2662
        %v2734 = vmul.f32 %v1243, %v2662
        %v2735 = vmul.f32 %v1244, %v2664
        %v2736 = vmul.f32 %v1245, %v2664
        %v2737 = vmul.f32 %v1246, %v2666
        %v2738 = vmul.f32 %v1247, %v2666
        %v2739 = vmul.f32 %v1248, %v2668
        %v2740 = vmul.f32 %v1249, %v2668
        %v2741 = vmul.f32 %v1250, %v2670
        %v2742 = vmul.f32 %v1251, %v2670
        %v2743 = vmul.f32 %v1252, %v2672
        %v2744 = vmul.f32 %v1253, %v2672
        %v2745 = vmul.f32 %v1254, %v2674
        %v2746 = vmul.f32 %v1255, %v2674
        %v2747 = vmul.f32 %v1256, %v2676
        %v2748 = vmul.f32 %v1257, %v2676
        %v2749 = vmul.f32 %v1258, %v2678
        %v2750 = vmul.f32 %v1259, %v2678
        %v2751 = vmul.f32 %v1260, %v2680
        %v2752 = vmul.f32 %v1261, %v2680
        %s2753 = scalar_lea.vmem %s353, 96 [#allocation2]
        %v2754 = vld [vmem:[%s2753] sm:$0x1]
        %v2755 = vld [vmem:[%s2753 + $0x1] sm:$0x1]
        %v2756 = vld [vmem:[%s2753 + $0x2] sm:$0x1]
        %v2757 = vld [vmem:[%s2753 + $0x3] sm:$0x1]
        %v2758 = vld [vmem:[%s2753 + $0x4] sm:$0x1]
        %v2759 = vld [vmem:[%s2753 + $0x5] sm:$0x1]
        %v2760 = vld [vmem:[%s2753 + $0x6] sm:$0x1]
        %v2761 = vld [vmem:[%s2753 + $0x7] sm:$0x1]
        %v2762 = vld [vmem:[%s2753 + $0x8] sm:$0x1]
        %v2763 = vld [vmem:[%s2753 + $0x9] sm:$0x1]
        %v2764 = vld [vmem:[%s2753 + $0xa] sm:$0x1]
        %v2765 = vld [vmem:[%s2753 + $0xb] sm:$0x1]
        %v2766 = vld [vmem:[%s2753 + $0xc] sm:$0x1]
        %v2767 = vld [vmem:[%s2753 + $0xd] sm:$0x1]
        %v2768 = vld [vmem:[%s2753 + $0xe] sm:$0x1]
        %v2769 = vld [vmem:[%s2753 + $0xf] sm:$0x1]
        %v2770 = vld [vmem:[%s2753 + $0x10] sm:$0x1]
        %v2771 = vld [vmem:[%s2753 + $0x11] sm:$0x1]
        %v2772 = vld [vmem:[%s2753 + $0x12] sm:$0x1]
        %v2773 = vld [vmem:[%s2753 + $0x13] sm:$0x1]
        %v2774 = vld [vmem:[%s2753 + $0x14] sm:$0x1]
        %v2775 = vld [vmem:[%s2753 + $0x15] sm:$0x1]
        %v2776 = vld [vmem:[%s2753 + $0x16] sm:$0x1]
        %v2777 = vld [vmem:[%s2753 + $0x17] sm:$0x1]
        %v2802 = vlaneseq
        %v2803 = vshrl.u32 %v2802, 7
        %v2804 = vsub.s32 0, %v2803
        %v2805 = vrot.slane %v2754, %v2804
        %v2806 = vlaneseq
        %v2807 = vshrl.u32 %v2806, 7
        %v2808 = vsub.s32 0, %v2807
        %v2809 = vrot.slane %v2755, %v2808
        %v2810 = vlaneseq
        %v2811 = vshrl.u32 %v2810, 7
        %v2812 = vsub.s32 0, %v2811
        %v2813 = vrot.slane %v2756, %v2812
        %v2814 = vlaneseq
        %v2815 = vshrl.u32 %v2814, 7
        %v2816 = vsub.s32 0, %v2815
        %v2817 = vrot.slane %v2757, %v2816
        %v2818 = vlaneseq
        %v2819 = vshrl.u32 %v2818, 7
        %v2820 = vsub.s32 0, %v2819
        %v2821 = vrot.slane %v2758, %v2820
        %v2822 = vlaneseq
        %v2823 = vshrl.u32 %v2822, 7
        %v2824 = vsub.s32 0, %v2823
        %v2825 = vrot.slane %v2759, %v2824
        %v2826 = vlaneseq
        %v2827 = vshrl.u32 %v2826, 7
        %v2828 = vsub.s32 0, %v2827
        %v2829 = vrot.slane %v2760, %v2828
        %v2830 = vlaneseq
        %v2831 = vshrl.u32 %v2830, 7
        %v2832 = vsub.s32 0, %v2831
        %v2833 = vrot.slane %v2761, %v2832
        %v2834 = vlaneseq
        %v2835 = vshrl.u32 %v2834, 7
        %v2836 = vsub.s32 0, %v2835
        %v2837 = vrot.slane %v2762, %v2836
        %v2838 = vlaneseq
        %v2839 = vshrl.u32 %v2838, 7
        %v2840 = vsub.s32 0, %v2839
        %v2841 = vrot.slane %v2763, %v2840
        %v2842 = vlaneseq
        %v2843 = vshrl.u32 %v2842, 7
        %v2844 = vsub.s32 0, %v2843
        %v2845 = vrot.slane %v2764, %v2844
        %v2846 = vlaneseq
        %v2847 = vshrl.u32 %v2846, 7
        %v2848 = vsub.s32 0, %v2847
        %v2849 = vrot.slane %v2765, %v2848
        %v2850 = vlaneseq
        %v2851 = vshrl.u32 %v2850, 7
        %v2852 = vsub.s32 0, %v2851
        %v2853 = vrot.slane %v2766, %v2852
        %v2854 = vlaneseq
        %v2855 = vshrl.u32 %v2854, 7
        %v2856 = vsub.s32 0, %v2855
        %v2857 = vrot.slane %v2767, %v2856
        %v2858 = vlaneseq
        %v2859 = vshrl.u32 %v2858, 7
        %v2860 = vsub.s32 0, %v2859
        %v2861 = vrot.slane %v2768, %v2860
        %v2862 = vlaneseq
        %v2863 = vshrl.u32 %v2862, 7
        %v2864 = vsub.s32 0, %v2863
        %v2865 = vrot.slane %v2769, %v2864
        %v2866 = vlaneseq
        %v2867 = vshrl.u32 %v2866, 7
        %v2868 = vsub.s32 0, %v2867
        %v2869 = vrot.slane %v2770, %v2868
        %v2870 = vlaneseq
        %v2871 = vshrl.u32 %v2870, 7
        %v2872 = vsub.s32 0, %v2871
        %v2873 = vrot.slane %v2771, %v2872
        %v2874 = vlaneseq
        %v2875 = vshrl.u32 %v2874, 7
        %v2876 = vsub.s32 0, %v2875
        %v2877 = vrot.slane %v2772, %v2876
        %v2878 = vlaneseq
        %v2879 = vshrl.u32 %v2878, 7
        %v2880 = vsub.s32 0, %v2879
        %v2881 = vrot.slane %v2773, %v2880
        %v2882 = vlaneseq
        %v2883 = vshrl.u32 %v2882, 7
        %v2884 = vsub.s32 0, %v2883
        %v2885 = vrot.slane %v2774, %v2884
        %v2886 = vlaneseq
        %v2887 = vshrl.u32 %v2886, 7
        %v2888 = vsub.s32 0, %v2887
        %v2889 = vrot.slane %v2775, %v2888
        %v2890 = vlaneseq
        %v2891 = vshrl.u32 %v2890, 7
        %v2892 = vsub.s32 0, %v2891
        %v2893 = vrot.slane %v2776, %v2892
        %v2894 = vlaneseq
        %v2895 = vshrl.u32 %v2894, 7
        %v2896 = vsub.s32 0, %v2895
        %v2897 = vrot.slane %v2777, %v2896
        %v2922 = vmul.f32 %v925, %v2805
        %v2923 = vmul.f32 %v926, %v2805
        %v2924 = vmul.f32 %v927, %v2809
        %v2925 = vmul.f32 %v928, %v2809
        %v2926 = vmul.f32 %v929, %v2813
        %v2927 = vmul.f32 %v930, %v2813
        %v2928 = vmul.f32 %v931, %v2817
        %v2929 = vmul.f32 %v932, %v2817
        %v2930 = vmul.f32 %v933, %v2821
        %v2931 = vmul.f32 %v934, %v2821
        %v2932 = vmul.f32 %v935, %v2825
        %v2933 = vmul.f32 %v936, %v2825
        %v2934 = vmul.f32 %v937, %v2829
        %v2935 = vmul.f32 %v938, %v2829
        %v2936 = vmul.f32 %v939, %v2833
        %v2937 = vmul.f32 %v940, %v2833
        %v2938 = vmul.f32 %v941, %v2837
        %v2939 = vmul.f32 %v942, %v2837
        %v2940 = vmul.f32 %v943, %v2841
        %v2941 = vmul.f32 %v944, %v2841
        %v2942 = vmul.f32 %v945, %v2845
        %v2943 = vmul.f32 %v946, %v2845
        %v2944 = vmul.f32 %v947, %v2849
        %v2945 = vmul.f32 %v948, %v2849
        %v2946 = vmul.f32 %v949, %v2853
        %v2947 = vmul.f32 %v950, %v2853
        %v2948 = vmul.f32 %v951, %v2857
        %v2949 = vmul.f32 %v952, %v2857
        %v2950 = vmul.f32 %v953, %v2861
        %v2951 = vmul.f32 %v954, %v2861
        %v2952 = vmul.f32 %v955, %v2865
        %v2953 = vmul.f32 %v956, %v2865
        %v2954 = vmul.f32 %v957, %v2869
        %v2955 = vmul.f32 %v958, %v2869
        %v2956 = vmul.f32 %v959, %v2873
        %v2957 = vmul.f32 %v960, %v2873
        %v2958 = vmul.f32 %v961, %v2877
        %v2959 = vmul.f32 %v962, %v2877
        %v2960 = vmul.f32 %v963, %v2881
        %v2961 = vmul.f32 %v964, %v2881
        %v2962 = vmul.f32 %v965, %v2885
        %v2963 = vmul.f32 %v966, %v2885
        %v2964 = vmul.f32 %v967, %v2889
        %v2965 = vmul.f32 %v968, %v2889
        %v2966 = vmul.f32 %v969, %v2893
        %v2967 = vmul.f32 %v970, %v2893
        %v2968 = vmul.f32 %v971, %v2897
        %v2969 = vmul.f32 %v972, %v2897
        %3018 = vrot.lane.b32.xlu0 %v2922, 15
        %v3019 = vpop.permute.xlu0 %3018
        %3020 = vrot.lane.b32.xlu0 %v2923, 15
        %v3021 = vpop.permute.xlu0 %3020
        %3022 = vrot.lane.b32.xlu0 %v2924, 15
        %v3023 = vpop.permute.xlu0 %3022
        %3024 = vrot.lane.b32.xlu0 %v2925, 15
        %v3025 = vpop.permute.xlu0 %3024
        %3026 = vrot.lane.b32.xlu0 %v2926, 15
        %v3027 = vpop.permute.xlu0 %3026
        %3028 = vrot.lane.b32.xlu0 %v2927, 15
        %v3029 = vpop.permute.xlu0 %3028
        %3030 = vrot.lane.b32.xlu0 %v2928, 15
        %v3031 = vpop.permute.xlu0 %3030
        %3032 = vrot.lane.b32.xlu0 %v2929, 15
        %v3033 = vpop.permute.xlu0 %3032
        %3034 = vrot.lane.b32.xlu0 %v2930, 15
        %v3035 = vpop.permute.xlu0 %3034
        %3036 = vrot.lane.b32.xlu0 %v2931, 15
        %v3037 = vpop.permute.xlu0 %3036
        %3038 = vrot.lane.b32.xlu0 %v2932, 15
        %v3039 = vpop.permute.xlu0 %3038
        %3040 = vrot.lane.b32.xlu0 %v2933, 15
        %v3041 = vpop.permute.xlu0 %3040
        %3042 = vrot.lane.b32.xlu0 %v2934, 15
        %v3043 = vpop.permute.xlu0 %3042
        %3044 = vrot.lane.b32.xlu0 %v2935, 15
        %v3045 = vpop.permute.xlu0 %3044
        %3046 = vrot.lane.b32.xlu0 %v2936, 15
        %v3047 = vpop.permute.xlu0 %3046
        %3048 = vrot.lane.b32.xlu0 %v2937, 15
        %v3049 = vpop.permute.xlu0 %3048
        %3050 = vrot.lane.b32.xlu0 %v2938, 15
        %v3051 = vpop.permute.xlu0 %3050
        %3052 = vrot.lane.b32.xlu0 %v2939, 15
        %v3053 = vpop.permute.xlu0 %3052
        %3054 = vrot.lane.b32.xlu0 %v2940, 15
        %v3055 = vpop.permute.xlu0 %3054
        %3056 = vrot.lane.b32.xlu0 %v2941, 15
        %v3057 = vpop.permute.xlu0 %3056
        %3058 = vrot.lane.b32.xlu0 %v2942, 15
        %v3059 = vpop.permute.xlu0 %3058
        %3060 = vrot.lane.b32.xlu0 %v2943, 15
        %v3061 = vpop.permute.xlu0 %3060
        %3062 = vrot.lane.b32.xlu0 %v2944, 15
        %v3063 = vpop.permute.xlu0 %3062
        %3064 = vrot.lane.b32.xlu0 %v2945, 15
        %v3065 = vpop.permute.xlu0 %3064
        %3066 = vrot.lane.b32.xlu0 %v2946, 15
        %v3067 = vpop.permute.xlu0 %3066
        %3068 = vrot.lane.b32.xlu0 %v2947, 15
        %v3069 = vpop.permute.xlu0 %3068
        %3070 = vrot.lane.b32.xlu0 %v2948, 15
        %v3071 = vpop.permute.xlu0 %3070
        %3072 = vrot.lane.b32.xlu0 %v2949, 15
        %v3073 = vpop.permute.xlu0 %3072
        %3074 = vrot.lane.b32.xlu0 %v2950, 15
        %v3075 = vpop.permute.xlu0 %3074
        %3076 = vrot.lane.b32.xlu0 %v2951, 15
        %v3077 = vpop.permute.xlu0 %3076
        %3078 = vrot.lane.b32.xlu0 %v2952, 15
        %v3079 = vpop.permute.xlu0 %3078
        %3080 = vrot.lane.b32.xlu0 %v2953, 15
        %v3081 = vpop.permute.xlu0 %3080
        %3082 = vrot.lane.b32.xlu0 %v2954, 15
        %v3083 = vpop.permute.xlu0 %3082
        %3084 = vrot.lane.b32.xlu0 %v2955, 15
        %v3085 = vpop.permute.xlu0 %3084
        %3086 = vrot.lane.b32.xlu0 %v2956, 15
        %v3087 = vpop.permute.xlu0 %3086
        %3088 = vrot.lane.b32.xlu0 %v2957, 15
        %v3089 = vpop.permute.xlu0 %3088
        %3090 = vrot.lane.b32.xlu0 %v2958, 15
        %v3091 = vpop.permute.xlu0 %3090
        %3092 = vrot.lane.b32.xlu0 %v2959, 15
        %v3093 = vpop.permute.xlu0 %3092
        %3094 = vrot.lane.b32.xlu0 %v2960, 15
        %v3095 = vpop.permute.xlu0 %3094
        %3096 = vrot.lane.b32.xlu0 %v2961, 15
        %v3097 = vpop.permute.xlu0 %3096
        %3098 = vrot.lane.b32.xlu0 %v2962, 15
        %v3099 = vpop.permute.xlu0 %3098
        %3100 = vrot.lane.b32.xlu0 %v2963, 15
        %v3101 = vpop.permute.xlu0 %3100
        %3102 = vrot.lane.b32.xlu0 %v2964, 15
        %v3103 = vpop.permute.xlu0 %3102
        %3104 = vrot.lane.b32.xlu0 %v2965, 15
        %v3105 = vpop.permute.xlu0 %3104
        %3106 = vrot.lane.b32.xlu0 %v2966, 15
        %v3107 = vpop.permute.xlu0 %3106
        %3108 = vrot.lane.b32.xlu0 %v2967, 15
        %v3109 = vpop.permute.xlu0 %3108
        %3110 = vrot.lane.b32.xlu0 %v2968, 15
        %v3111 = vpop.permute.xlu0 %3110
        %3112 = vrot.lane.b32.xlu0 %v2969, 15
        %v3113 = vpop.permute.xlu0 %3112
        %v3162 = vadd.f32 %v2705, %v3019
        %v3163 = vadd.f32 %v2706, %v3021
        %v3164 = vadd.f32 %v2707, %v3023
        %v3165 = vadd.f32 %v2708, %v3025
        %v3166 = vadd.f32 %v2709, %v3027
        %v3167 = vadd.f32 %v2710, %v3029
        %v3168 = vadd.f32 %v2711, %v3031
        %v3169 = vadd.f32 %v2712, %v3033
        %v3170 = vadd.f32 %v2713, %v3035
        %v3171 = vadd.f32 %v2714, %v3037
        %v3172 = vadd.f32 %v2715, %v3039
        %v3173 = vadd.f32 %v2716, %v3041
        %v3174 = vadd.f32 %v2717, %v3043
        %v3175 = vadd.f32 %v2718, %v3045
        %v3176 = vadd.f32 %v2719, %v3047
        %v3177 = vadd.f32 %v2720, %v3049
        %v3178 = vadd.f32 %v2721, %v3051
        %v3179 = vadd.f32 %v2722, %v3053
        %v3180 = vadd.f32 %v2723, %v3055
        %v3181 = vadd.f32 %v2724, %v3057
        %v3182 = vadd.f32 %v2725, %v3059
        %v3183 = vadd.f32 %v2726, %v3061
        %v3184 = vadd.f32 %v2727, %v3063
        %v3185 = vadd.f32 %v2728, %v3065
        %v3186 = vadd.f32 %v2729, %v3067
        %v3187 = vadd.f32 %v2730, %v3069
        %v3188 = vadd.f32 %v2731, %v3071
        %v3189 = vadd.f32 %v2732, %v3073
        %v3190 = vadd.f32 %v2733, %v3075
        %v3191 = vadd.f32 %v2734, %v3077
        %v3192 = vadd.f32 %v2735, %v3079
        %v3193 = vadd.f32 %v2736, %v3081
        %v3194 = vadd.f32 %v2737, %v3083
        %v3195 = vadd.f32 %v2738, %v3085
        %v3196 = vadd.f32 %v2739, %v3087
        %v3197 = vadd.f32 %v2740, %v3089
        %v3198 = vadd.f32 %v2741, %v3091
        %v3199 = vadd.f32 %v2742, %v3093
        %v3200 = vadd.f32 %v2743, %v3095
        %v3201 = vadd.f32 %v2744, %v3097
        %v3202 = vadd.f32 %v2745, %v3099
        %v3203 = vadd.f32 %v2746, %v3101
        %v3204 = vadd.f32 %v2747, %v3103
        %v3205 = vadd.f32 %v2748, %v3105
        %v3206 = vadd.f32 %v2749, %v3107
        %v3207 = vadd.f32 %v2750, %v3109
        %v3208 = vadd.f32 %v2751, %v3111
        %v3209 = vadd.f32 %v2752, %v3113
        %s3210 = scalar_lea.vmem %s353, 120 [#allocation2]
        %v3211 = vld [vmem:[%s3210] sm:$0x1]
        %v3212 = vld [vmem:[%s3210 + $0x1] sm:$0x1]
        %v3213 = vld [vmem:[%s3210 + $0x2] sm:$0x1]
        %v3214 = vld [vmem:[%s3210 + $0x3] sm:$0x1]
        %v3215 = vld [vmem:[%s3210 + $0x4] sm:$0x1]
        %v3216 = vld [vmem:[%s3210 + $0x5] sm:$0x1]
        %v3217 = vld [vmem:[%s3210 + $0x6] sm:$0x1]
        %v3218 = vld [vmem:[%s3210 + $0x7] sm:$0x1]
        %v3219 = vld [vmem:[%s3210 + $0x8] sm:$0x1]
        %v3220 = vld [vmem:[%s3210 + $0x9] sm:$0x1]
        %v3221 = vld [vmem:[%s3210 + $0xa] sm:$0x1]
        %v3222 = vld [vmem:[%s3210 + $0xb] sm:$0x1]
        %v3223 = vld [vmem:[%s3210 + $0xc] sm:$0x1]
        %v3224 = vld [vmem:[%s3210 + $0xd] sm:$0x1]
        %v3225 = vld [vmem:[%s3210 + $0xe] sm:$0x1]
        %v3226 = vld [vmem:[%s3210 + $0xf] sm:$0x1]
        %v3227 = vld [vmem:[%s3210 + $0x10] sm:$0x1]
        %v3228 = vld [vmem:[%s3210 + $0x11] sm:$0x1]
        %v3229 = vld [vmem:[%s3210 + $0x12] sm:$0x1]
        %v3230 = vld [vmem:[%s3210 + $0x13] sm:$0x1]
        %v3231 = vld [vmem:[%s3210 + $0x14] sm:$0x1]
        %v3232 = vld [vmem:[%s3210 + $0x15] sm:$0x1]
        %v3233 = vld [vmem:[%s3210 + $0x16] sm:$0x1]
        %v3234 = vld [vmem:[%s3210 + $0x17] sm:$0x1]
        %v3259 = vlaneseq
        %v3260 = vshrl.u32 %v3259, 7
        %v3261 = vsub.s32 0, %v3260
        %v3262 = vrot.slane %v3211, %v3261
        %v3263 = vlaneseq
        %v3264 = vshrl.u32 %v3263, 7
        %v3265 = vsub.s32 0, %v3264
        %v3266 = vrot.slane %v3212, %v3265
        %v3267 = vlaneseq
        %v3268 = vshrl.u32 %v3267, 7
        %v3269 = vsub.s32 0, %v3268
        %v3270 = vrot.slane %v3213, %v3269
        %v3271 = vlaneseq
        %v3272 = vshrl.u32 %v3271, 7
        %v3273 = vsub.s32 0, %v3272
        %v3274 = vrot.slane %v3214, %v3273
        %v3275 = vlaneseq
        %v3276 = vshrl.u32 %v3275, 7
        %v3277 = vsub.s32 0, %v3276
        %v3278 = vrot.slane %v3215, %v3277
        %v3279 = vlaneseq
        %v3280 = vshrl.u32 %v3279, 7
        %v3281 = vsub.s32 0, %v3280
        %v3282 = vrot.slane %v3216, %v3281
        %v3283 = vlaneseq
        %v3284 = vshrl.u32 %v3283, 7
        %v3285 = vsub.s32 0, %v3284
        %v3286 = vrot.slane %v3217, %v3285
        %v3287 = vlaneseq
        %v3288 = vshrl.u32 %v3287, 7
        %v3289 = vsub.s32 0, %v3288
        %v3290 = vrot.slane %v3218, %v3289
        %v3291 = vlaneseq
        %v3292 = vshrl.u32 %v3291, 7
        %v3293 = vsub.s32 0, %v3292
        %v3294 = vrot.slane %v3219, %v3293
        %v3295 = vlaneseq
        %v3296 = vshrl.u32 %v3295, 7
        %v3297 = vsub.s32 0, %v3296
        %v3298 = vrot.slane %v3220, %v3297
        %v3299 = vlaneseq
        %v3300 = vshrl.u32 %v3299, 7
        %v3301 = vsub.s32 0, %v3300
        %v3302 = vrot.slane %v3221, %v3301
        %v3303 = vlaneseq
        %v3304 = vshrl.u32 %v3303, 7
        %v3305 = vsub.s32 0, %v3304
        %v3306 = vrot.slane %v3222, %v3305
        %v3307 = vlaneseq
        %v3308 = vshrl.u32 %v3307, 7
        %v3309 = vsub.s32 0, %v3308
        %v3310 = vrot.slane %v3223, %v3309
        %v3311 = vlaneseq
        %v3312 = vshrl.u32 %v3311, 7
        %v3313 = vsub.s32 0, %v3312
        %v3314 = vrot.slane %v3224, %v3313
        %v3315 = vlaneseq
        %v3316 = vshrl.u32 %v3315, 7
        %v3317 = vsub.s32 0, %v3316
        %v3318 = vrot.slane %v3225, %v3317
        %v3319 = vlaneseq
        %v3320 = vshrl.u32 %v3319, 7
        %v3321 = vsub.s32 0, %v3320
        %v3322 = vrot.slane %v3226, %v3321
        %v3323 = vlaneseq
        %v3324 = vshrl.u32 %v3323, 7
        %v3325 = vsub.s32 0, %v3324
        %v3326 = vrot.slane %v3227, %v3325
        %v3327 = vlaneseq
        %v3328 = vshrl.u32 %v3327, 7
        %v3329 = vsub.s32 0, %v3328
        %v3330 = vrot.slane %v3228, %v3329
        %v3331 = vlaneseq
        %v3332 = vshrl.u32 %v3331, 7
        %v3333 = vsub.s32 0, %v3332
        %v3334 = vrot.slane %v3229, %v3333
        %v3335 = vlaneseq
        %v3336 = vshrl.u32 %v3335, 7
        %v3337 = vsub.s32 0, %v3336
        %v3338 = vrot.slane %v3230, %v3337
        %v3339 = vlaneseq
        %v3340 = vshrl.u32 %v3339, 7
        %v3341 = vsub.s32 0, %v3340
        %v3342 = vrot.slane %v3231, %v3341
        %v3343 = vlaneseq
        %v3344 = vshrl.u32 %v3343, 7
        %v3345 = vsub.s32 0, %v3344
        %v3346 = vrot.slane %v3232, %v3345
        %v3347 = vlaneseq
        %v3348 = vshrl.u32 %v3347, 7
        %v3349 = vsub.s32 0, %v3348
        %v3350 = vrot.slane %v3233, %v3349
        %v3351 = vlaneseq
        %v3352 = vshrl.u32 %v3351, 7
        %v3353 = vsub.s32 0, %v3352
        %v3354 = vrot.slane %v3234, %v3353
        %3355 = vrot.lane.b32.xlu0 %v3262, 1
        %v3356 = vpop.permute.xlu0 %3355
        %3357 = vrot.lane.b32.xlu0 %v3266, 1
        %v3358 = vpop.permute.xlu0 %3357
        %3359 = vrot.lane.b32.xlu0 %v3270, 1
        %v3360 = vpop.permute.xlu0 %3359
        %3361 = vrot.lane.b32.xlu0 %v3274, 1
        %v3362 = vpop.permute.xlu0 %3361
        %3363 = vrot.lane.b32.xlu0 %v3278, 1
        %v3364 = vpop.permute.xlu0 %3363
        %3365 = vrot.lane.b32.xlu0 %v3282, 1
        %v3366 = vpop.permute.xlu0 %3365
        %3367 = vrot.lane.b32.xlu0 %v3286, 1
        %v3368 = vpop.permute.xlu0 %3367
        %3369 = vrot.lane.b32.xlu0 %v3290, 1
        %v3370 = vpop.permute.xlu0 %3369
        %3371 = vrot.lane.b32.xlu0 %v3294, 1
        %v3372 = vpop.permute.xlu0 %3371
        %3373 = vrot.lane.b32.xlu0 %v3298, 1
        %v3374 = vpop.permute.xlu0 %3373
        %3375 = vrot.lane.b32.xlu0 %v3302, 1
        %v3376 = vpop.permute.xlu0 %3375
        %3377 = vrot.lane.b32.xlu0 %v3306, 1
        %v3378 = vpop.permute.xlu0 %3377
        %3379 = vrot.lane.b32.xlu0 %v3310, 1
        %v3380 = vpop.permute.xlu0 %3379
        %3381 = vrot.lane.b32.xlu0 %v3314, 1
        %v3382 = vpop.permute.xlu0 %3381
        %3383 = vrot.lane.b32.xlu0 %v3318, 1
        %v3384 = vpop.permute.xlu0 %3383
        %3385 = vrot.lane.b32.xlu0 %v3322, 1
        %v3386 = vpop.permute.xlu0 %3385
        %3387 = vrot.lane.b32.xlu0 %v3326, 1
        %v3388 = vpop.permute.xlu0 %3387
        %3389 = vrot.lane.b32.xlu0 %v3330, 1
        %v3390 = vpop.permute.xlu0 %3389
        %3391 = vrot.lane.b32.xlu0 %v3334, 1
        %v3392 = vpop.permute.xlu0 %3391
        %3393 = vrot.lane.b32.xlu0 %v3338, 1
        %v3394 = vpop.permute.xlu0 %3393
        %3395 = vrot.lane.b32.xlu0 %v3342, 1
        %v3396 = vpop.permute.xlu0 %3395
        %3397 = vrot.lane.b32.xlu0 %v3346, 1
        %v3398 = vpop.permute.xlu0 %3397
        %3399 = vrot.lane.b32.xlu0 %v3350, 1
        %v3400 = vpop.permute.xlu0 %3399
        %3401 = vrot.lane.b32.xlu0 %v3354, 1
        %v3402 = vpop.permute.xlu0 %3401
        %v3427 = vmul.f32 %v1214, %v3356
        %v3428 = vmul.f32 %v1215, %v3356
        %v3429 = vmul.f32 %v1216, %v3358
        %v3430 = vmul.f32 %v1217, %v3358
        %v3431 = vmul.f32 %v1218, %v3360
        %v3432 = vmul.f32 %v1219, %v3360
        %v3433 = vmul.f32 %v1220, %v3362
        %v3434 = vmul.f32 %v1221, %v3362
        %v3435 = vmul.f32 %v1222, %v3364
        %v3436 = vmul.f32 %v1223, %v3364
        %v3437 = vmul.f32 %v1224, %v3366
        %v3438 = vmul.f32 %v1225, %v3366
        %v3439 = vmul.f32 %v1226, %v3368
        %v3440 = vmul.f32 %v1227, %v3368
        %v3441 = vmul.f32 %v1228, %v3370
        %v3442 = vmul.f32 %v1229, %v3370
        %v3443 = vmul.f32 %v1230, %v3372
        %v3444 = vmul.f32 %v1231, %v3372
        %v3445 = vmul.f32 %v1232, %v3374
        %v3446 = vmul.f32 %v1233, %v3374
        %v3447 = vmul.f32 %v1234, %v3376
        %v3448 = vmul.f32 %v1235, %v3376
        %v3449 = vmul.f32 %v1236, %v3378
        %v3450 = vmul.f32 %v1237, %v3378
        %v3451 = vmul.f32 %v1238, %v3380
        %v3452 = vmul.f32 %v1239, %v3380
        %v3453 = vmul.f32 %v1240, %v3382
        %v3454 = vmul.f32 %v1241, %v3382
        %v3455 = vmul.f32 %v1242, %v3384
        %v3456 = vmul.f32 %v1243, %v3384
        %v3457 = vmul.f32 %v1244, %v3386
        %v3458 = vmul.f32 %v1245, %v3386
        %v3459 = vmul.f32 %v1246, %v3388
        %v3460 = vmul.f32 %v1247, %v3388
        %v3461 = vmul.f32 %v1248, %v3390
        %v3462 = vmul.f32 %v1249, %v3390
        %v3463 = vmul.f32 %v1250, %v3392
        %v3464 = vmul.f32 %v1251, %v3392
        %v3465 = vmul.f32 %v1252, %v3394
        %v3466 = vmul.f32 %v1253, %v3394
        %v3467 = vmul.f32 %v1254, %v3396
        %v3468 = vmul.f32 %v1255, %v3396
        %v3469 = vmul.f32 %v1256, %v3398
        %v3470 = vmul.f32 %v1257, %v3398
        %v3471 = vmul.f32 %v1258, %v3400
        %v3472 = vmul.f32 %v1259, %v3400
        %v3473 = vmul.f32 %v1260, %v3402
        %v3474 = vmul.f32 %v1261, %v3402
        %3523 = vrot.lane.b32.xlu0 %v3427, 14
        %v3524 = vpop.permute.xlu0 %3523
        %3525 = vrot.lane.b32.xlu0 %v3428, 14
        %v3526 = vpop.permute.xlu0 %3525
        %3527 = vrot.lane.b32.xlu0 %v3429, 14
        %v3528 = vpop.permute.xlu0 %3527
        %3529 = vrot.lane.b32.xlu0 %v3430, 14
        %v3530 = vpop.permute.xlu0 %3529
        %3531 = vrot.lane.b32.xlu0 %v3431, 14
        %v3532 = vpop.permute.xlu0 %3531
        %3533 = vrot.lane.b32.xlu0 %v3432, 14
        %v3534 = vpop.permute.xlu0 %3533
        %3535 = vrot.lane.b32.xlu0 %v3433, 14
        %v3536 = vpop.permute.xlu0 %3535
        %3537 = vrot.lane.b32.xlu0 %v3434, 14
        %v3538 = vpop.permute.xlu0 %3537
        %3539 = vrot.lane.b32.xlu0 %v3435, 14
        %v3540 = vpop.permute.xlu0 %3539
        %3541 = vrot.lane.b32.xlu0 %v3436, 14
        %v3542 = vpop.permute.xlu0 %3541
        %3543 = vrot.lane.b32.xlu0 %v3437, 14
        %v3544 = vpop.permute.xlu0 %3543
        %3545 = vrot.lane.b32.xlu0 %v3438, 14
        %v3546 = vpop.permute.xlu0 %3545
        %3547 = vrot.lane.b32.xlu0 %v3439, 14
        %v3548 = vpop.permute.xlu0 %3547
        %3549 = vrot.lane.b32.xlu0 %v3440, 14
        %v3550 = vpop.permute.xlu0 %3549
        %3551 = vrot.lane.b32.xlu0 %v3441, 14
        %v3552 = vpop.permute.xlu0 %3551
        %3553 = vrot.lane.b32.xlu0 %v3442, 14
        %v3554 = vpop.permute.xlu0 %3553
        %3555 = vrot.lane.b32.xlu0 %v3443, 14
        %v3556 = vpop.permute.xlu0 %3555
        %3557 = vrot.lane.b32.xlu0 %v3444, 14
        %v3558 = vpop.permute.xlu0 %3557
        %3559 = vrot.lane.b32.xlu0 %v3445, 14
        %v3560 = vpop.permute.xlu0 %3559
        %3561 = vrot.lane.b32.xlu0 %v3446, 14
        %v3562 = vpop.permute.xlu0 %3561
        %3563 = vrot.lane.b32.xlu0 %v3447, 14
        %v3564 = vpop.permute.xlu0 %3563
        %3565 = vrot.lane.b32.xlu0 %v3448, 14
        %v3566 = vpop.permute.xlu0 %3565
        %3567 = vrot.lane.b32.xlu0 %v3449, 14
        %v3568 = vpop.permute.xlu0 %3567
        %3569 = vrot.lane.b32.xlu0 %v3450, 14
        %v3570 = vpop.permute.xlu0 %3569
        %3571 = vrot.lane.b32.xlu0 %v3451, 14
        %v3572 = vpop.permute.xlu0 %3571
        %3573 = vrot.lane.b32.xlu0 %v3452, 14
        %v3574 = vpop.permute.xlu0 %3573
        %3575 = vrot.lane.b32.xlu0 %v3453, 14
        %v3576 = vpop.permute.xlu0 %3575
        %3577 = vrot.lane.b32.xlu0 %v3454, 14
        %v3578 = vpop.permute.xlu0 %3577
        %3579 = vrot.lane.b32.xlu0 %v3455, 14
        %v3580 = vpop.permute.xlu0 %3579
        %3581 = vrot.lane.b32.xlu0 %v3456, 14
        %v3582 = vpop.permute.xlu0 %3581
        %3583 = vrot.lane.b32.xlu0 %v3457, 14
        %v3584 = vpop.permute.xlu0 %3583
        %3585 = vrot.lane.b32.xlu0 %v3458, 14
        %v3586 = vpop.permute.xlu0 %3585
        %3587 = vrot.lane.b32.xlu0 %v3459, 14
        %v3588 = vpop.permute.xlu0 %3587
        %3589 = vrot.lane.b32.xlu0 %v3460, 14
        %v3590 = vpop.permute.xlu0 %3589
        %3591 = vrot.lane.b32.xlu0 %v3461, 14
        %v3592 = vpop.permute.xlu0 %3591
        %3593 = vrot.lane.b32.xlu0 %v3462, 14
        %v3594 = vpop.permute.xlu0 %3593
        %3595 = vrot.lane.b32.xlu0 %v3463, 14
        %v3596 = vpop.permute.xlu0 %3595
        %3597 = vrot.lane.b32.xlu0 %v3464, 14
        %v3598 = vpop.permute.xlu0 %3597
        %3599 = vrot.lane.b32.xlu0 %v3465, 14
        %v3600 = vpop.permute.xlu0 %3599
        %3601 = vrot.lane.b32.xlu0 %v3466, 14
        %v3602 = vpop.permute.xlu0 %3601
        %3603 = vrot.lane.b32.xlu0 %v3467, 14
        %v3604 = vpop.permute.xlu0 %3603
        %3605 = vrot.lane.b32.xlu0 %v3468, 14
        %v3606 = vpop.permute.xlu0 %3605
        %3607 = vrot.lane.b32.xlu0 %v3469, 14
        %v3608 = vpop.permute.xlu0 %3607
        %3609 = vrot.lane.b32.xlu0 %v3470, 14
        %v3610 = vpop.permute.xlu0 %3609
        %3611 = vrot.lane.b32.xlu0 %v3471, 14
        %v3612 = vpop.permute.xlu0 %3611
        %3613 = vrot.lane.b32.xlu0 %v3472, 14
        %v3614 = vpop.permute.xlu0 %3613
        %3615 = vrot.lane.b32.xlu0 %v3473, 14
        %v3616 = vpop.permute.xlu0 %3615
        %3617 = vrot.lane.b32.xlu0 %v3474, 14
        %v3618 = vpop.permute.xlu0 %3617
        %v3667 = vadd.f32 %v3162, %v3524
        %v3668 = vadd.f32 %v3163, %v3526
        %v3669 = vadd.f32 %v3164, %v3528
        %v3670 = vadd.f32 %v3165, %v3530
        %v3671 = vadd.f32 %v3166, %v3532
        %v3672 = vadd.f32 %v3167, %v3534
        %v3673 = vadd.f32 %v3168, %v3536
        %v3674 = vadd.f32 %v3169, %v3538
        %v3675 = vadd.f32 %v3170, %v3540
        %v3676 = vadd.f32 %v3171, %v3542
        %v3677 = vadd.f32 %v3172, %v3544
        %v3678 = vadd.f32 %v3173, %v3546
        %v3679 = vadd.f32 %v3174, %v3548
        %v3680 = vadd.f32 %v3175, %v3550
        %v3681 = vadd.f32 %v3176, %v3552
        %v3682 = vadd.f32 %v3177, %v3554
        %v3683 = vadd.f32 %v3178, %v3556
        %v3684 = vadd.f32 %v3179, %v3558
        %v3685 = vadd.f32 %v3180, %v3560
        %v3686 = vadd.f32 %v3181, %v3562
        %v3687 = vadd.f32 %v3182, %v3564
        %v3688 = vadd.f32 %v3183, %v3566
        %v3689 = vadd.f32 %v3184, %v3568
        %v3690 = vadd.f32 %v3185, %v3570
        %v3691 = vadd.f32 %v3186, %v3572
        %v3692 = vadd.f32 %v3187, %v3574
        %v3693 = vadd.f32 %v3188, %v3576
        %v3694 = vadd.f32 %v3189, %v3578
        %v3695 = vadd.f32 %v3190, %v3580
        %v3696 = vadd.f32 %v3191, %v3582
        %v3697 = vadd.f32 %v3192, %v3584
        %v3698 = vadd.f32 %v3193, %v3586
        %v3699 = vadd.f32 %v3194, %v3588
        %v3700 = vadd.f32 %v3195, %v3590
        %v3701 = vadd.f32 %v3196, %v3592
        %v3702 = vadd.f32 %v3197, %v3594
        %v3703 = vadd.f32 %v3198, %v3596
        %v3704 = vadd.f32 %v3199, %v3598
        %v3705 = vadd.f32 %v3200, %v3600
        %v3706 = vadd.f32 %v3201, %v3602
        %v3707 = vadd.f32 %v3202, %v3604
        %v3708 = vadd.f32 %v3203, %v3606
        %v3709 = vadd.f32 %v3204, %v3608
        %v3710 = vadd.f32 %v3205, %v3610
        %v3711 = vadd.f32 %v3206, %v3612
        %v3712 = vadd.f32 %v3207, %v3614
        %v3713 = vadd.f32 %v3208, %v3616
        %v3714 = vadd.f32 %v3209, %v3618
        %s3715 = scalar_lea.vmem %s353, 144 [#allocation2]
        %v3716 = vld [vmem:[%s3715] sm:$0x1]
        %v3717 = vld [vmem:[%s3715 + $0x1] sm:$0x1]
        %v3718 = vld [vmem:[%s3715 + $0x2] sm:$0x1]
        %v3719 = vld [vmem:[%s3715 + $0x3] sm:$0x1]
        %v3720 = vld [vmem:[%s3715 + $0x4] sm:$0x1]
        %v3721 = vld [vmem:[%s3715 + $0x5] sm:$0x1]
        %v3722 = vld [vmem:[%s3715 + $0x6] sm:$0x1]
        %v3723 = vld [vmem:[%s3715 + $0x7] sm:$0x1]
        %v3724 = vld [vmem:[%s3715 + $0x8] sm:$0x1]
        %v3725 = vld [vmem:[%s3715 + $0x9] sm:$0x1]
        %v3726 = vld [vmem:[%s3715 + $0xa] sm:$0x1]
        %v3727 = vld [vmem:[%s3715 + $0xb] sm:$0x1]
        %v3728 = vld [vmem:[%s3715 + $0xc] sm:$0x1]
        %v3729 = vld [vmem:[%s3715 + $0xd] sm:$0x1]
        %v3730 = vld [vmem:[%s3715 + $0xe] sm:$0x1]
        %v3731 = vld [vmem:[%s3715 + $0xf] sm:$0x1]
        %v3732 = vld [vmem:[%s3715 + $0x10] sm:$0x1]
        %v3733 = vld [vmem:[%s3715 + $0x11] sm:$0x1]
        %v3734 = vld [vmem:[%s3715 + $0x12] sm:$0x1]
        %v3735 = vld [vmem:[%s3715 + $0x13] sm:$0x1]
        %v3736 = vld [vmem:[%s3715 + $0x14] sm:$0x1]
        %v3737 = vld [vmem:[%s3715 + $0x15] sm:$0x1]
        %v3738 = vld [vmem:[%s3715 + $0x16] sm:$0x1]
        %v3739 = vld [vmem:[%s3715 + $0x17] sm:$0x1]
        %v3764 = vlaneseq
        %v3765 = vshrl.u32 %v3764, 7
        %v3766 = vsub.s32 0, %v3765
        %v3767 = vrot.slane %v3716, %v3766
        %v3768 = vlaneseq
        %v3769 = vshrl.u32 %v3768, 7
        %v3770 = vsub.s32 0, %v3769
        %v3771 = vrot.slane %v3717, %v3770
        %v3772 = vlaneseq
        %v3773 = vshrl.u32 %v3772, 7
        %v3774 = vsub.s32 0, %v3773
        %v3775 = vrot.slane %v3718, %v3774
        %v3776 = vlaneseq
        %v3777 = vshrl.u32 %v3776, 7
        %v3778 = vsub.s32 0, %v3777
        %v3779 = vrot.slane %v3719, %v3778
        %v3780 = vlaneseq
        %v3781 = vshrl.u32 %v3780, 7
        %v3782 = vsub.s32 0, %v3781
        %v3783 = vrot.slane %v3720, %v3782
        %v3784 = vlaneseq
        %v3785 = vshrl.u32 %v3784, 7
        %v3786 = vsub.s32 0, %v3785
        %v3787 = vrot.slane %v3721, %v3786
        %v3788 = vlaneseq
        %v3789 = vshrl.u32 %v3788, 7
        %v3790 = vsub.s32 0, %v3789
        %v3791 = vrot.slane %v3722, %v3790
        %v3792 = vlaneseq
        %v3793 = vshrl.u32 %v3792, 7
        %v3794 = vsub.s32 0, %v3793
        %v3795 = vrot.slane %v3723, %v3794
        %v3796 = vlaneseq
        %v3797 = vshrl.u32 %v3796, 7
        %v3798 = vsub.s32 0, %v3797
        %v3799 = vrot.slane %v3724, %v3798
        %v3800 = vlaneseq
        %v3801 = vshrl.u32 %v3800, 7
        %v3802 = vsub.s32 0, %v3801
        %v3803 = vrot.slane %v3725, %v3802
        %v3804 = vlaneseq
        %v3805 = vshrl.u32 %v3804, 7
        %v3806 = vsub.s32 0, %v3805
        %v3807 = vrot.slane %v3726, %v3806
        %v3808 = vlaneseq
        %v3809 = vshrl.u32 %v3808, 7
        %v3810 = vsub.s32 0, %v3809
        %v3811 = vrot.slane %v3727, %v3810
        %v3812 = vlaneseq
        %v3813 = vshrl.u32 %v3812, 7
        %v3814 = vsub.s32 0, %v3813
        %v3815 = vrot.slane %v3728, %v3814
        %v3816 = vlaneseq
        %v3817 = vshrl.u32 %v3816, 7
        %v3818 = vsub.s32 0, %v3817
        %v3819 = vrot.slane %v3729, %v3818
        %v3820 = vlaneseq
        %v3821 = vshrl.u32 %v3820, 7
        %v3822 = vsub.s32 0, %v3821
        %v3823 = vrot.slane %v3730, %v3822
        %v3824 = vlaneseq
        %v3825 = vshrl.u32 %v3824, 7
        %v3826 = vsub.s32 0, %v3825
        %v3827 = vrot.slane %v3731, %v3826
        %v3828 = vlaneseq
        %v3829 = vshrl.u32 %v3828, 7
        %v3830 = vsub.s32 0, %v3829
        %v3831 = vrot.slane %v3732, %v3830
        %v3832 = vlaneseq
        %v3833 = vshrl.u32 %v3832, 7
        %v3834 = vsub.s32 0, %v3833
        %v3835 = vrot.slane %v3733, %v3834
        %v3836 = vlaneseq
        %v3837 = vshrl.u32 %v3836, 7
        %v3838 = vsub.s32 0, %v3837
        %v3839 = vrot.slane %v3734, %v3838
        %v3840 = vlaneseq
        %v3841 = vshrl.u32 %v3840, 7
        %v3842 = vsub.s32 0, %v3841
        %v3843 = vrot.slane %v3735, %v3842
        %v3844 = vlaneseq
        %v3845 = vshrl.u32 %v3844, 7
        %v3846 = vsub.s32 0, %v3845
        %v3847 = vrot.slane %v3736, %v3846
        %v3848 = vlaneseq
        %v3849 = vshrl.u32 %v3848, 7
        %v3850 = vsub.s32 0, %v3849
        %v3851 = vrot.slane %v3737, %v3850
        %v3852 = vlaneseq
        %v3853 = vshrl.u32 %v3852, 7
        %v3854 = vsub.s32 0, %v3853
        %v3855 = vrot.slane %v3738, %v3854
        %v3856 = vlaneseq
        %v3857 = vshrl.u32 %v3856, 7
        %v3858 = vsub.s32 0, %v3857
        %v3859 = vrot.slane %v3739, %v3858
        %3860 = vrot.lane.b32.xlu0 %v3767, 15
        %v3861 = vpop.permute.xlu0 %3860
        %3862 = vrot.lane.b32.xlu0 %v3771, 15
        %v3863 = vpop.permute.xlu0 %3862
        %3864 = vrot.lane.b32.xlu0 %v3775, 15
        %v3865 = vpop.permute.xlu0 %3864
        %3866 = vrot.lane.b32.xlu0 %v3779, 15
        %v3867 = vpop.permute.xlu0 %3866
        %3868 = vrot.lane.b32.xlu0 %v3783, 15
        %v3869 = vpop.permute.xlu0 %3868
        %3870 = vrot.lane.b32.xlu0 %v3787, 15
        %v3871 = vpop.permute.xlu0 %3870
        %3872 = vrot.lane.b32.xlu0 %v3791, 15
        %v3873 = vpop.permute.xlu0 %3872
        %3874 = vrot.lane.b32.xlu0 %v3795, 15
        %v3875 = vpop.permute.xlu0 %3874
        %3876 = vrot.lane.b32.xlu0 %v3799, 15
        %v3877 = vpop.permute.xlu0 %3876
        %3878 = vrot.lane.b32.xlu0 %v3803, 15
        %v3879 = vpop.permute.xlu0 %3878
        %3880 = vrot.lane.b32.xlu0 %v3807, 15
        %v3881 = vpop.permute.xlu0 %3880
        %3882 = vrot.lane.b32.xlu0 %v3811, 15
        %v3883 = vpop.permute.xlu0 %3882
        %3884 = vrot.lane.b32.xlu0 %v3815, 15
        %v3885 = vpop.permute.xlu0 %3884
        %3886 = vrot.lane.b32.xlu0 %v3819, 15
        %v3887 = vpop.permute.xlu0 %3886
        %3888 = vrot.lane.b32.xlu0 %v3823, 15
        %v3889 = vpop.permute.xlu0 %3888
        %3890 = vrot.lane.b32.xlu0 %v3827, 15
        %v3891 = vpop.permute.xlu0 %3890
        %3892 = vrot.lane.b32.xlu0 %v3831, 15
        %v3893 = vpop.permute.xlu0 %3892
        %3894 = vrot.lane.b32.xlu0 %v3835, 15
        %v3895 = vpop.permute.xlu0 %3894
        %3896 = vrot.lane.b32.xlu0 %v3839, 15
        %v3897 = vpop.permute.xlu0 %3896
        %3898 = vrot.lane.b32.xlu0 %v3843, 15
        %v3899 = vpop.permute.xlu0 %3898
        %3900 = vrot.lane.b32.xlu0 %v3847, 15
        %v3901 = vpop.permute.xlu0 %3900
        %3902 = vrot.lane.b32.xlu0 %v3851, 15
        %v3903 = vpop.permute.xlu0 %3902
        %3904 = vrot.lane.b32.xlu0 %v3855, 15
        %v3905 = vpop.permute.xlu0 %3904
        %3906 = vrot.lane.b32.xlu0 %v3859, 15
        %v3907 = vpop.permute.xlu0 %3906
        %v3932 = vmul.f32 %v1214, %v3861
        %v3933 = vmul.f32 %v1215, %v3861
        %v3934 = vmul.f32 %v1216, %v3863
        %v3935 = vmul.f32 %v1217, %v3863
        %v3936 = vmul.f32 %v1218, %v3865
        %v3937 = vmul.f32 %v1219, %v3865
        %v3938 = vmul.f32 %v1220, %v3867
        %v3939 = vmul.f32 %v1221, %v3867
        %v3940 = vmul.f32 %v1222, %v3869
        %v3941 = vmul.f32 %v1223, %v3869
        %v3942 = vmul.f32 %v1224, %v3871
        %v3943 = vmul.f32 %v1225, %v3871
        %v3944 = vmul.f32 %v1226, %v3873
        %v3945 = vmul.f32 %v1227, %v3873
        %v3946 = vmul.f32 %v1228, %v3875
        %v3947 = vmul.f32 %v1229, %v3875
        %v3948 = vmul.f32 %v1230, %v3877
        %v3949 = vmul.f32 %v1231, %v3877
        %v3950 = vmul.f32 %v1232, %v3879
        %v3951 = vmul.f32 %v1233, %v3879
        %v3952 = vmul.f32 %v1234, %v3881
        %v3953 = vmul.f32 %v1235, %v3881
        %v3954 = vmul.f32 %v1236, %v3883
        %v3955 = vmul.f32 %v1237, %v3883
        %v3956 = vmul.f32 %v1238, %v3885
        %v3957 = vmul.f32 %v1239, %v3885
        %v3958 = vmul.f32 %v1240, %v3887
        %v3959 = vmul.f32 %v1241, %v3887
        %v3960 = vmul.f32 %v1242, %v3889
        %v3961 = vmul.f32 %v1243, %v3889
        %v3962 = vmul.f32 %v1244, %v3891
        %v3963 = vmul.f32 %v1245, %v3891
        %v3964 = vmul.f32 %v1246, %v3893
        %v3965 = vmul.f32 %v1247, %v3893
        %v3966 = vmul.f32 %v1248, %v3895
        %v3967 = vmul.f32 %v1249, %v3895
        %v3968 = vmul.f32 %v1250, %v3897
        %v3969 = vmul.f32 %v1251, %v3897
        %v3970 = vmul.f32 %v1252, %v3899
        %v3971 = vmul.f32 %v1253, %v3899
        %v3972 = vmul.f32 %v1254, %v3901
        %v3973 = vmul.f32 %v1255, %v3901
        %v3974 = vmul.f32 %v1256, %v3903
        %v3975 = vmul.f32 %v1257, %v3903
        %v3976 = vmul.f32 %v1258, %v3905
        %v3977 = vmul.f32 %v1259, %v3905
        %v3978 = vmul.f32 %v1260, %v3907
        %v3979 = vmul.f32 %v1261, %v3907
        %s3980 = scalar_lea.vmem %s353, 168 [#allocation2]
        %v3981 = vld [vmem:[%s3980] sm:$0x1]
        %v3982 = vld [vmem:[%s3980 + $0x1] sm:$0x1]
        %v3983 = vld [vmem:[%s3980 + $0x2] sm:$0x1]
        %v3984 = vld [vmem:[%s3980 + $0x3] sm:$0x1]
        %v3985 = vld [vmem:[%s3980 + $0x4] sm:$0x1]
        %v3986 = vld [vmem:[%s3980 + $0x5] sm:$0x1]
        %v3987 = vld [vmem:[%s3980 + $0x6] sm:$0x1]
        %v3988 = vld [vmem:[%s3980 + $0x7] sm:$0x1]
        %v3989 = vld [vmem:[%s3980 + $0x8] sm:$0x1]
        %v3990 = vld [vmem:[%s3980 + $0x9] sm:$0x1]
        %v3991 = vld [vmem:[%s3980 + $0xa] sm:$0x1]
        %v3992 = vld [vmem:[%s3980 + $0xb] sm:$0x1]
        %v3993 = vld [vmem:[%s3980 + $0xc] sm:$0x1]
        %v3994 = vld [vmem:[%s3980 + $0xd] sm:$0x1]
        %v3995 = vld [vmem:[%s3980 + $0xe] sm:$0x1]
        %v3996 = vld [vmem:[%s3980 + $0xf] sm:$0x1]
        %v3997 = vld [vmem:[%s3980 + $0x10] sm:$0x1]
        %v3998 = vld [vmem:[%s3980 + $0x11] sm:$0x1]
        %v3999 = vld [vmem:[%s3980 + $0x12] sm:$0x1]
        %v4000 = vld [vmem:[%s3980 + $0x13] sm:$0x1]
        %v4001 = vld [vmem:[%s3980 + $0x14] sm:$0x1]
        %v4002 = vld [vmem:[%s3980 + $0x15] sm:$0x1]
        %v4003 = vld [vmem:[%s3980 + $0x16] sm:$0x1]
        %v4004 = vld [vmem:[%s3980 + $0x17] sm:$0x1]
        %v4029 = vlaneseq
        %v4030 = vshrl.u32 %v4029, 7
        %v4031 = vsub.s32 0, %v4030
        %v4032 = vrot.slane %v3981, %v4031
        %v4033 = vlaneseq
        %v4034 = vshrl.u32 %v4033, 7
        %v4035 = vsub.s32 0, %v4034
        %v4036 = vrot.slane %v3982, %v4035
        %v4037 = vlaneseq
        %v4038 = vshrl.u32 %v4037, 7
        %v4039 = vsub.s32 0, %v4038
        %v4040 = vrot.slane %v3983, %v4039
        %v4041 = vlaneseq
        %v4042 = vshrl.u32 %v4041, 7
        %v4043 = vsub.s32 0, %v4042
        %v4044 = vrot.slane %v3984, %v4043
        %v4045 = vlaneseq
        %v4046 = vshrl.u32 %v4045, 7
        %v4047 = vsub.s32 0, %v4046
        %v4048 = vrot.slane %v3985, %v4047
        %v4049 = vlaneseq
        %v4050 = vshrl.u32 %v4049, 7
        %v4051 = vsub.s32 0, %v4050
        %v4052 = vrot.slane %v3986, %v4051
        %v4053 = vlaneseq
        %v4054 = vshrl.u32 %v4053, 7
        %v4055 = vsub.s32 0, %v4054
        %v4056 = vrot.slane %v3987, %v4055
        %v4057 = vlaneseq
        %v4058 = vshrl.u32 %v4057, 7
        %v4059 = vsub.s32 0, %v4058
        %v4060 = vrot.slane %v3988, %v4059
        %v4061 = vlaneseq
        %v4062 = vshrl.u32 %v4061, 7
        %v4063 = vsub.s32 0, %v4062
        %v4064 = vrot.slane %v3989, %v4063
        %v4065 = vlaneseq
        %v4066 = vshrl.u32 %v4065, 7
        %v4067 = vsub.s32 0, %v4066
        %v4068 = vrot.slane %v3990, %v4067
        %v4069 = vlaneseq
        %v4070 = vshrl.u32 %v4069, 7
        %v4071 = vsub.s32 0, %v4070
        %v4072 = vrot.slane %v3991, %v4071
        %v4073 = vlaneseq
        %v4074 = vshrl.u32 %v4073, 7
        %v4075 = vsub.s32 0, %v4074
        %v4076 = vrot.slane %v3992, %v4075
        %v4077 = vlaneseq
        %v4078 = vshrl.u32 %v4077, 7
        %v4079 = vsub.s32 0, %v4078
        %v4080 = vrot.slane %v3993, %v4079
        %v4081 = vlaneseq
        %v4082 = vshrl.u32 %v4081, 7
        %v4083 = vsub.s32 0, %v4082
        %v4084 = vrot.slane %v3994, %v4083
        %v4085 = vlaneseq
        %v4086 = vshrl.u32 %v4085, 7
        %v4087 = vsub.s32 0, %v4086
        %v4088 = vrot.slane %v3995, %v4087
        %v4089 = vlaneseq
        %v4090 = vshrl.u32 %v4089, 7
        %v4091 = vsub.s32 0, %v4090
        %v4092 = vrot.slane %v3996, %v4091
        %v4093 = vlaneseq
        %v4094 = vshrl.u32 %v4093, 7
        %v4095 = vsub.s32 0, %v4094
        %v4096 = vrot.slane %v3997, %v4095
        %v4097 = vlaneseq
        %v4098 = vshrl.u32 %v4097, 7
        %v4099 = vsub.s32 0, %v4098
        %v4100 = vrot.slane %v3998, %v4099
        %v4101 = vlaneseq
        %v4102 = vshrl.u32 %v4101, 7
        %v4103 = vsub.s32 0, %v4102
        %v4104 = vrot.slane %v3999, %v4103
        %v4105 = vlaneseq
        %v4106 = vshrl.u32 %v4105, 7
        %v4107 = vsub.s32 0, %v4106
        %v4108 = vrot.slane %v4000, %v4107
        %v4109 = vlaneseq
        %v4110 = vshrl.u32 %v4109, 7
        %v4111 = vsub.s32 0, %v4110
        %v4112 = vrot.slane %v4001, %v4111
        %v4113 = vlaneseq
        %v4114 = vshrl.u32 %v4113, 7
        %v4115 = vsub.s32 0, %v4114
        %v4116 = vrot.slane %v4002, %v4115
        %v4117 = vlaneseq
        %v4118 = vshrl.u32 %v4117, 7
        %v4119 = vsub.s32 0, %v4118
        %v4120 = vrot.slane %v4003, %v4119
        %v4121 = vlaneseq
        %v4122 = vshrl.u32 %v4121, 7
        %v4123 = vsub.s32 0, %v4122
        %v4124 = vrot.slane %v4004, %v4123
        %v4149 = vmul.f32 %v925, %v4032
        %v4150 = vmul.f32 %v926, %v4032
        %v4151 = vmul.f32 %v927, %v4036
        %v4152 = vmul.f32 %v928, %v4036
        %v4153 = vmul.f32 %v929, %v4040
        %v4154 = vmul.f32 %v930, %v4040
        %v4155 = vmul.f32 %v931, %v4044
        %v4156 = vmul.f32 %v932, %v4044
        %v4157 = vmul.f32 %v933, %v4048
        %v4158 = vmul.f32 %v934, %v4048
        %v4159 = vmul.f32 %v935, %v4052
        %v4160 = vmul.f32 %v936, %v4052
        %v4161 = vmul.f32 %v937, %v4056
        %v4162 = vmul.f32 %v938, %v4056
        %v4163 = vmul.f32 %v939, %v4060
        %v4164 = vmul.f32 %v940, %v4060
        %v4165 = vmul.f32 %v941, %v4064
        %v4166 = vmul.f32 %v942, %v4064
        %v4167 = vmul.f32 %v943, %v4068
        %v4168 = vmul.f32 %v944, %v4068
        %v4169 = vmul.f32 %v945, %v4072
        %v4170 = vmul.f32 %v946, %v4072
        %v4171 = vmul.f32 %v947, %v4076
        %v4172 = vmul.f32 %v948, %v4076
        %v4173 = vmul.f32 %v949, %v4080
        %v4174 = vmul.f32 %v950, %v4080
        %v4175 = vmul.f32 %v951, %v4084
        %v4176 = vmul.f32 %v952, %v4084
        %v4177 = vmul.f32 %v953, %v4088
        %v4178 = vmul.f32 %v954, %v4088
        %v4179 = vmul.f32 %v955, %v4092
        %v4180 = vmul.f32 %v956, %v4092
        %v4181 = vmul.f32 %v957, %v4096
        %v4182 = vmul.f32 %v958, %v4096
        %v4183 = vmul.f32 %v959, %v4100
        %v4184 = vmul.f32 %v960, %v4100
        %v4185 = vmul.f32 %v961, %v4104
        %v4186 = vmul.f32 %v962, %v4104
        %v4187 = vmul.f32 %v963, %v4108
        %v4188 = vmul.f32 %v964, %v4108
        %v4189 = vmul.f32 %v965, %v4112
        %v4190 = vmul.f32 %v966, %v4112
        %v4191 = vmul.f32 %v967, %v4116
        %v4192 = vmul.f32 %v968, %v4116
        %v4193 = vmul.f32 %v969, %v4120
        %v4194 = vmul.f32 %v970, %v4120
        %v4195 = vmul.f32 %v971, %v4124
        %v4196 = vmul.f32 %v972, %v4124
        %4245 = vrot.lane.b32.xlu0 %v4149, 15
        %v4246 = vpop.permute.xlu0 %4245
        %4247 = vrot.lane.b32.xlu0 %v4150, 15
        %v4248 = vpop.permute.xlu0 %4247
        %4249 = vrot.lane.b32.xlu0 %v4151, 15
        %v4250 = vpop.permute.xlu0 %4249
        %4251 = vrot.lane.b32.xlu0 %v4152, 15
        %v4252 = vpop.permute.xlu0 %4251
        %4253 = vrot.lane.b32.xlu0 %v4153, 15
        %v4254 = vpop.permute.xlu0 %4253
        %4255 = vrot.lane.b32.xlu0 %v4154, 15
        %v4256 = vpop.permute.xlu0 %4255
        %4257 = vrot.lane.b32.xlu0 %v4155, 15
        %v4258 = vpop.permute.xlu0 %4257
        %4259 = vrot.lane.b32.xlu0 %v4156, 15
        %v4260 = vpop.permute.xlu0 %4259
        %4261 = vrot.lane.b32.xlu0 %v4157, 15
        %v4262 = vpop.permute.xlu0 %4261
        %4263 = vrot.lane.b32.xlu0 %v4158, 15
        %v4264 = vpop.permute.xlu0 %4263
        %4265 = vrot.lane.b32.xlu0 %v4159, 15
        %v4266 = vpop.permute.xlu0 %4265
        %4267 = vrot.lane.b32.xlu0 %v4160, 15
        %v4268 = vpop.permute.xlu0 %4267
        %4269 = vrot.lane.b32.xlu0 %v4161, 15
        %v4270 = vpop.permute.xlu0 %4269
        %4271 = vrot.lane.b32.xlu0 %v4162, 15
        %v4272 = vpop.permute.xlu0 %4271
        %4273 = vrot.lane.b32.xlu0 %v4163, 15
        %v4274 = vpop.permute.xlu0 %4273
        %4275 = vrot.lane.b32.xlu0 %v4164, 15
        %v4276 = vpop.permute.xlu0 %4275
        %4277 = vrot.lane.b32.xlu0 %v4165, 15
        %v4278 = vpop.permute.xlu0 %4277
        %4279 = vrot.lane.b32.xlu0 %v4166, 15
        %v4280 = vpop.permute.xlu0 %4279
        %4281 = vrot.lane.b32.xlu0 %v4167, 15
        %v4282 = vpop.permute.xlu0 %4281
        %4283 = vrot.lane.b32.xlu0 %v4168, 15
        %v4284 = vpop.permute.xlu0 %4283
        %4285 = vrot.lane.b32.xlu0 %v4169, 15
        %v4286 = vpop.permute.xlu0 %4285
        %4287 = vrot.lane.b32.xlu0 %v4170, 15
        %v4288 = vpop.permute.xlu0 %4287
        %4289 = vrot.lane.b32.xlu0 %v4171, 15
        %v4290 = vpop.permute.xlu0 %4289
        %4291 = vrot.lane.b32.xlu0 %v4172, 15
        %v4292 = vpop.permute.xlu0 %4291
        %4293 = vrot.lane.b32.xlu0 %v4173, 15
        %v4294 = vpop.permute.xlu0 %4293
        %4295 = vrot.lane.b32.xlu0 %v4174, 15
        %v4296 = vpop.permute.xlu0 %4295
        %4297 = vrot.lane.b32.xlu0 %v4175, 15
        %v4298 = vpop.permute.xlu0 %4297
        %4299 = vrot.lane.b32.xlu0 %v4176, 15
        %v4300 = vpop.permute.xlu0 %4299
        %4301 = vrot.lane.b32.xlu0 %v4177, 15
        %v4302 = vpop.permute.xlu0 %4301
        %4303 = vrot.lane.b32.xlu0 %v4178, 15
        %v4304 = vpop.permute.xlu0 %4303
        %4305 = vrot.lane.b32.xlu0 %v4179, 15
        %v4306 = vpop.permute.xlu0 %4305
        %4307 = vrot.lane.b32.xlu0 %v4180, 15
        %v4308 = vpop.permute.xlu0 %4307
        %4309 = vrot.lane.b32.xlu0 %v4181, 15
        %v4310 = vpop.permute.xlu0 %4309
        %4311 = vrot.lane.b32.xlu0 %v4182, 15
        %v4312 = vpop.permute.xlu0 %4311
        %4313 = vrot.lane.b32.xlu0 %v4183, 15
        %v4314 = vpop.permute.xlu0 %4313
        %4315 = vrot.lane.b32.xlu0 %v4184, 15
        %v4316 = vpop.permute.xlu0 %4315
        %4317 = vrot.lane.b32.xlu0 %v4185, 15
        %v4318 = vpop.permute.xlu0 %4317
        %4319 = vrot.lane.b32.xlu0 %v4186, 15
        %v4320 = vpop.permute.xlu0 %4319
        %4321 = vrot.lane.b32.xlu0 %v4187, 15
        %v4322 = vpop.permute.xlu0 %4321
        %4323 = vrot.lane.b32.xlu0 %v4188, 15
        %v4324 = vpop.permute.xlu0 %4323
        %4325 = vrot.lane.b32.xlu0 %v4189, 15
        %v4326 = vpop.permute.xlu0 %4325
        %4327 = vrot.lane.b32.xlu0 %v4190, 15
        %v4328 = vpop.permute.xlu0 %4327
        %4329 = vrot.lane.b32.xlu0 %v4191, 15
        %v4330 = vpop.permute.xlu0 %4329
        %4331 = vrot.lane.b32.xlu0 %v4192, 15
        %v4332 = vpop.permute.xlu0 %4331
        %4333 = vrot.lane.b32.xlu0 %v4193, 15
        %v4334 = vpop.permute.xlu0 %4333
        %4335 = vrot.lane.b32.xlu0 %v4194, 15
        %v4336 = vpop.permute.xlu0 %4335
        %4337 = vrot.lane.b32.xlu0 %v4195, 15
        %v4338 = vpop.permute.xlu0 %4337
        %4339 = vrot.lane.b32.xlu0 %v4196, 15
        %v4340 = vpop.permute.xlu0 %4339
        %v4389 = vadd.f32 %v3932, %v4246
        %v4390 = vadd.f32 %v3933, %v4248
        %v4391 = vadd.f32 %v3934, %v4250
        %v4392 = vadd.f32 %v3935, %v4252
        %v4393 = vadd.f32 %v3936, %v4254
        %v4394 = vadd.f32 %v3937, %v4256
        %v4395 = vadd.f32 %v3938, %v4258
        %v4396 = vadd.f32 %v3939, %v4260
        %v4397 = vadd.f32 %v3940, %v4262
        %v4398 = vadd.f32 %v3941, %v4264
        %v4399 = vadd.f32 %v3942, %v4266
        %v4400 = vadd.f32 %v3943, %v4268
        %v4401 = vadd.f32 %v3944, %v4270
        %v4402 = vadd.f32 %v3945, %v4272
        %v4403 = vadd.f32 %v3946, %v4274
        %v4404 = vadd.f32 %v3947, %v4276
        %v4405 = vadd.f32 %v3948, %v4278
        %v4406 = vadd.f32 %v3949, %v4280
        %v4407 = vadd.f32 %v3950, %v4282
        %v4408 = vadd.f32 %v3951, %v4284
        %v4409 = vadd.f32 %v3952, %v4286
        %v4410 = vadd.f32 %v3953, %v4288
        %v4411 = vadd.f32 %v3954, %v4290
        %v4412 = vadd.f32 %v3955, %v4292
        %v4413 = vadd.f32 %v3956, %v4294
        %v4414 = vadd.f32 %v3957, %v4296
        %v4415 = vadd.f32 %v3958, %v4298
        %v4416 = vadd.f32 %v3959, %v4300
        %v4417 = vadd.f32 %v3960, %v4302
        %v4418 = vadd.f32 %v3961, %v4304
        %v4419 = vadd.f32 %v3962, %v4306
        %v4420 = vadd.f32 %v3963, %v4308
        %v4421 = vadd.f32 %v3964, %v4310
        %v4422 = vadd.f32 %v3965, %v4312
        %v4423 = vadd.f32 %v3966, %v4314
        %v4424 = vadd.f32 %v3967, %v4316
        %v4425 = vadd.f32 %v3968, %v4318
        %v4426 = vadd.f32 %v3969, %v4320
        %v4427 = vadd.f32 %v3970, %v4322
        %v4428 = vadd.f32 %v3971, %v4324
        %v4429 = vadd.f32 %v3972, %v4326
        %v4430 = vadd.f32 %v3973, %v4328
        %v4431 = vadd.f32 %v3974, %v4330
        %v4432 = vadd.f32 %v3975, %v4332
        %v4433 = vadd.f32 %v3976, %v4334
        %v4434 = vadd.f32 %v3977, %v4336
        %v4435 = vadd.f32 %v3978, %v4338
        %v4436 = vadd.f32 %v3979, %v4340
        %s4437 = scalar_lea.vmem %s353, 192 [#allocation2]
        %v4438 = vld [vmem:[%s4437] sm:$0x1]
        %v4439 = vld [vmem:[%s4437 + $0x1] sm:$0x1]
        %v4440 = vld [vmem:[%s4437 + $0x2] sm:$0x1]
        %v4441 = vld [vmem:[%s4437 + $0x3] sm:$0x1]
        %v4442 = vld [vmem:[%s4437 + $0x4] sm:$0x1]
        %v4443 = vld [vmem:[%s4437 + $0x5] sm:$0x1]
        %v4444 = vld [vmem:[%s4437 + $0x6] sm:$0x1]
        %v4445 = vld [vmem:[%s4437 + $0x7] sm:$0x1]
        %v4446 = vld [vmem:[%s4437 + $0x8] sm:$0x1]
        %v4447 = vld [vmem:[%s4437 + $0x9] sm:$0x1]
        %v4448 = vld [vmem:[%s4437 + $0xa] sm:$0x1]
        %v4449 = vld [vmem:[%s4437 + $0xb] sm:$0x1]
        %v4450 = vld [vmem:[%s4437 + $0xc] sm:$0x1]
        %v4451 = vld [vmem:[%s4437 + $0xd] sm:$0x1]
        %v4452 = vld [vmem:[%s4437 + $0xe] sm:$0x1]
        %v4453 = vld [vmem:[%s4437 + $0xf] sm:$0x1]
        %v4454 = vld [vmem:[%s4437 + $0x10] sm:$0x1]
        %v4455 = vld [vmem:[%s4437 + $0x11] sm:$0x1]
        %v4456 = vld [vmem:[%s4437 + $0x12] sm:$0x1]
        %v4457 = vld [vmem:[%s4437 + $0x13] sm:$0x1]
        %v4458 = vld [vmem:[%s4437 + $0x14] sm:$0x1]
        %v4459 = vld [vmem:[%s4437 + $0x15] sm:$0x1]
        %v4460 = vld [vmem:[%s4437 + $0x16] sm:$0x1]
        %v4461 = vld [vmem:[%s4437 + $0x17] sm:$0x1]
        %v4486 = vlaneseq
        %v4487 = vshrl.u32 %v4486, 7
        %v4488 = vsub.s32 0, %v4487
        %v4489 = vrot.slane %v4438, %v4488
        %v4490 = vlaneseq
        %v4491 = vshrl.u32 %v4490, 7
        %v4492 = vsub.s32 0, %v4491
        %v4493 = vrot.slane %v4439, %v4492
        %v4494 = vlaneseq
        %v4495 = vshrl.u32 %v4494, 7
        %v4496 = vsub.s32 0, %v4495
        %v4497 = vrot.slane %v4440, %v4496
        %v4498 = vlaneseq
        %v4499 = vshrl.u32 %v4498, 7
        %v4500 = vsub.s32 0, %v4499
        %v4501 = vrot.slane %v4441, %v4500
        %v4502 = vlaneseq
        %v4503 = vshrl.u32 %v4502, 7
        %v4504 = vsub.s32 0, %v4503
        %v4505 = vrot.slane %v4442, %v4504
        %v4506 = vlaneseq
        %v4507 = vshrl.u32 %v4506, 7
        %v4508 = vsub.s32 0, %v4507
        %v4509 = vrot.slane %v4443, %v4508
        %v4510 = vlaneseq
        %v4511 = vshrl.u32 %v4510, 7
        %v4512 = vsub.s32 0, %v4511
        %v4513 = vrot.slane %v4444, %v4512
        %v4514 = vlaneseq
        %v4515 = vshrl.u32 %v4514, 7
        %v4516 = vsub.s32 0, %v4515
        %v4517 = vrot.slane %v4445, %v4516
        %v4518 = vlaneseq
        %v4519 = vshrl.u32 %v4518, 7
        %v4520 = vsub.s32 0, %v4519
        %v4521 = vrot.slane %v4446, %v4520
        %v4522 = vlaneseq
        %v4523 = vshrl.u32 %v4522, 7
        %v4524 = vsub.s32 0, %v4523
        %v4525 = vrot.slane %v4447, %v4524
        %v4526 = vlaneseq
        %v4527 = vshrl.u32 %v4526, 7
        %v4528 = vsub.s32 0, %v4527
        %v4529 = vrot.slane %v4448, %v4528
        %v4530 = vlaneseq
        %v4531 = vshrl.u32 %v4530, 7
        %v4532 = vsub.s32 0, %v4531
        %v4533 = vrot.slane %v4449, %v4532
        %v4534 = vlaneseq
        %v4535 = vshrl.u32 %v4534, 7
        %v4536 = vsub.s32 0, %v4535
        %v4537 = vrot.slane %v4450, %v4536
        %v4538 = vlaneseq
        %v4539 = vshrl.u32 %v4538, 7
        %v4540 = vsub.s32 0, %v4539
        %v4541 = vrot.slane %v4451, %v4540
        %v4542 = vlaneseq
        %v4543 = vshrl.u32 %v4542, 7
        %v4544 = vsub.s32 0, %v4543
        %v4545 = vrot.slane %v4452, %v4544
        %v4546 = vlaneseq
        %v4547 = vshrl.u32 %v4546, 7
        %v4548 = vsub.s32 0, %v4547
        %v4549 = vrot.slane %v4453, %v4548
        %v4550 = vlaneseq
        %v4551 = vshrl.u32 %v4550, 7
        %v4552 = vsub.s32 0, %v4551
        %v4553 = vrot.slane %v4454, %v4552
        %v4554 = vlaneseq
        %v4555 = vshrl.u32 %v4554, 7
        %v4556 = vsub.s32 0, %v4555
        %v4557 = vrot.slane %v4455, %v4556
        %v4558 = vlaneseq
        %v4559 = vshrl.u32 %v4558, 7
        %v4560 = vsub.s32 0, %v4559
        %v4561 = vrot.slane %v4456, %v4560
        %v4562 = vlaneseq
        %v4563 = vshrl.u32 %v4562, 7
        %v4564 = vsub.s32 0, %v4563
        %v4565 = vrot.slane %v4457, %v4564
        %v4566 = vlaneseq
        %v4567 = vshrl.u32 %v4566, 7
        %v4568 = vsub.s32 0, %v4567
        %v4569 = vrot.slane %v4458, %v4568
        %v4570 = vlaneseq
        %v4571 = vshrl.u32 %v4570, 7
        %v4572 = vsub.s32 0, %v4571
        %v4573 = vrot.slane %v4459, %v4572
        %v4574 = vlaneseq
        %v4575 = vshrl.u32 %v4574, 7
        %v4576 = vsub.s32 0, %v4575
        %v4577 = vrot.slane %v4460, %v4576
        %v4578 = vlaneseq
        %v4579 = vshrl.u32 %v4578, 7
        %v4580 = vsub.s32 0, %v4579
        %v4581 = vrot.slane %v4461, %v4580
        %4582 = vrot.lane.b32.xlu0 %v4489, 1
        %v4583 = vpop.permute.xlu0 %4582
        %4584 = vrot.lane.b32.xlu0 %v4493, 1
        %v4585 = vpop.permute.xlu0 %4584
        %4586 = vrot.lane.b32.xlu0 %v4497, 1
        %v4587 = vpop.permute.xlu0 %4586
        %4588 = vrot.lane.b32.xlu0 %v4501, 1
        %v4589 = vpop.permute.xlu0 %4588
        %4590 = vrot.lane.b32.xlu0 %v4505, 1
        %v4591 = vpop.permute.xlu0 %4590
        %4592 = vrot.lane.b32.xlu0 %v4509, 1
        %v4593 = vpop.permute.xlu0 %4592
        %4594 = vrot.lane.b32.xlu0 %v4513, 1
        %v4595 = vpop.permute.xlu0 %4594
        %4596 = vrot.lane.b32.xlu0 %v4517, 1
        %v4597 = vpop.permute.xlu0 %4596
        %4598 = vrot.lane.b32.xlu0 %v4521, 1
        %v4599 = vpop.permute.xlu0 %4598
        %4600 = vrot.lane.b32.xlu0 %v4525, 1
        %v4601 = vpop.permute.xlu0 %4600
        %4602 = vrot.lane.b32.xlu0 %v4529, 1
        %v4603 = vpop.permute.xlu0 %4602
        %4604 = vrot.lane.b32.xlu0 %v4533, 1
        %v4605 = vpop.permute.xlu0 %4604
        %4606 = vrot.lane.b32.xlu0 %v4537, 1
        %v4607 = vpop.permute.xlu0 %4606
        %4608 = vrot.lane.b32.xlu0 %v4541, 1
        %v4609 = vpop.permute.xlu0 %4608
        %4610 = vrot.lane.b32.xlu0 %v4545, 1
        %v4611 = vpop.permute.xlu0 %4610
        %4612 = vrot.lane.b32.xlu0 %v4549, 1
        %v4613 = vpop.permute.xlu0 %4612
        %4614 = vrot.lane.b32.xlu0 %v4553, 1
        %v4615 = vpop.permute.xlu0 %4614
        %4616 = vrot.lane.b32.xlu0 %v4557, 1
        %v4617 = vpop.permute.xlu0 %4616
        %4618 = vrot.lane.b32.xlu0 %v4561, 1
        %v4619 = vpop.permute.xlu0 %4618
        %4620 = vrot.lane.b32.xlu0 %v4565, 1
        %v4621 = vpop.permute.xlu0 %4620
        %4622 = vrot.lane.b32.xlu0 %v4569, 1
        %v4623 = vpop.permute.xlu0 %4622
        %4624 = vrot.lane.b32.xlu0 %v4573, 1
        %v4625 = vpop.permute.xlu0 %4624
        %4626 = vrot.lane.b32.xlu0 %v4577, 1
        %v4627 = vpop.permute.xlu0 %4626
        %4628 = vrot.lane.b32.xlu0 %v4581, 1
        %v4629 = vpop.permute.xlu0 %4628
        %v4654 = vmul.f32 %v1214, %v4583
        %v4655 = vmul.f32 %v1215, %v4583
        %v4656 = vmul.f32 %v1216, %v4585
        %v4657 = vmul.f32 %v1217, %v4585
        %v4658 = vmul.f32 %v1218, %v4587
        %v4659 = vmul.f32 %v1219, %v4587
        %v4660 = vmul.f32 %v1220, %v4589
        %v4661 = vmul.f32 %v1221, %v4589
        %v4662 = vmul.f32 %v1222, %v4591
        %v4663 = vmul.f32 %v1223, %v4591
        %v4664 = vmul.f32 %v1224, %v4593
        %v4665 = vmul.f32 %v1225, %v4593
        %v4666 = vmul.f32 %v1226, %v4595
        %v4667 = vmul.f32 %v1227, %v4595
        %v4668 = vmul.f32 %v1228, %v4597
        %v4669 = vmul.f32 %v1229, %v4597
        %v4670 = vmul.f32 %v1230, %v4599
        %v4671 = vmul.f32 %v1231, %v4599
        %v4672 = vmul.f32 %v1232, %v4601
        %v4673 = vmul.f32 %v1233, %v4601
        %v4674 = vmul.f32 %v1234, %v4603
        %v4675 = vmul.f32 %v1235, %v4603
        %v4676 = vmul.f32 %v1236, %v4605
        %v4677 = vmul.f32 %v1237, %v4605
        %v4678 = vmul.f32 %v1238, %v4607
        %v4679 = vmul.f32 %v1239, %v4607
        %v4680 = vmul.f32 %v1240, %v4609
        %v4681 = vmul.f32 %v1241, %v4609
        %v4682 = vmul.f32 %v1242, %v4611
        %v4683 = vmul.f32 %v1243, %v4611
        %v4684 = vmul.f32 %v1244, %v4613
        %v4685 = vmul.f32 %v1245, %v4613
        %v4686 = vmul.f32 %v1246, %v4615
        %v4687 = vmul.f32 %v1247, %v4615
        %v4688 = vmul.f32 %v1248, %v4617
        %v4689 = vmul.f32 %v1249, %v4617
        %v4690 = vmul.f32 %v1250, %v4619
        %v4691 = vmul.f32 %v1251, %v4619
        %v4692 = vmul.f32 %v1252, %v4621
        %v4693 = vmul.f32 %v1253, %v4621
        %v4694 = vmul.f32 %v1254, %v4623
        %v4695 = vmul.f32 %v1255, %v4623
        %v4696 = vmul.f32 %v1256, %v4625
        %v4697 = vmul.f32 %v1257, %v4625
        %v4698 = vmul.f32 %v1258, %v4627
        %v4699 = vmul.f32 %v1259, %v4627
        %v4700 = vmul.f32 %v1260, %v4629
        %v4701 = vmul.f32 %v1261, %v4629
        %4750 = vrot.lane.b32.xlu0 %v4654, 14
        %v4751 = vpop.permute.xlu0 %4750
        %4752 = vrot.lane.b32.xlu0 %v4655, 14
        %v4753 = vpop.permute.xlu0 %4752
        %4754 = vrot.lane.b32.xlu0 %v4656, 14
        %v4755 = vpop.permute.xlu0 %4754
        %4756 = vrot.lane.b32.xlu0 %v4657, 14
        %v4757 = vpop.permute.xlu0 %4756
        %4758 = vrot.lane.b32.xlu0 %v4658, 14
        %v4759 = vpop.permute.xlu0 %4758
        %4760 = vrot.lane.b32.xlu0 %v4659, 14
        %v4761 = vpop.permute.xlu0 %4760
        %4762 = vrot.lane.b32.xlu0 %v4660, 14
        %v4763 = vpop.permute.xlu0 %4762
        %4764 = vrot.lane.b32.xlu0 %v4661, 14
        %v4765 = vpop.permute.xlu0 %4764
        %4766 = vrot.lane.b32.xlu0 %v4662, 14
        %v4767 = vpop.permute.xlu0 %4766
        %4768 = vrot.lane.b32.xlu0 %v4663, 14
        %v4769 = vpop.permute.xlu0 %4768
        %4770 = vrot.lane.b32.xlu0 %v4664, 14
        %v4771 = vpop.permute.xlu0 %4770
        %4772 = vrot.lane.b32.xlu0 %v4665, 14
        %v4773 = vpop.permute.xlu0 %4772
        %4774 = vrot.lane.b32.xlu0 %v4666, 14
        %v4775 = vpop.permute.xlu0 %4774
        %4776 = vrot.lane.b32.xlu0 %v4667, 14
        %v4777 = vpop.permute.xlu0 %4776
        %4778 = vrot.lane.b32.xlu0 %v4668, 14
        %v4779 = vpop.permute.xlu0 %4778
        %4780 = vrot.lane.b32.xlu0 %v4669, 14
        %v4781 = vpop.permute.xlu0 %4780
        %4782 = vrot.lane.b32.xlu0 %v4670, 14
        %v4783 = vpop.permute.xlu0 %4782
        %4784 = vrot.lane.b32.xlu0 %v4671, 14
        %v4785 = vpop.permute.xlu0 %4784
        %4786 = vrot.lane.b32.xlu0 %v4672, 14
        %v4787 = vpop.permute.xlu0 %4786
        %4788 = vrot.lane.b32.xlu0 %v4673, 14
        %v4789 = vpop.permute.xlu0 %4788
        %4790 = vrot.lane.b32.xlu0 %v4674, 14
        %v4791 = vpop.permute.xlu0 %4790
        %4792 = vrot.lane.b32.xlu0 %v4675, 14
        %v4793 = vpop.permute.xlu0 %4792
        %4794 = vrot.lane.b32.xlu0 %v4676, 14
        %v4795 = vpop.permute.xlu0 %4794
        %4796 = vrot.lane.b32.xlu0 %v4677, 14
        %v4797 = vpop.permute.xlu0 %4796
        %4798 = vrot.lane.b32.xlu0 %v4678, 14
        %v4799 = vpop.permute.xlu0 %4798
        %4800 = vrot.lane.b32.xlu0 %v4679, 14
        %v4801 = vpop.permute.xlu0 %4800
        %4802 = vrot.lane.b32.xlu0 %v4680, 14
        %v4803 = vpop.permute.xlu0 %4802
        %4804 = vrot.lane.b32.xlu0 %v4681, 14
        %v4805 = vpop.permute.xlu0 %4804
        %4806 = vrot.lane.b32.xlu0 %v4682, 14
        %v4807 = vpop.permute.xlu0 %4806
        %4808 = vrot.lane.b32.xlu0 %v4683, 14
        %v4809 = vpop.permute.xlu0 %4808
        %4810 = vrot.lane.b32.xlu0 %v4684, 14
        %v4811 = vpop.permute.xlu0 %4810
        %4812 = vrot.lane.b32.xlu0 %v4685, 14
        %v4813 = vpop.permute.xlu0 %4812
        %4814 = vrot.lane.b32.xlu0 %v4686, 14
        %v4815 = vpop.permute.xlu0 %4814
        %4816 = vrot.lane.b32.xlu0 %v4687, 14
        %v4817 = vpop.permute.xlu0 %4816
        %4818 = vrot.lane.b32.xlu0 %v4688, 14
        %v4819 = vpop.permute.xlu0 %4818
        %4820 = vrot.lane.b32.xlu0 %v4689, 14
        %v4821 = vpop.permute.xlu0 %4820
        %4822 = vrot.lane.b32.xlu0 %v4690, 14
        %v4823 = vpop.permute.xlu0 %4822
        %4824 = vrot.lane.b32.xlu0 %v4691, 14
        %v4825 = vpop.permute.xlu0 %4824
        %4826 = vrot.lane.b32.xlu0 %v4692, 14
        %v4827 = vpop.permute.xlu0 %4826
        %4828 = vrot.lane.b32.xlu0 %v4693, 14
        %v4829 = vpop.permute.xlu0 %4828
        %4830 = vrot.lane.b32.xlu0 %v4694, 14
        %v4831 = vpop.permute.xlu0 %4830
        %4832 = vrot.lane.b32.xlu0 %v4695, 14
        %v4833 = vpop.permute.xlu0 %4832
        %4834 = vrot.lane.b32.xlu0 %v4696, 14
        %v4835 = vpop.permute.xlu0 %4834
        %4836 = vrot.lane.b32.xlu0 %v4697, 14
        %v4837 = vpop.permute.xlu0 %4836
        %4838 = vrot.lane.b32.xlu0 %v4698, 14
        %v4839 = vpop.permute.xlu0 %4838
        %4840 = vrot.lane.b32.xlu0 %v4699, 14
        %v4841 = vpop.permute.xlu0 %4840
        %4842 = vrot.lane.b32.xlu0 %v4700, 14
        %v4843 = vpop.permute.xlu0 %4842
        %4844 = vrot.lane.b32.xlu0 %v4701, 14
        %v4845 = vpop.permute.xlu0 %4844
        %v4894 = vadd.f32 %v4389, %v4751
        %v4895 = vadd.f32 %v4390, %v4753
        %v4896 = vadd.f32 %v4391, %v4755
        %v4897 = vadd.f32 %v4392, %v4757
        %v4898 = vadd.f32 %v4393, %v4759
        %v4899 = vadd.f32 %v4394, %v4761
        %v4900 = vadd.f32 %v4395, %v4763
        %v4901 = vadd.f32 %v4396, %v4765
        %v4902 = vadd.f32 %v4397, %v4767
        %v4903 = vadd.f32 %v4398, %v4769
        %v4904 = vadd.f32 %v4399, %v4771
        %v4905 = vadd.f32 %v4400, %v4773
        %v4906 = vadd.f32 %v4401, %v4775
        %v4907 = vadd.f32 %v4402, %v4777
        %v4908 = vadd.f32 %v4403, %v4779
        %v4909 = vadd.f32 %v4404, %v4781
        %v4910 = vadd.f32 %v4405, %v4783
        %v4911 = vadd.f32 %v4406, %v4785
        %v4912 = vadd.f32 %v4407, %v4787
        %v4913 = vadd.f32 %v4408, %v4789
        %v4914 = vadd.f32 %v4409, %v4791
        %v4915 = vadd.f32 %v4410, %v4793
        %v4916 = vadd.f32 %v4411, %v4795
        %v4917 = vadd.f32 %v4412, %v4797
        %v4918 = vadd.f32 %v4413, %v4799
        %v4919 = vadd.f32 %v4414, %v4801
        %v4920 = vadd.f32 %v4415, %v4803
        %v4921 = vadd.f32 %v4416, %v4805
        %v4922 = vadd.f32 %v4417, %v4807
        %v4923 = vadd.f32 %v4418, %v4809
        %v4924 = vadd.f32 %v4419, %v4811
        %v4925 = vadd.f32 %v4420, %v4813
        %v4926 = vadd.f32 %v4421, %v4815
        %v4927 = vadd.f32 %v4422, %v4817
        %v4928 = vadd.f32 %v4423, %v4819
        %v4929 = vadd.f32 %v4424, %v4821
        %v4930 = vadd.f32 %v4425, %v4823
        %v4931 = vadd.f32 %v4426, %v4825
        %v4932 = vadd.f32 %v4427, %v4827
        %v4933 = vadd.f32 %v4428, %v4829
        %v4934 = vadd.f32 %v4429, %v4831
        %v4935 = vadd.f32 %v4430, %v4833
        %v4936 = vadd.f32 %v4431, %v4835
        %v4937 = vadd.f32 %v4432, %v4837
        %v4938 = vadd.f32 %v4433, %v4839
        %v4939 = vadd.f32 %v4434, %v4841
        %v4940 = vadd.f32 %v4435, %v4843
        %v4941 = vadd.f32 %v4436, %v4845
        %4990 = vrot.lane.b32.xlu0 %v2440, 113
        %v4991 = vpop.permute.xlu0 %4990
        %4992 = vrot.lane.b32.xlu0 %v2441, 113
        %v4993 = vpop.permute.xlu0 %4992
        %4994 = vrot.lane.b32.xlu0 %v2442, 113
        %v4995 = vpop.permute.xlu0 %4994
        %4996 = vrot.lane.b32.xlu0 %v2443, 113
        %v4997 = vpop.permute.xlu0 %4996
        %4998 = vrot.lane.b32.xlu0 %v2444, 113
        %v4999 = vpop.permute.xlu0 %4998
        %5000 = vrot.lane.b32.xlu0 %v2445, 113
        %v5001 = vpop.permute.xlu0 %5000
        %5002 = vrot.lane.b32.xlu0 %v2446, 113
        %v5003 = vpop.permute.xlu0 %5002
        %5004 = vrot.lane.b32.xlu0 %v2447, 113
        %v5005 = vpop.permute.xlu0 %5004
        %5006 = vrot.lane.b32.xlu0 %v2448, 113
        %v5007 = vpop.permute.xlu0 %5006
        %5008 = vrot.lane.b32.xlu0 %v2449, 113
        %v5009 = vpop.permute.xlu0 %5008
        %5010 = vrot.lane.b32.xlu0 %v2450, 113
        %v5011 = vpop.permute.xlu0 %5010
        %5012 = vrot.lane.b32.xlu0 %v2451, 113
        %v5013 = vpop.permute.xlu0 %5012
        %5014 = vrot.lane.b32.xlu0 %v2452, 113
        %v5015 = vpop.permute.xlu0 %5014
        %5016 = vrot.lane.b32.xlu0 %v2453, 113
        %v5017 = vpop.permute.xlu0 %5016
        %5018 = vrot.lane.b32.xlu0 %v2454, 113
        %v5019 = vpop.permute.xlu0 %5018
        %5020 = vrot.lane.b32.xlu0 %v2455, 113
        %v5021 = vpop.permute.xlu0 %5020
        %5022 = vrot.lane.b32.xlu0 %v2456, 113
        %v5023 = vpop.permute.xlu0 %5022
        %5024 = vrot.lane.b32.xlu0 %v2457, 113
        %v5025 = vpop.permute.xlu0 %5024
        %5026 = vrot.lane.b32.xlu0 %v2458, 113
        %v5027 = vpop.permute.xlu0 %5026
        %5028 = vrot.lane.b32.xlu0 %v2459, 113
        %v5029 = vpop.permute.xlu0 %5028
        %5030 = vrot.lane.b32.xlu0 %v2460, 113
        %v5031 = vpop.permute.xlu0 %5030
        %5032 = vrot.lane.b32.xlu0 %v2461, 113
        %v5033 = vpop.permute.xlu0 %5032
        %5034 = vrot.lane.b32.xlu0 %v2462, 113
        %v5035 = vpop.permute.xlu0 %5034
        %5036 = vrot.lane.b32.xlu0 %v2463, 113
        %v5037 = vpop.permute.xlu0 %5036
        %5038 = vrot.lane.b32.xlu0 %v2464, 113
        %v5039 = vpop.permute.xlu0 %5038
        %5040 = vrot.lane.b32.xlu0 %v2465, 113
        %v5041 = vpop.permute.xlu0 %5040
        %5042 = vrot.lane.b32.xlu0 %v2466, 113
        %v5043 = vpop.permute.xlu0 %5042
        %5044 = vrot.lane.b32.xlu0 %v2467, 113
        %v5045 = vpop.permute.xlu0 %5044
        %5046 = vrot.lane.b32.xlu0 %v2468, 113
        %v5047 = vpop.permute.xlu0 %5046
        %5048 = vrot.lane.b32.xlu0 %v2469, 113
        %v5049 = vpop.permute.xlu0 %5048
        %5050 = vrot.lane.b32.xlu0 %v2470, 113
        %v5051 = vpop.permute.xlu0 %5050
        %5052 = vrot.lane.b32.xlu0 %v2471, 113
        %v5053 = vpop.permute.xlu0 %5052
        %5054 = vrot.lane.b32.xlu0 %v2472, 113
        %v5055 = vpop.permute.xlu0 %5054
        %5056 = vrot.lane.b32.xlu0 %v2473, 113
        %v5057 = vpop.permute.xlu0 %5056
        %5058 = vrot.lane.b32.xlu0 %v2474, 113
        %v5059 = vpop.permute.xlu0 %5058
        %5060 = vrot.lane.b32.xlu0 %v2475, 113
        %v5061 = vpop.permute.xlu0 %5060
        %5062 = vrot.lane.b32.xlu0 %v2476, 113
        %v5063 = vpop.permute.xlu0 %5062
        %5064 = vrot.lane.b32.xlu0 %v2477, 113
        %v5065 = vpop.permute.xlu0 %5064
        %5066 = vrot.lane.b32.xlu0 %v2478, 113
        %v5067 = vpop.permute.xlu0 %5066
        %5068 = vrot.lane.b32.xlu0 %v2479, 113
        %v5069 = vpop.permute.xlu0 %5068
        %5070 = vrot.lane.b32.xlu0 %v2480, 113
        %v5071 = vpop.permute.xlu0 %5070
        %5072 = vrot.lane.b32.xlu0 %v2481, 113
        %v5073 = vpop.permute.xlu0 %5072
        %5074 = vrot.lane.b32.xlu0 %v2482, 113
        %v5075 = vpop.permute.xlu0 %5074
        %5076 = vrot.lane.b32.xlu0 %v2483, 113
        %v5077 = vpop.permute.xlu0 %5076
        %5078 = vrot.lane.b32.xlu0 %v2484, 113
        %v5079 = vpop.permute.xlu0 %5078
        %5080 = vrot.lane.b32.xlu0 %v2485, 113
        %v5081 = vpop.permute.xlu0 %5080
        %5082 = vrot.lane.b32.xlu0 %v2486, 113
        %v5083 = vpop.permute.xlu0 %5082
        %5084 = vrot.lane.b32.xlu0 %v2487, 113
        %v5085 = vpop.permute.xlu0 %5084
        %v5134 = vrot.slane %v4991, 7
        %v5135 = vrot.slane %v4995, 7
        %v5136 = vrot.slane %v4999, 7
        %v5137 = vrot.slane %v5003, 7
        %v5138 = vrot.slane %v5007, 7
        %v5139 = vrot.slane %v5011, 7
        %v5140 = vrot.slane %v5015, 7
        %v5141 = vrot.slane %v5019, 7
        %v5142 = vrot.slane %v5023, 7
        %v5143 = vrot.slane %v5027, 7
        %v5144 = vrot.slane %v5031, 7
        %v5145 = vrot.slane %v5035, 7
        %v5146 = vrot.slane %v5039, 7
        %v5147 = vrot.slane %v5043, 7
        %v5148 = vrot.slane %v5047, 7
        %v5149 = vrot.slane %v5051, 7
        %v5150 = vrot.slane %v5055, 7
        %v5151 = vrot.slane %v5059, 7
        %v5152 = vrot.slane %v5063, 7
        %v5153 = vrot.slane %v5067, 7
        %v5154 = vrot.slane %v5071, 7
        %v5155 = vrot.slane %v5075, 7
        %v5156 = vrot.slane %v5079, 7
        %v5157 = vrot.slane %v5083, 7
        %v5158 = vrot.slane %v4993, 7
        %v5159 = vrot.slane %v4997, 7
        %v5160 = vrot.slane %v5001, 7
        %v5161 = vrot.slane %v5005, 7
        %v5162 = vrot.slane %v5009, 7
        %v5163 = vrot.slane %v5013, 7
        %v5164 = vrot.slane %v5017, 7
        %v5165 = vrot.slane %v5021, 7
        %v5166 = vrot.slane %v5025, 7
        %v5167 = vrot.slane %v5029, 7
        %v5168 = vrot.slane %v5033, 7
        %v5169 = vrot.slane %v5037, 7
        %v5170 = vrot.slane %v5041, 7
        %v5171 = vrot.slane %v5045, 7
        %v5172 = vrot.slane %v5049, 7
        %v5173 = vrot.slane %v5053, 7
        %v5174 = vrot.slane %v5057, 7
        %v5175 = vrot.slane %v5061, 7
        %v5176 = vrot.slane %v5065, 7
        %v5177 = vrot.slane %v5069, 7
        %v5178 = vrot.slane %v5073, 7
        %v5179 = vrot.slane %v5077, 7
        %v5180 = vrot.slane %v5081, 7
        %v5181 = vrot.slane %v5085, 7
        %v5182 = vlaneseq
        %v5183 = vshrl.u32 %v5182, 7
        %vm5184 = vcmp.lt.s32.totalorder %v5183, 1
        %v5185 = vsel %vm5184, %v5134, %v5158
        %v5186 = vsel %vm5184, %v5135, %v5159
        %v5187 = vsel %vm5184, %v5136, %v5160
        %v5188 = vsel %vm5184, %v5137, %v5161
        %v5189 = vsel %vm5184, %v5138, %v5162
        %v5190 = vsel %vm5184, %v5139, %v5163
        %v5191 = vsel %vm5184, %v5140, %v5164
        %v5192 = vsel %vm5184, %v5141, %v5165
        %v5193 = vsel %vm5184, %v5142, %v5166
        %v5194 = vsel %vm5184, %v5143, %v5167
        %v5195 = vsel %vm5184, %v5144, %v5168
        %v5196 = vsel %vm5184, %v5145, %v5169
        %v5197 = vsel %vm5184, %v5146, %v5170
        %v5198 = vsel %vm5184, %v5147, %v5171
        %v5199 = vsel %vm5184, %v5148, %v5172
        %v5200 = vsel %vm5184, %v5149, %v5173
        %v5201 = vsel %vm5184, %v5150, %v5174
        %v5202 = vsel %vm5184, %v5151, %v5175
        %v5203 = vsel %vm5184, %v5152, %v5176
        %v5204 = vsel %vm5184, %v5153, %v5177
        %v5205 = vsel %vm5184, %v5154, %v5178
        %v5206 = vsel %vm5184, %v5155, %v5179
        %v5207 = vsel %vm5184, %v5156, %v5180
        %v5208 = vsel %vm5184, %v5157, %v5181
        %v5209 = vsel %vm5184, %v5158, %v5134
        %v5210 = vsel %vm5184, %v5159, %v5135
        %v5211 = vsel %vm5184, %v5160, %v5136
        %v5212 = vsel %vm5184, %v5161, %v5137
        %v5213 = vsel %vm5184, %v5162, %v5138
        %v5214 = vsel %vm5184, %v5163, %v5139
        %v5215 = vsel %vm5184, %v5164, %v5140
        %v5216 = vsel %vm5184, %v5165, %v5141
        %v5217 = vsel %vm5184, %v5166, %v5142
        %v5218 = vsel %vm5184, %v5167, %v5143
        %v5219 = vsel %vm5184, %v5168, %v5144
        %v5220 = vsel %vm5184, %v5169, %v5145
        %v5221 = vsel %vm5184, %v5170, %v5146
        %v5222 = vsel %vm5184, %v5171, %v5147
        %v5223 = vsel %vm5184, %v5172, %v5148
        %v5224 = vsel %vm5184, %v5173, %v5149
        %v5225 = vsel %vm5184, %v5174, %v5150
        %v5226 = vsel %vm5184, %v5175, %v5151
        %v5227 = vsel %vm5184, %v5176, %v5152
        %v5228 = vsel %vm5184, %v5177, %v5153
        %v5229 = vsel %vm5184, %v5178, %v5154
        %v5230 = vsel %vm5184, %v5179, %v5155
        %v5231 = vsel %vm5184, %v5180, %v5156
        %v5232 = vsel %vm5184, %v5181, %v5157
        %v5233 = vld [vmem:[%s5] sm:$0xff]
        %v5234 = vld [vmem:[%s5 + $0x8] sm:$0xff]
        %5236 = vset.pattern.permute.xlu0 0
        %5237 = vperm.xlu0 %5236, %v5233
        %v5238 = vpop.permute.xlu0 %5237
        %5241 = vset.pattern.permute.xlu0 0
        %5242 = vperm.xlu0 %5241, %v5234
        %v5243 = vpop.permute.xlu0 %5242
        %v5245 = vmul.f32 %v5209, %v5238
        %v5246 = vmul.f32 %v5185, %v5243
        %v5247 = vmul.f32 %v5210, %v5238
        %v5248 = vmul.f32 %v5186, %v5243
        %v5249 = vmul.f32 %v5211, %v5238
        %v5250 = vmul.f32 %v5187, %v5243
        %v5251 = vmul.f32 %v5212, %v5238
        %v5252 = vmul.f32 %v5188, %v5243
        %v5253 = vmul.f32 %v5213, %v5238
        %v5254 = vmul.f32 %v5189, %v5243
        %v5255 = vmul.f32 %v5214, %v5238
        %v5256 = vmul.f32 %v5190, %v5243
        %v5257 = vmul.f32 %v5215, %v5238
        %v5258 = vmul.f32 %v5191, %v5243
        %v5259 = vmul.f32 %v5216, %v5238
        %v5260 = vmul.f32 %v5192, %v5243
        %v5261 = vmul.f32 %v5217, %v5238
        %v5262 = vmul.f32 %v5193, %v5243
        %v5263 = vmul.f32 %v5218, %v5238
        %v5264 = vmul.f32 %v5194, %v5243
        %v5265 = vmul.f32 %v5219, %v5238
        %v5266 = vmul.f32 %v5195, %v5243
        %v5267 = vmul.f32 %v5220, %v5238
        %v5268 = vmul.f32 %v5196, %v5243
        %v5269 = vmul.f32 %v5221, %v5238
        %v5270 = vmul.f32 %v5197, %v5243
        %v5271 = vmul.f32 %v5222, %v5238
        %v5272 = vmul.f32 %v5198, %v5243
        %v5273 = vmul.f32 %v5223, %v5238
        %v5274 = vmul.f32 %v5199, %v5243
        %v5275 = vmul.f32 %v5224, %v5238
        %v5276 = vmul.f32 %v5200, %v5243
        %v5277 = vmul.f32 %v5225, %v5238
        %v5278 = vmul.f32 %v5201, %v5243
        %v5279 = vmul.f32 %v5226, %v5238
        %v5280 = vmul.f32 %v5202, %v5243
        %v5281 = vmul.f32 %v5227, %v5238
        %v5282 = vmul.f32 %v5203, %v5243
        %v5283 = vmul.f32 %v5228, %v5238
        %v5284 = vmul.f32 %v5204, %v5243
        %v5285 = vmul.f32 %v5229, %v5238
        %v5286 = vmul.f32 %v5205, %v5243
        %v5287 = vmul.f32 %v5230, %v5238
        %v5288 = vmul.f32 %v5206, %v5243
        %v5289 = vmul.f32 %v5231, %v5238
        %v5290 = vmul.f32 %v5207, %v5243
        %v5291 = vmul.f32 %v5232, %v5238
        %v5292 = vmul.f32 %v5208, %v5243
        %5341 = vrot.lane.b32.xlu0 %v5245, 15
        %v5342 = vpop.permute.xlu0 %5341
        %5343 = vrot.lane.b32.xlu0 %v5246, 15
        %v5344 = vpop.permute.xlu0 %5343
        %5345 = vrot.lane.b32.xlu0 %v5247, 15
        %v5346 = vpop.permute.xlu0 %5345
        %5347 = vrot.lane.b32.xlu0 %v5248, 15
        %v5348 = vpop.permute.xlu0 %5347
        %5349 = vrot.lane.b32.xlu0 %v5249, 15
        %v5350 = vpop.permute.xlu0 %5349
        %5351 = vrot.lane.b32.xlu0 %v5250, 15
        %v5352 = vpop.permute.xlu0 %5351
        %5353 = vrot.lane.b32.xlu0 %v5251, 15
        %v5354 = vpop.permute.xlu0 %5353
        %5355 = vrot.lane.b32.xlu0 %v5252, 15
        %v5356 = vpop.permute.xlu0 %5355
        %5357 = vrot.lane.b32.xlu0 %v5253, 15
        %v5358 = vpop.permute.xlu0 %5357
        %5359 = vrot.lane.b32.xlu0 %v5254, 15
        %v5360 = vpop.permute.xlu0 %5359
        %5361 = vrot.lane.b32.xlu0 %v5255, 15
        %v5362 = vpop.permute.xlu0 %5361
        %5363 = vrot.lane.b32.xlu0 %v5256, 15
        %v5364 = vpop.permute.xlu0 %5363
        %5365 = vrot.lane.b32.xlu0 %v5257, 15
        %v5366 = vpop.permute.xlu0 %5365
        %5367 = vrot.lane.b32.xlu0 %v5258, 15
        %v5368 = vpop.permute.xlu0 %5367
        %5369 = vrot.lane.b32.xlu0 %v5259, 15
        %v5370 = vpop.permute.xlu0 %5369
        %5371 = vrot.lane.b32.xlu0 %v5260, 15
        %v5372 = vpop.permute.xlu0 %5371
        %5373 = vrot.lane.b32.xlu0 %v5261, 15
        %v5374 = vpop.permute.xlu0 %5373
        %5375 = vrot.lane.b32.xlu0 %v5262, 15
        %v5376 = vpop.permute.xlu0 %5375
        %5377 = vrot.lane.b32.xlu0 %v5263, 15
        %v5378 = vpop.permute.xlu0 %5377
        %5379 = vrot.lane.b32.xlu0 %v5264, 15
        %v5380 = vpop.permute.xlu0 %5379
        %5381 = vrot.lane.b32.xlu0 %v5265, 15
        %v5382 = vpop.permute.xlu0 %5381
        %5383 = vrot.lane.b32.xlu0 %v5266, 15
        %v5384 = vpop.permute.xlu0 %5383
        %5385 = vrot.lane.b32.xlu0 %v5267, 15
        %v5386 = vpop.permute.xlu0 %5385
        %5387 = vrot.lane.b32.xlu0 %v5268, 15
        %v5388 = vpop.permute.xlu0 %5387
        %5389 = vrot.lane.b32.xlu0 %v5269, 15
        %v5390 = vpop.permute.xlu0 %5389
        %5391 = vrot.lane.b32.xlu0 %v5270, 15
        %v5392 = vpop.permute.xlu0 %5391
        %5393 = vrot.lane.b32.xlu0 %v5271, 15
        %v5394 = vpop.permute.xlu0 %5393
        %5395 = vrot.lane.b32.xlu0 %v5272, 15
        %v5396 = vpop.permute.xlu0 %5395
        %5397 = vrot.lane.b32.xlu0 %v5273, 15
        %v5398 = vpop.permute.xlu0 %5397
        %5399 = vrot.lane.b32.xlu0 %v5274, 15
        %v5400 = vpop.permute.xlu0 %5399
        %5401 = vrot.lane.b32.xlu0 %v5275, 15
        %v5402 = vpop.permute.xlu0 %5401
        %5403 = vrot.lane.b32.xlu0 %v5276, 15
        %v5404 = vpop.permute.xlu0 %5403
        %5405 = vrot.lane.b32.xlu0 %v5277, 15
        %v5406 = vpop.permute.xlu0 %5405
        %5407 = vrot.lane.b32.xlu0 %v5278, 15
        %v5408 = vpop.permute.xlu0 %5407
        %5409 = vrot.lane.b32.xlu0 %v5279, 15
        %v5410 = vpop.permute.xlu0 %5409
        %5411 = vrot.lane.b32.xlu0 %v5280, 15
        %v5412 = vpop.permute.xlu0 %5411
        %5413 = vrot.lane.b32.xlu0 %v5281, 15
        %v5414 = vpop.permute.xlu0 %5413
        %5415 = vrot.lane.b32.xlu0 %v5282, 15
        %v5416 = vpop.permute.xlu0 %5415
        %5417 = vrot.lane.b32.xlu0 %v5283, 15
        %v5418 = vpop.permute.xlu0 %5417
        %5419 = vrot.lane.b32.xlu0 %v5284, 15
        %v5420 = vpop.permute.xlu0 %5419
        %5421 = vrot.lane.b32.xlu0 %v5285, 15
        %v5422 = vpop.permute.xlu0 %5421
        %5423 = vrot.lane.b32.xlu0 %v5286, 15
        %v5424 = vpop.permute.xlu0 %5423
        %5425 = vrot.lane.b32.xlu0 %v5287, 15
        %v5426 = vpop.permute.xlu0 %5425
        %5427 = vrot.lane.b32.xlu0 %v5288, 15
        %v5428 = vpop.permute.xlu0 %5427
        %5429 = vrot.lane.b32.xlu0 %v5289, 15
        %v5430 = vpop.permute.xlu0 %5429
        %5431 = vrot.lane.b32.xlu0 %v5290, 15
        %v5432 = vpop.permute.xlu0 %5431
        %5433 = vrot.lane.b32.xlu0 %v5291, 15
        %v5434 = vpop.permute.xlu0 %5433
        %5435 = vrot.lane.b32.xlu0 %v5292, 15
        %v5436 = vpop.permute.xlu0 %5435
        %v5485 = vadd.f32 %v3667, %v5342
        %v5486 = vadd.f32 %v3668, %v5344
        %v5487 = vadd.f32 %v3669, %v5346
        %v5488 = vadd.f32 %v3670, %v5348
        %v5489 = vadd.f32 %v3671, %v5350
        %v5490 = vadd.f32 %v3672, %v5352
        %v5491 = vadd.f32 %v3673, %v5354
        %v5492 = vadd.f32 %v3674, %v5356
        %v5493 = vadd.f32 %v3675, %v5358
        %v5494 = vadd.f32 %v3676, %v5360
        %v5495 = vadd.f32 %v3677, %v5362
        %v5496 = vadd.f32 %v3678, %v5364
        %v5497 = vadd.f32 %v3679, %v5366
        %v5498 = vadd.f32 %v3680, %v5368
        %v5499 = vadd.f32 %v3681, %v5370
        %v5500 = vadd.f32 %v3682, %v5372
        %v5501 = vadd.f32 %v3683, %v5374
        %v5502 = vadd.f32 %v3684, %v5376
        %v5503 = vadd.f32 %v3685, %v5378
        %v5504 = vadd.f32 %v3686, %v5380
        %v5505 = vadd.f32 %v3687, %v5382
        %v5506 = vadd.f32 %v3688, %v5384
        %v5507 = vadd.f32 %v3689, %v5386
        %v5508 = vadd.f32 %v3690, %v5388
        %v5509 = vadd.f32 %v3691, %v5390
        %v5510 = vadd.f32 %v3692, %v5392
        %v5511 = vadd.f32 %v3693, %v5394
        %v5512 = vadd.f32 %v3694, %v5396
        %v5513 = vadd.f32 %v3695, %v5398
        %v5514 = vadd.f32 %v3696, %v5400
        %v5515 = vadd.f32 %v3697, %v5402
        %v5516 = vadd.f32 %v3698, %v5404
        %v5517 = vadd.f32 %v3699, %v5406
        %v5518 = vadd.f32 %v3700, %v5408
        %v5519 = vadd.f32 %v3701, %v5410
        %v5520 = vadd.f32 %v3702, %v5412
        %v5521 = vadd.f32 %v3703, %v5414
        %v5522 = vadd.f32 %v3704, %v5416
        %v5523 = vadd.f32 %v3705, %v5418
        %v5524 = vadd.f32 %v3706, %v5420
        %v5525 = vadd.f32 %v3707, %v5422
        %v5526 = vadd.f32 %v3708, %v5424
        %v5527 = vadd.f32 %v3709, %v5426
        %v5528 = vadd.f32 %v3710, %v5428
        %v5529 = vadd.f32 %v3711, %v5430
        %v5530 = vadd.f32 %v3712, %v5432
        %v5531 = vadd.f32 %v3713, %v5434
        %v5532 = vadd.f32 %v3714, %v5436
        %5581 = vrot.lane.b32.xlu0 %v4894, 113
        %v5582 = vpop.permute.xlu0 %5581
        %5583 = vrot.lane.b32.xlu0 %v4895, 113
        %v5584 = vpop.permute.xlu0 %5583
        %5585 = vrot.lane.b32.xlu0 %v4896, 113
        %v5586 = vpop.permute.xlu0 %5585
        %5587 = vrot.lane.b32.xlu0 %v4897, 113
        %v5588 = vpop.permute.xlu0 %5587
        %5589 = vrot.lane.b32.xlu0 %v4898, 113
        %v5590 = vpop.permute.xlu0 %5589
        %5591 = vrot.lane.b32.xlu0 %v4899, 113
        %v5592 = vpop.permute.xlu0 %5591
        %5593 = vrot.lane.b32.xlu0 %v4900, 113
        %v5594 = vpop.permute.xlu0 %5593
        %5595 = vrot.lane.b32.xlu0 %v4901, 113
        %v5596 = vpop.permute.xlu0 %5595
        %5597 = vrot.lane.b32.xlu0 %v4902, 113
        %v5598 = vpop.permute.xlu0 %5597
        %5599 = vrot.lane.b32.xlu0 %v4903, 113
        %v5600 = vpop.permute.xlu0 %5599
        %5601 = vrot.lane.b32.xlu0 %v4904, 113
        %v5602 = vpop.permute.xlu0 %5601
        %5603 = vrot.lane.b32.xlu0 %v4905, 113
        %v5604 = vpop.permute.xlu0 %5603
        %5605 = vrot.lane.b32.xlu0 %v4906, 113
        %v5606 = vpop.permute.xlu0 %5605
        %5607 = vrot.lane.b32.xlu0 %v4907, 113
        %v5608 = vpop.permute.xlu0 %5607
        %5609 = vrot.lane.b32.xlu0 %v4908, 113
        %v5610 = vpop.permute.xlu0 %5609
        %5611 = vrot.lane.b32.xlu0 %v4909, 113
        %v5612 = vpop.permute.xlu0 %5611
        %5613 = vrot.lane.b32.xlu0 %v4910, 113
        %v5614 = vpop.permute.xlu0 %5613
        %5615 = vrot.lane.b32.xlu0 %v4911, 113
        %v5616 = vpop.permute.xlu0 %5615
        %5617 = vrot.lane.b32.xlu0 %v4912, 113
        %v5618 = vpop.permute.xlu0 %5617
        %5619 = vrot.lane.b32.xlu0 %v4913, 113
        %v5620 = vpop.permute.xlu0 %5619
        %5621 = vrot.lane.b32.xlu0 %v4914, 113
        %v5622 = vpop.permute.xlu0 %5621
        %5623 = vrot.lane.b32.xlu0 %v4915, 113
        %v5624 = vpop.permute.xlu0 %5623
        %5625 = vrot.lane.b32.xlu0 %v4916, 113
        %v5626 = vpop.permute.xlu0 %5625
        %5627 = vrot.lane.b32.xlu0 %v4917, 113
        %v5628 = vpop.permute.xlu0 %5627
        %5629 = vrot.lane.b32.xlu0 %v4918, 113
        %v5630 = vpop.permute.xlu0 %5629
        %5631 = vrot.lane.b32.xlu0 %v4919, 113
        %v5632 = vpop.permute.xlu0 %5631
        %5633 = vrot.lane.b32.xlu0 %v4920, 113
        %v5634 = vpop.permute.xlu0 %5633
        %5635 = vrot.lane.b32.xlu0 %v4921, 113
        %v5636 = vpop.permute.xlu0 %5635
        %5637 = vrot.lane.b32.xlu0 %v4922, 113
        %v5638 = vpop.permute.xlu0 %5637
        %5639 = vrot.lane.b32.xlu0 %v4923, 113
        %v5640 = vpop.permute.xlu0 %5639
        %5641 = vrot.lane.b32.xlu0 %v4924, 113
        %v5642 = vpop.permute.xlu0 %5641
        %5643 = vrot.lane.b32.xlu0 %v4925, 113
        %v5644 = vpop.permute.xlu0 %5643
        %5645 = vrot.lane.b32.xlu0 %v4926, 113
        %v5646 = vpop.permute.xlu0 %5645
        %5647 = vrot.lane.b32.xlu0 %v4927, 113
        %v5648 = vpop.permute.xlu0 %5647
        %5649 = vrot.lane.b32.xlu0 %v4928, 113
        %v5650 = vpop.permute.xlu0 %5649
        %5651 = vrot.lane.b32.xlu0 %v4929, 113
        %v5652 = vpop.permute.xlu0 %5651
        %5653 = vrot.lane.b32.xlu0 %v4930, 113
        %v5654 = vpop.permute.xlu0 %5653
        %5655 = vrot.lane.b32.xlu0 %v4931, 113
        %v5656 = vpop.permute.xlu0 %5655
        %5657 = vrot.lane.b32.xlu0 %v4932, 113
        %v5658 = vpop.permute.xlu0 %5657
        %5659 = vrot.lane.b32.xlu0 %v4933, 113
        %v5660 = vpop.permute.xlu0 %5659
        %5661 = vrot.lane.b32.xlu0 %v4934, 113
        %v5662 = vpop.permute.xlu0 %5661
        %5663 = vrot.lane.b32.xlu0 %v4935, 113
        %v5664 = vpop.permute.xlu0 %5663
        %5665 = vrot.lane.b32.xlu0 %v4936, 113
        %v5666 = vpop.permute.xlu0 %5665
        %5667 = vrot.lane.b32.xlu0 %v4937, 113
        %v5668 = vpop.permute.xlu0 %5667
        %5669 = vrot.lane.b32.xlu0 %v4938, 113
        %v5670 = vpop.permute.xlu0 %5669
        %5671 = vrot.lane.b32.xlu0 %v4939, 113
        %v5672 = vpop.permute.xlu0 %5671
        %5673 = vrot.lane.b32.xlu0 %v4940, 113
        %v5674 = vpop.permute.xlu0 %5673
        %5675 = vrot.lane.b32.xlu0 %v4941, 113
        %v5676 = vpop.permute.xlu0 %5675
        %v5725 = vrot.slane %v5582, 1
        %v5726 = vrot.slane %v5586, 1
        %v5727 = vrot.slane %v5590, 1
        %v5728 = vrot.slane %v5594, 1
        %v5729 = vrot.slane %v5598, 1
        %v5730 = vrot.slane %v5602, 1
        %v5731 = vrot.slane %v5606, 1
        %v5732 = vrot.slane %v5610, 1
        %v5733 = vrot.slane %v5614, 1
        %v5734 = vrot.slane %v5618, 1
        %v5735 = vrot.slane %v5622, 1
        %v5736 = vrot.slane %v5626, 1
        %v5737 = vrot.slane %v5630, 1
        %v5738 = vrot.slane %v5634, 1
        %v5739 = vrot.slane %v5638, 1
        %v5740 = vrot.slane %v5642, 1
        %v5741 = vrot.slane %v5646, 1
        %v5742 = vrot.slane %v5650, 1
        %v5743 = vrot.slane %v5654, 1
        %v5744 = vrot.slane %v5658, 1
        %v5745 = vrot.slane %v5662, 1
        %v5746 = vrot.slane %v5666, 1
        %v5747 = vrot.slane %v5670, 1
        %v5748 = vrot.slane %v5674, 1
        %v5749 = vrot.slane %v5584, 1
        %v5750 = vrot.slane %v5588, 1
        %v5751 = vrot.slane %v5592, 1
        %v5752 = vrot.slane %v5596, 1
        %v5753 = vrot.slane %v5600, 1
        %v5754 = vrot.slane %v5604, 1
        %v5755 = vrot.slane %v5608, 1
        %v5756 = vrot.slane %v5612, 1
        %v5757 = vrot.slane %v5616, 1
        %v5758 = vrot.slane %v5620, 1
        %v5759 = vrot.slane %v5624, 1
        %v5760 = vrot.slane %v5628, 1
        %v5761 = vrot.slane %v5632, 1
        %v5762 = vrot.slane %v5636, 1
        %v5763 = vrot.slane %v5640, 1
        %v5764 = vrot.slane %v5644, 1
        %v5765 = vrot.slane %v5648, 1
        %v5766 = vrot.slane %v5652, 1
        %v5767 = vrot.slane %v5656, 1
        %v5768 = vrot.slane %v5660, 1
        %v5769 = vrot.slane %v5664, 1
        %v5770 = vrot.slane %v5668, 1
        %v5771 = vrot.slane %v5672, 1
        %v5772 = vrot.slane %v5676, 1
        %vm5773 = vcmp.lt.s32.totalorder %v5183, 7
        %v5774 = vsel %vm5773, %v5725, %v5749
        %v5775 = vsel %vm5773, %v5726, %v5750
        %v5776 = vsel %vm5773, %v5727, %v5751
        %v5777 = vsel %vm5773, %v5728, %v5752
        %v5778 = vsel %vm5773, %v5729, %v5753
        %v5779 = vsel %vm5773, %v5730, %v5754
        %v5780 = vsel %vm5773, %v5731, %v5755
        %v5781 = vsel %vm5773, %v5732, %v5756
        %v5782 = vsel %vm5773, %v5733, %v5757
        %v5783 = vsel %vm5773, %v5734, %v5758
        %v5784 = vsel %vm5773, %v5735, %v5759
        %v5785 = vsel %vm5773, %v5736, %v5760
        %v5786 = vsel %vm5773, %v5737, %v5761
        %v5787 = vsel %vm5773, %v5738, %v5762
        %v5788 = vsel %vm5773, %v5739, %v5763
        %v5789 = vsel %vm5773, %v5740, %v5764
        %v5790 = vsel %vm5773, %v5741, %v5765
        %v5791 = vsel %vm5773, %v5742, %v5766
        %v5792 = vsel %vm5773, %v5743, %v5767
        %v5793 = vsel %vm5773, %v5744, %v5768
        %v5794 = vsel %vm5773, %v5745, %v5769
        %v5795 = vsel %vm5773, %v5746, %v5770
        %v5796 = vsel %vm5773, %v5747, %v5771
        %v5797 = vsel %vm5773, %v5748, %v5772
        %v5798 = vsel %vm5773, %v5749, %v5725
        %v5799 = vsel %vm5773, %v5750, %v5726
        %v5800 = vsel %vm5773, %v5751, %v5727
        %v5801 = vsel %vm5773, %v5752, %v5728
        %v5802 = vsel %vm5773, %v5753, %v5729
        %v5803 = vsel %vm5773, %v5754, %v5730
        %v5804 = vsel %vm5773, %v5755, %v5731
        %v5805 = vsel %vm5773, %v5756, %v5732
        %v5806 = vsel %vm5773, %v5757, %v5733
        %v5807 = vsel %vm5773, %v5758, %v5734
        %v5808 = vsel %vm5773, %v5759, %v5735
        %v5809 = vsel %vm5773, %v5760, %v5736
        %v5810 = vsel %vm5773, %v5761, %v5737
        %v5811 = vsel %vm5773, %v5762, %v5738
        %v5812 = vsel %vm5773, %v5763, %v5739
        %v5813 = vsel %vm5773, %v5764, %v5740
        %v5814 = vsel %vm5773, %v5765, %v5741
        %v5815 = vsel %vm5773, %v5766, %v5742
        %v5816 = vsel %vm5773, %v5767, %v5743
        %v5817 = vsel %vm5773, %v5768, %v5744
        %v5818 = vsel %vm5773, %v5769, %v5745
        %v5819 = vsel %vm5773, %v5770, %v5746
        %v5820 = vsel %vm5773, %v5771, %v5747
        %v5821 = vsel %vm5773, %v5772, %v5748
        %s5822 = scalar_lea.vmem %s5, 16
        %v5823 = vld [vmem:[%s5822] sm:$0xff]
        %v5824 = vld [vmem:[%s5822 + $0x8] sm:$0xff]
        %5826 = vset.pattern.permute.xlu0 0
        %5827 = vperm.xlu0 %5826, %v5823
        %v5828 = vpop.permute.xlu0 %5827
        %5831 = vset.pattern.permute.xlu0 0
        %5832 = vperm.xlu0 %5831, %v5824
        %v5833 = vpop.permute.xlu0 %5832
        %v5835 = vmul.f32 %v5774, %v5828
        %v5836 = vmul.f32 %v5798, %v5833
        %v5837 = vmul.f32 %v5775, %v5828
        %v5838 = vmul.f32 %v5799, %v5833
        %v5839 = vmul.f32 %v5776, %v5828
        %v5840 = vmul.f32 %v5800, %v5833
        %v5841 = vmul.f32 %v5777, %v5828
        %v5842 = vmul.f32 %v5801, %v5833
        %v5843 = vmul.f32 %v5778, %v5828
        %v5844 = vmul.f32 %v5802, %v5833
        %v5845 = vmul.f32 %v5779, %v5828
        %v5846 = vmul.f32 %v5803, %v5833
        %v5847 = vmul.f32 %v5780, %v5828
        %v5848 = vmul.f32 %v5804, %v5833
        %v5849 = vmul.f32 %v5781, %v5828
        %v5850 = vmul.f32 %v5805, %v5833
        %v5851 = vmul.f32 %v5782, %v5828
        %v5852 = vmul.f32 %v5806, %v5833
        %v5853 = vmul.f32 %v5783, %v5828
        %v5854 = vmul.f32 %v5807, %v5833
        %v5855 = vmul.f32 %v5784, %v5828
        %v5856 = vmul.f32 %v5808, %v5833
        %v5857 = vmul.f32 %v5785, %v5828
        %v5858 = vmul.f32 %v5809, %v5833
        %v5859 = vmul.f32 %v5786, %v5828
        %v5860 = vmul.f32 %v5810, %v5833
        %v5861 = vmul.f32 %v5787, %v5828
        %v5862 = vmul.f32 %v5811, %v5833
        %v5863 = vmul.f32 %v5788, %v5828
        %v5864 = vmul.f32 %v5812, %v5833
        %v5865 = vmul.f32 %v5789, %v5828
        %v5866 = vmul.f32 %v5813, %v5833
        %v5867 = vmul.f32 %v5790, %v5828
        %v5868 = vmul.f32 %v5814, %v5833
        %v5869 = vmul.f32 %v5791, %v5828
        %v5870 = vmul.f32 %v5815, %v5833
        %v5871 = vmul.f32 %v5792, %v5828
        %v5872 = vmul.f32 %v5816, %v5833
        %v5873 = vmul.f32 %v5793, %v5828
        %v5874 = vmul.f32 %v5817, %v5833
        %v5875 = vmul.f32 %v5794, %v5828
        %v5876 = vmul.f32 %v5818, %v5833
        %v5877 = vmul.f32 %v5795, %v5828
        %v5878 = vmul.f32 %v5819, %v5833
        %v5879 = vmul.f32 %v5796, %v5828
        %v5880 = vmul.f32 %v5820, %v5833
        %v5881 = vmul.f32 %v5797, %v5828
        %v5882 = vmul.f32 %v5821, %v5833
        %5931 = vrot.lane.b32.xlu0 %v5835, 15
        %v5932 = vpop.permute.xlu0 %5931
        %5933 = vrot.lane.b32.xlu0 %v5836, 15
        %v5934 = vpop.permute.xlu0 %5933
        %5935 = vrot.lane.b32.xlu0 %v5837, 15
        %v5936 = vpop.permute.xlu0 %5935
        %5937 = vrot.lane.b32.xlu0 %v5838, 15
        %v5938 = vpop.permute.xlu0 %5937
        %5939 = vrot.lane.b32.xlu0 %v5839, 15
        %v5940 = vpop.permute.xlu0 %5939
        %5941 = vrot.lane.b32.xlu0 %v5840, 15
        %v5942 = vpop.permute.xlu0 %5941
        %5943 = vrot.lane.b32.xlu0 %v5841, 15
        %v5944 = vpop.permute.xlu0 %5943
        %5945 = vrot.lane.b32.xlu0 %v5842, 15
        %v5946 = vpop.permute.xlu0 %5945
        %5947 = vrot.lane.b32.xlu0 %v5843, 15
        %v5948 = vpop.permute.xlu0 %5947
        %5949 = vrot.lane.b32.xlu0 %v5844, 15
        %v5950 = vpop.permute.xlu0 %5949
        %5951 = vrot.lane.b32.xlu0 %v5845, 15
        %v5952 = vpop.permute.xlu0 %5951
        %5953 = vrot.lane.b32.xlu0 %v5846, 15
        %v5954 = vpop.permute.xlu0 %5953
        %5955 = vrot.lane.b32.xlu0 %v5847, 15
        %v5956 = vpop.permute.xlu0 %5955
        %5957 = vrot.lane.b32.xlu0 %v5848, 15
        %v5958 = vpop.permute.xlu0 %5957
        %5959 = vrot.lane.b32.xlu0 %v5849, 15
        %v5960 = vpop.permute.xlu0 %5959
        %5961 = vrot.lane.b32.xlu0 %v5850, 15
        %v5962 = vpop.permute.xlu0 %5961
        %5963 = vrot.lane.b32.xlu0 %v5851, 15
        %v5964 = vpop.permute.xlu0 %5963
        %5965 = vrot.lane.b32.xlu0 %v5852, 15
        %v5966 = vpop.permute.xlu0 %5965
        %5967 = vrot.lane.b32.xlu0 %v5853, 15
        %v5968 = vpop.permute.xlu0 %5967
        %5969 = vrot.lane.b32.xlu0 %v5854, 15
        %v5970 = vpop.permute.xlu0 %5969
        %5971 = vrot.lane.b32.xlu0 %v5855, 15
        %v5972 = vpop.permute.xlu0 %5971
        %5973 = vrot.lane.b32.xlu0 %v5856, 15
        %v5974 = vpop.permute.xlu0 %5973
        %5975 = vrot.lane.b32.xlu0 %v5857, 15
        %v5976 = vpop.permute.xlu0 %5975
        %5977 = vrot.lane.b32.xlu0 %v5858, 15
        %v5978 = vpop.permute.xlu0 %5977
        %5979 = vrot.lane.b32.xlu0 %v5859, 15
        %v5980 = vpop.permute.xlu0 %5979
        %5981 = vrot.lane.b32.xlu0 %v5860, 15
        %v5982 = vpop.permute.xlu0 %5981
        %5983 = vrot.lane.b32.xlu0 %v5861, 15
        %v5984 = vpop.permute.xlu0 %5983
        %5985 = vrot.lane.b32.xlu0 %v5862, 15
        %v5986 = vpop.permute.xlu0 %5985
        %5987 = vrot.lane.b32.xlu0 %v5863, 15
        %v5988 = vpop.permute.xlu0 %5987
        %5989 = vrot.lane.b32.xlu0 %v5864, 15
        %v5990 = vpop.permute.xlu0 %5989
        %5991 = vrot.lane.b32.xlu0 %v5865, 15
        %v5992 = vpop.permute.xlu0 %5991
        %5993 = vrot.lane.b32.xlu0 %v5866, 15
        %v5994 = vpop.permute.xlu0 %5993
        %5995 = vrot.lane.b32.xlu0 %v5867, 15
        %v5996 = vpop.permute.xlu0 %5995
        %5997 = vrot.lane.b32.xlu0 %v5868, 15
        %v5998 = vpop.permute.xlu0 %5997
        %5999 = vrot.lane.b32.xlu0 %v5869, 15
        %v6000 = vpop.permute.xlu0 %5999
        %6001 = vrot.lane.b32.xlu0 %v5870, 15
        %v6002 = vpop.permute.xlu0 %6001
        %6003 = vrot.lane.b32.xlu0 %v5871, 15
        %v6004 = vpop.permute.xlu0 %6003
        %6005 = vrot.lane.b32.xlu0 %v5872, 15
        %v6006 = vpop.permute.xlu0 %6005
        %6007 = vrot.lane.b32.xlu0 %v5873, 15
        %v6008 = vpop.permute.xlu0 %6007
        %6009 = vrot.lane.b32.xlu0 %v5874, 15
        %v6010 = vpop.permute.xlu0 %6009
        %6011 = vrot.lane.b32.xlu0 %v5875, 15
        %v6012 = vpop.permute.xlu0 %6011
        %6013 = vrot.lane.b32.xlu0 %v5876, 15
        %v6014 = vpop.permute.xlu0 %6013
        %6015 = vrot.lane.b32.xlu0 %v5877, 15
        %v6016 = vpop.permute.xlu0 %6015
        %6017 = vrot.lane.b32.xlu0 %v5878, 15
        %v6018 = vpop.permute.xlu0 %6017
        %6019 = vrot.lane.b32.xlu0 %v5879, 15
        %v6020 = vpop.permute.xlu0 %6019
        %6021 = vrot.lane.b32.xlu0 %v5880, 15
        %v6022 = vpop.permute.xlu0 %6021
        %6023 = vrot.lane.b32.xlu0 %v5881, 15
        %v6024 = vpop.permute.xlu0 %6023
        %6025 = vrot.lane.b32.xlu0 %v5882, 15
        %v6026 = vpop.permute.xlu0 %6025
        %v6075 = vadd.f32 %v5485, %v5932
        %v6076 = vadd.f32 %v5486, %v5934
        %v6077 = vadd.f32 %v5487, %v5936
        %v6078 = vadd.f32 %v5488, %v5938
        %v6079 = vadd.f32 %v5489, %v5940
        %v6080 = vadd.f32 %v5490, %v5942
        %v6081 = vadd.f32 %v5491, %v5944
        %v6082 = vadd.f32 %v5492, %v5946
        %v6083 = vadd.f32 %v5493, %v5948
        %v6084 = vadd.f32 %v5494, %v5950
        %v6085 = vadd.f32 %v5495, %v5952
        %v6086 = vadd.f32 %v5496, %v5954
        %v6087 = vadd.f32 %v5497, %v5956
        %v6088 = vadd.f32 %v5498, %v5958
        %v6089 = vadd.f32 %v5499, %v5960
        %v6090 = vadd.f32 %v5500, %v5962
        %v6091 = vadd.f32 %v5501, %v5964
        %v6092 = vadd.f32 %v5502, %v5966
        %v6093 = vadd.f32 %v5503, %v5968
        %v6094 = vadd.f32 %v5504, %v5970
        %v6095 = vadd.f32 %v5505, %v5972
        %v6096 = vadd.f32 %v5506, %v5974
        %v6097 = vadd.f32 %v5507, %v5976
        %v6098 = vadd.f32 %v5508, %v5978
        %v6099 = vadd.f32 %v5509, %v5980
        %v6100 = vadd.f32 %v5510, %v5982
        %v6101 = vadd.f32 %v5511, %v5984
        %v6102 = vadd.f32 %v5512, %v5986
        %v6103 = vadd.f32 %v5513, %v5988
        %v6104 = vadd.f32 %v5514, %v5990
        %v6105 = vadd.f32 %v5515, %v5992
        %v6106 = vadd.f32 %v5516, %v5994
        %v6107 = vadd.f32 %v5517, %v5996
        %v6108 = vadd.f32 %v5518, %v5998
        %v6109 = vadd.f32 %v5519, %v6000
        %v6110 = vadd.f32 %v5520, %v6002
        %v6111 = vadd.f32 %v5521, %v6004
        %v6112 = vadd.f32 %v5522, %v6006
        %v6113 = vadd.f32 %v5523, %v6008
        %v6114 = vadd.f32 %v5524, %v6010
        %v6115 = vadd.f32 %v5525, %v6012
        %v6116 = vadd.f32 %v5526, %v6014
        %v6117 = vadd.f32 %v5527, %v6016
        %v6118 = vadd.f32 %v5528, %v6018
        %v6119 = vadd.f32 %v5529, %v6020
        %v6120 = vadd.f32 %v5530, %v6022
        %v6121 = vadd.f32 %v5531, %v6024
        %v6122 = vadd.f32 %v5532, %v6026
        %v6123 = vld [vmem:[%s432] sm:$0x1]
        %v6124 = vld [vmem:[%s432 + $0x1] sm:$0x1]
        %v6125 = vld [vmem:[%s432 + $0x2] sm:$0x1]
        %v6126 = vld [vmem:[%s432 + $0x3] sm:$0x1]
        %v6127 = vld [vmem:[%s432 + $0x4] sm:$0x1]
        %v6128 = vld [vmem:[%s432 + $0x5] sm:$0x1]
        %v6129 = vld [vmem:[%s432 + $0x6] sm:$0x1]
        %v6130 = vld [vmem:[%s432 + $0x7] sm:$0x1]
        %v6131 = vld [vmem:[%s432 + $0x8] sm:$0x1]
        %v6132 = vld [vmem:[%s432 + $0x9] sm:$0x1]
        %v6133 = vld [vmem:[%s432 + $0xa] sm:$0x1]
        %v6134 = vld [vmem:[%s432 + $0xb] sm:$0x1]
        %v6135 = vld [vmem:[%s432 + $0xc] sm:$0x1]
        %v6136 = vld [vmem:[%s432 + $0xd] sm:$0x1]
        %v6137 = vld [vmem:[%s432 + $0xe] sm:$0x1]
        %v6138 = vld [vmem:[%s432 + $0xf] sm:$0x1]
        %v6139 = vld [vmem:[%s432 + $0x10] sm:$0x1]
        %v6140 = vld [vmem:[%s432 + $0x11] sm:$0x1]
        %v6141 = vld [vmem:[%s432 + $0x12] sm:$0x1]
        %v6142 = vld [vmem:[%s432 + $0x13] sm:$0x1]
        %v6143 = vld [vmem:[%s432 + $0x14] sm:$0x1]
        %v6144 = vld [vmem:[%s432 + $0x15] sm:$0x1]
        %v6145 = vld [vmem:[%s432 + $0x16] sm:$0x1]
        %v6146 = vld [vmem:[%s432 + $0x17] sm:$0x1]
        %v6171 = vlaneseq
        %v6172 = vshrl.u32 %v6171, 7
        %v6173 = vsub.s32 0, %v6172
        %v6174 = vrot.slane %v6123, %v6173
        %v6175 = vlaneseq
        %v6176 = vshrl.u32 %v6175, 7
        %v6177 = vsub.s32 0, %v6176
        %v6178 = vrot.slane %v6124, %v6177
        %v6179 = vlaneseq
        %v6180 = vshrl.u32 %v6179, 7
        %v6181 = vsub.s32 0, %v6180
        %v6182 = vrot.slane %v6125, %v6181
        %v6183 = vlaneseq
        %v6184 = vshrl.u32 %v6183, 7
        %v6185 = vsub.s32 0, %v6184
        %v6186 = vrot.slane %v6126, %v6185
        %v6187 = vlaneseq
        %v6188 = vshrl.u32 %v6187, 7
        %v6189 = vsub.s32 0, %v6188
        %v6190 = vrot.slane %v6127, %v6189
        %v6191 = vlaneseq
        %v6192 = vshrl.u32 %v6191, 7
        %v6193 = vsub.s32 0, %v6192
        %v6194 = vrot.slane %v6128, %v6193
        %v6195 = vlaneseq
        %v6196 = vshrl.u32 %v6195, 7
        %v6197 = vsub.s32 0, %v6196
        %v6198 = vrot.slane %v6129, %v6197
        %v6199 = vlaneseq
        %v6200 = vshrl.u32 %v6199, 7
        %v6201 = vsub.s32 0, %v6200
        %v6202 = vrot.slane %v6130, %v6201
        %v6203 = vlaneseq
        %v6204 = vshrl.u32 %v6203, 7
        %v6205 = vsub.s32 0, %v6204
        %v6206 = vrot.slane %v6131, %v6205
        %v6207 = vlaneseq
        %v6208 = vshrl.u32 %v6207, 7
        %v6209 = vsub.s32 0, %v6208
        %v6210 = vrot.slane %v6132, %v6209
        %v6211 = vlaneseq
        %v6212 = vshrl.u32 %v6211, 7
        %v6213 = vsub.s32 0, %v6212
        %v6214 = vrot.slane %v6133, %v6213
        %v6215 = vlaneseq
        %v6216 = vshrl.u32 %v6215, 7
        %v6217 = vsub.s32 0, %v6216
        %v6218 = vrot.slane %v6134, %v6217
        %v6219 = vlaneseq
        %v6220 = vshrl.u32 %v6219, 7
        %v6221 = vsub.s32 0, %v6220
        %v6222 = vrot.slane %v6135, %v6221
        %v6223 = vlaneseq
        %v6224 = vshrl.u32 %v6223, 7
        %v6225 = vsub.s32 0, %v6224
        %v6226 = vrot.slane %v6136, %v6225
        %v6227 = vlaneseq
        %v6228 = vshrl.u32 %v6227, 7
        %v6229 = vsub.s32 0, %v6228
        %v6230 = vrot.slane %v6137, %v6229
        %v6231 = vlaneseq
        %v6232 = vshrl.u32 %v6231, 7
        %v6233 = vsub.s32 0, %v6232
        %v6234 = vrot.slane %v6138, %v6233
        %v6235 = vlaneseq
        %v6236 = vshrl.u32 %v6235, 7
        %v6237 = vsub.s32 0, %v6236
        %v6238 = vrot.slane %v6139, %v6237
        %v6239 = vlaneseq
        %v6240 = vshrl.u32 %v6239, 7
        %v6241 = vsub.s32 0, %v6240
        %v6242 = vrot.slane %v6140, %v6241
        %v6243 = vlaneseq
        %v6244 = vshrl.u32 %v6243, 7
        %v6245 = vsub.s32 0, %v6244
        %v6246 = vrot.slane %v6141, %v6245
        %v6247 = vlaneseq
        %v6248 = vshrl.u32 %v6247, 7
        %v6249 = vsub.s32 0, %v6248
        %v6250 = vrot.slane %v6142, %v6249
        %v6251 = vlaneseq
        %v6252 = vshrl.u32 %v6251, 7
        %v6253 = vsub.s32 0, %v6252
        %v6254 = vrot.slane %v6143, %v6253
        %v6255 = vlaneseq
        %v6256 = vshrl.u32 %v6255, 7
        %v6257 = vsub.s32 0, %v6256
        %v6258 = vrot.slane %v6144, %v6257
        %v6259 = vlaneseq
        %v6260 = vshrl.u32 %v6259, 7
        %v6261 = vsub.s32 0, %v6260
        %v6262 = vrot.slane %v6145, %v6261
        %v6263 = vlaneseq
        %v6264 = vshrl.u32 %v6263, 7
        %v6265 = vsub.s32 0, %v6264
        %v6266 = vrot.slane %v6146, %v6265
        %6267 = vrot.lane.b32.xlu0 %v6174, 15
        %v6268 = vpop.permute.xlu0 %6267
        %6269 = vrot.lane.b32.xlu0 %v6178, 15
        %v6270 = vpop.permute.xlu0 %6269
        %6271 = vrot.lane.b32.xlu0 %v6182, 15
        %v6272 = vpop.permute.xlu0 %6271
        %6273 = vrot.lane.b32.xlu0 %v6186, 15
        %v6274 = vpop.permute.xlu0 %6273
        %6275 = vrot.lane.b32.xlu0 %v6190, 15
        %v6276 = vpop.permute.xlu0 %6275
        %6277 = vrot.lane.b32.xlu0 %v6194, 15
        %v6278 = vpop.permute.xlu0 %6277
        %6279 = vrot.lane.b32.xlu0 %v6198, 15
        %v6280 = vpop.permute.xlu0 %6279
        %6281 = vrot.lane.b32.xlu0 %v6202, 15
        %v6282 = vpop.permute.xlu0 %6281
        %6283 = vrot.lane.b32.xlu0 %v6206, 15
        %v6284 = vpop.permute.xlu0 %6283
        %6285 = vrot.lane.b32.xlu0 %v6210, 15
        %v6286 = vpop.permute.xlu0 %6285
        %6287 = vrot.lane.b32.xlu0 %v6214, 15
        %v6288 = vpop.permute.xlu0 %6287
        %6289 = vrot.lane.b32.xlu0 %v6218, 15
        %v6290 = vpop.permute.xlu0 %6289
        %6291 = vrot.lane.b32.xlu0 %v6222, 15
        %v6292 = vpop.permute.xlu0 %6291
        %6293 = vrot.lane.b32.xlu0 %v6226, 15
        %v6294 = vpop.permute.xlu0 %6293
        %6295 = vrot.lane.b32.xlu0 %v6230, 15
        %v6296 = vpop.permute.xlu0 %6295
        %6297 = vrot.lane.b32.xlu0 %v6234, 15
        %v6298 = vpop.permute.xlu0 %6297
        %6299 = vrot.lane.b32.xlu0 %v6238, 15
        %v6300 = vpop.permute.xlu0 %6299
        %6301 = vrot.lane.b32.xlu0 %v6242, 15
        %v6302 = vpop.permute.xlu0 %6301
        %6303 = vrot.lane.b32.xlu0 %v6246, 15
        %v6304 = vpop.permute.xlu0 %6303
        %6305 = vrot.lane.b32.xlu0 %v6250, 15
        %v6306 = vpop.permute.xlu0 %6305
        %6307 = vrot.lane.b32.xlu0 %v6254, 15
        %v6308 = vpop.permute.xlu0 %6307
        %6309 = vrot.lane.b32.xlu0 %v6258, 15
        %v6310 = vpop.permute.xlu0 %6309
        %6311 = vrot.lane.b32.xlu0 %v6262, 15
        %v6312 = vpop.permute.xlu0 %6311
        %6313 = vrot.lane.b32.xlu0 %v6266, 15
        %v6314 = vpop.permute.xlu0 %6313
        %v6339 = vadd.f32 %v6075, %v6268
        %v6340 = vadd.f32 %v6076, %v6268
        %v6341 = vadd.f32 %v6077, %v6270
        %v6342 = vadd.f32 %v6078, %v6270
        %v6343 = vadd.f32 %v6079, %v6272
        %v6344 = vadd.f32 %v6080, %v6272
        %v6345 = vadd.f32 %v6081, %v6274
        %v6346 = vadd.f32 %v6082, %v6274
        %v6347 = vadd.f32 %v6083, %v6276
        %v6348 = vadd.f32 %v6084, %v6276
        %v6349 = vadd.f32 %v6085, %v6278
        %v6350 = vadd.f32 %v6086, %v6278
        %v6351 = vadd.f32 %v6087, %v6280
        %v6352 = vadd.f32 %v6088, %v6280
        %v6353 = vadd.f32 %v6089, %v6282
        %v6354 = vadd.f32 %v6090, %v6282
        %v6355 = vadd.f32 %v6091, %v6284
        %v6356 = vadd.f32 %v6092, %v6284
        %v6357 = vadd.f32 %v6093, %v6286
        %v6358 = vadd.f32 %v6094, %v6286
        %v6359 = vadd.f32 %v6095, %v6288
        %v6360 = vadd.f32 %v6096, %v6288
        %v6361 = vadd.f32 %v6097, %v6290
        %v6362 = vadd.f32 %v6098, %v6290
        %v6363 = vadd.f32 %v6099, %v6292
        %v6364 = vadd.f32 %v6100, %v6292
        %v6365 = vadd.f32 %v6101, %v6294
        %v6366 = vadd.f32 %v6102, %v6294
        %v6367 = vadd.f32 %v6103, %v6296
        %v6368 = vadd.f32 %v6104, %v6296
        %v6369 = vadd.f32 %v6105, %v6298
        %v6370 = vadd.f32 %v6106, %v6298
        %v6371 = vadd.f32 %v6107, %v6300
        %v6372 = vadd.f32 %v6108, %v6300
        %v6373 = vadd.f32 %v6109, %v6302
        %v6374 = vadd.f32 %v6110, %v6302
        %v6375 = vadd.f32 %v6111, %v6304
        %v6376 = vadd.f32 %v6112, %v6304
        %v6377 = vadd.f32 %v6113, %v6306
        %v6378 = vadd.f32 %v6114, %v6306
        %v6379 = vadd.f32 %v6115, %v6308
        %v6380 = vadd.f32 %v6116, %v6308
        %v6381 = vadd.f32 %v6117, %v6310
        %v6382 = vadd.f32 %v6118, %v6310
        %v6383 = vadd.f32 %v6119, %v6312
        %v6384 = vadd.f32 %v6120, %v6312
        %v6385 = vadd.f32 %v6121, %v6314
        %v6386 = vadd.f32 %v6122, %v6314
        %v6387 = vmax.f32 %v6339, 0.0
        %v6388 = vmax.f32 %v6340, 0.0
        %v6389 = vmax.f32 %v6341, 0.0
        %v6390 = vmax.f32 %v6342, 0.0
        %v6391 = vmax.f32 %v6343, 0.0
        %v6392 = vmax.f32 %v6344, 0.0
        %v6393 = vmax.f32 %v6345, 0.0
        %v6394 = vmax.f32 %v6346, 0.0
        %v6395 = vmax.f32 %v6347, 0.0
        %v6396 = vmax.f32 %v6348, 0.0
        %v6397 = vmax.f32 %v6349, 0.0
        %v6398 = vmax.f32 %v6350, 0.0
        %v6399 = vmax.f32 %v6351, 0.0
        %v6400 = vmax.f32 %v6352, 0.0
        %v6401 = vmax.f32 %v6353, 0.0
        %v6402 = vmax.f32 %v6354, 0.0
        %v6403 = vmax.f32 %v6355, 0.0
        %v6404 = vmax.f32 %v6356, 0.0
        %v6405 = vmax.f32 %v6357, 0.0
        %v6406 = vmax.f32 %v6358, 0.0
        %v6407 = vmax.f32 %v6359, 0.0
        %v6408 = vmax.f32 %v6360, 0.0
        %v6409 = vmax.f32 %v6361, 0.0
        %v6410 = vmax.f32 %v6362, 0.0
        %v6411 = vmax.f32 %v6363, 0.0
        %v6412 = vmax.f32 %v6364, 0.0
        %v6413 = vmax.f32 %v6365, 0.0
        %v6414 = vmax.f32 %v6366, 0.0
        %v6415 = vmax.f32 %v6367, 0.0
        %v6416 = vmax.f32 %v6368, 0.0
        %v6417 = vmax.f32 %v6369, 0.0
        %v6418 = vmax.f32 %v6370, 0.0
        %v6419 = vmax.f32 %v6371, 0.0
        %v6420 = vmax.f32 %v6372, 0.0
        %v6421 = vmax.f32 %v6373, 0.0
        %v6422 = vmax.f32 %v6374, 0.0
        %v6423 = vmax.f32 %v6375, 0.0
        %v6424 = vmax.f32 %v6376, 0.0
        %v6425 = vmax.f32 %v6377, 0.0
        %v6426 = vmax.f32 %v6378, 0.0
        %v6427 = vmax.f32 %v6379, 0.0
        %v6428 = vmax.f32 %v6380, 0.0
        %v6429 = vmax.f32 %v6381, 0.0
        %v6430 = vmax.f32 %v6382, 0.0
        %v6431 = vmax.f32 %v6383, 0.0
        %v6432 = vmax.f32 %v6384, 0.0
        %v6433 = vmax.f32 %v6385, 0.0
        %v6434 = vmax.f32 %v6386, 0.0
        %6483 = vrot.lane.b32.xlu0 %v6387, 113
        %v6484 = vpop.permute.xlu0 %6483
        %6485 = vrot.lane.b32.xlu0 %v6388, 113
        %v6486 = vpop.permute.xlu0 %6485
        %6487 = vrot.lane.b32.xlu0 %v6389, 113
        %v6488 = vpop.permute.xlu0 %6487
        %6489 = vrot.lane.b32.xlu0 %v6390, 113
        %v6490 = vpop.permute.xlu0 %6489
        %6491 = vrot.lane.b32.xlu0 %v6391, 113
        %v6492 = vpop.permute.xlu0 %6491
        %6493 = vrot.lane.b32.xlu0 %v6392, 113
        %v6494 = vpop.permute.xlu0 %6493
        %6495 = vrot.lane.b32.xlu0 %v6393, 113
        %v6496 = vpop.permute.xlu0 %6495
        %6497 = vrot.lane.b32.xlu0 %v6394, 113
        %v6498 = vpop.permute.xlu0 %6497
        %6499 = vrot.lane.b32.xlu0 %v6395, 113
        %v6500 = vpop.permute.xlu0 %6499
        %6501 = vrot.lane.b32.xlu0 %v6396, 113
        %v6502 = vpop.permute.xlu0 %6501
        %6503 = vrot.lane.b32.xlu0 %v6397, 113
        %v6504 = vpop.permute.xlu0 %6503
        %6505 = vrot.lane.b32.xlu0 %v6398, 113
        %v6506 = vpop.permute.xlu0 %6505
        %6507 = vrot.lane.b32.xlu0 %v6399, 113
        %v6508 = vpop.permute.xlu0 %6507
        %6509 = vrot.lane.b32.xlu0 %v6400, 113
        %v6510 = vpop.permute.xlu0 %6509
        %6511 = vrot.lane.b32.xlu0 %v6401, 113
        %v6512 = vpop.permute.xlu0 %6511
        %6513 = vrot.lane.b32.xlu0 %v6402, 113
        %v6514 = vpop.permute.xlu0 %6513
        %6515 = vrot.lane.b32.xlu0 %v6403, 113
        %v6516 = vpop.permute.xlu0 %6515
        %6517 = vrot.lane.b32.xlu0 %v6404, 113
        %v6518 = vpop.permute.xlu0 %6517
        %6519 = vrot.lane.b32.xlu0 %v6405, 113
        %v6520 = vpop.permute.xlu0 %6519
        %6521 = vrot.lane.b32.xlu0 %v6406, 113
        %v6522 = vpop.permute.xlu0 %6521
        %6523 = vrot.lane.b32.xlu0 %v6407, 113
        %v6524 = vpop.permute.xlu0 %6523
        %6525 = vrot.lane.b32.xlu0 %v6408, 113
        %v6526 = vpop.permute.xlu0 %6525
        %6527 = vrot.lane.b32.xlu0 %v6409, 113
        %v6528 = vpop.permute.xlu0 %6527
        %6529 = vrot.lane.b32.xlu0 %v6410, 113
        %v6530 = vpop.permute.xlu0 %6529
        %6531 = vrot.lane.b32.xlu0 %v6411, 113
        %v6532 = vpop.permute.xlu0 %6531
        %6533 = vrot.lane.b32.xlu0 %v6412, 113
        %v6534 = vpop.permute.xlu0 %6533
        %6535 = vrot.lane.b32.xlu0 %v6413, 113
        %v6536 = vpop.permute.xlu0 %6535
        %6537 = vrot.lane.b32.xlu0 %v6414, 113
        %v6538 = vpop.permute.xlu0 %6537
        %6539 = vrot.lane.b32.xlu0 %v6415, 113
        %v6540 = vpop.permute.xlu0 %6539
        %6541 = vrot.lane.b32.xlu0 %v6416, 113
        %v6542 = vpop.permute.xlu0 %6541
        %6543 = vrot.lane.b32.xlu0 %v6417, 113
        %v6544 = vpop.permute.xlu0 %6543
        %6545 = vrot.lane.b32.xlu0 %v6418, 113
        %v6546 = vpop.permute.xlu0 %6545
        %6547 = vrot.lane.b32.xlu0 %v6419, 113
        %v6548 = vpop.permute.xlu0 %6547
        %6549 = vrot.lane.b32.xlu0 %v6420, 113
        %v6550 = vpop.permute.xlu0 %6549
        %6551 = vrot.lane.b32.xlu0 %v6421, 113
        %v6552 = vpop.permute.xlu0 %6551
        %6553 = vrot.lane.b32.xlu0 %v6422, 113
        %v6554 = vpop.permute.xlu0 %6553
        %6555 = vrot.lane.b32.xlu0 %v6423, 113
        %v6556 = vpop.permute.xlu0 %6555
        %6557 = vrot.lane.b32.xlu0 %v6424, 113
        %v6558 = vpop.permute.xlu0 %6557
        %6559 = vrot.lane.b32.xlu0 %v6425, 113
        %v6560 = vpop.permute.xlu0 %6559
        %6561 = vrot.lane.b32.xlu0 %v6426, 113
        %v6562 = vpop.permute.xlu0 %6561
        %6563 = vrot.lane.b32.xlu0 %v6427, 113
        %v6564 = vpop.permute.xlu0 %6563
        %6565 = vrot.lane.b32.xlu0 %v6428, 113
        %v6566 = vpop.permute.xlu0 %6565
        %6567 = vrot.lane.b32.xlu0 %v6429, 113
        %v6568 = vpop.permute.xlu0 %6567
        %6569 = vrot.lane.b32.xlu0 %v6430, 113
        %v6570 = vpop.permute.xlu0 %6569
        %6571 = vrot.lane.b32.xlu0 %v6431, 113
        %v6572 = vpop.permute.xlu0 %6571
        %6573 = vrot.lane.b32.xlu0 %v6432, 113
        %v6574 = vpop.permute.xlu0 %6573
        %6575 = vrot.lane.b32.xlu0 %v6433, 113
        %v6576 = vpop.permute.xlu0 %6575
        %6577 = vrot.lane.b32.xlu0 %v6434, 113
        %v6578 = vpop.permute.xlu0 %6577
        %vm6627 = vcmask 130048
        %6628 = vst.msk [vmem:[%s443] sm:$0xff] %vm6627, %v6484
        %6629 = vst.msk [vmem:[%s443 + $0x8] sm:$0xff] %vm6627, %v6486
        %6630 = vst.msk [vmem:[%s443 + $0x10] sm:$0xff] %vm6627, %v6488
        %6631 = vst.msk [vmem:[%s443 + $0x18] sm:$0xff] %vm6627, %v6490
        %6632 = vst.msk [vmem:[%s443 + $0x20] sm:$0xff] %vm6627, %v6492
        %6633 = vst.msk [vmem:[%s443 + $0x28] sm:$0xff] %vm6627, %v6494
        %6634 = vst.msk [vmem:[%s443 + $0x30] sm:$0xff] %vm6627, %v6496
        %6635 = vst.msk [vmem:[%s443 + $0x38] sm:$0xff] %vm6627, %v6498
        %6636 = vst.msk [vmem:[%s443 + $0x40] sm:$0xff] %vm6627, %v6500
        %6637 = vst.msk [vmem:[%s443 + $0x48] sm:$0xff] %vm6627, %v6502
        %6638 = vst.msk [vmem:[%s443 + $0x50] sm:$0xff] %vm6627, %v6504
        %6639 = vst.msk [vmem:[%s443 + $0x58] sm:$0xff] %vm6627, %v6506
        %6640 = vst.msk [vmem:[%s443 + $0x60] sm:$0xff] %vm6627, %v6508
        %6641 = vst.msk [vmem:[%s443 + $0x68] sm:$0xff] %vm6627, %v6510
        %6642 = vst.msk [vmem:[%s443 + $0x70] sm:$0xff] %vm6627, %v6512
        %6643 = vst.msk [vmem:[%s443 + $0x78] sm:$0xff] %vm6627, %v6514
        %6644 = vst.msk [vmem:[%s443 + $0x80] sm:$0xff] %vm6627, %v6516
        %6645 = vst.msk [vmem:[%s443 + $0x88] sm:$0xff] %vm6627, %v6518
        %6646 = vst.msk [vmem:[%s443 + $0x90] sm:$0xff] %vm6627, %v6520
        %6647 = vst.msk [vmem:[%s443 + $0x98] sm:$0xff] %vm6627, %v6522
        %6648 = vst.msk [vmem:[%s443 + $0xa0] sm:$0xff] %vm6627, %v6524
        %6649 = vst.msk [vmem:[%s443 + $0xa8] sm:$0xff] %vm6627, %v6526
        %6650 = vst.msk [vmem:[%s443 + $0xb0] sm:$0xff] %vm6627, %v6528
        %6651 = vst.msk [vmem:[%s443 + $0xb8] sm:$0xff] %vm6627, %v6530
        %6652 = vst.msk [vmem:[%s443 + $0xc0] sm:$0xff] %vm6627, %v6532
        %6653 = vst.msk [vmem:[%s443 + $0xc8] sm:$0xff] %vm6627, %v6534
        %6654 = vst.msk [vmem:[%s443 + $0xd0] sm:$0xff] %vm6627, %v6536
        %6655 = vst.msk [vmem:[%s443 + $0xd8] sm:$0xff] %vm6627, %v6538
        %6656 = vst.msk [vmem:[%s443 + $0xe0] sm:$0xff] %vm6627, %v6540
        %6657 = vst.msk [vmem:[%s443 + $0xe8] sm:$0xff] %vm6627, %v6542
        %6658 = vst.msk [vmem:[%s443 + $0xf0] sm:$0xff] %vm6627, %v6544
        %6659 = vst.msk [vmem:[%s443 + $0xf8] sm:$0xff] %vm6627, %v6546
        %6660 = vst.msk [vmem:[%s443 + $0x100] sm:$0xff] %vm6627, %v6548
        %6661 = vst.msk [vmem:[%s443 + $0x108] sm:$0xff] %vm6627, %v6550
        %6662 = vst.msk [vmem:[%s443 + $0x110] sm:$0xff] %vm6627, %v6552
        %6663 = vst.msk [vmem:[%s443 + $0x118] sm:$0xff] %vm6627, %v6554
        %6664 = vst.msk [vmem:[%s443 + $0x120] sm:$0xff] %vm6627, %v6556
        %6665 = vst.msk [vmem:[%s443 + $0x128] sm:$0xff] %vm6627, %v6558
        %6666 = vst.msk [vmem:[%s443 + $0x130] sm:$0xff] %vm6627, %v6560
        %6667 = vst.msk [vmem:[%s443 + $0x138] sm:$0xff] %vm6627, %v6562
        %6668 = vst.msk [vmem:[%s443 + $0x140] sm:$0xff] %vm6627, %v6564
        %6669 = vst.msk [vmem:[%s443 + $0x148] sm:$0xff] %vm6627, %v6566
        %6670 = vst.msk [vmem:[%s443 + $0x150] sm:$0xff] %vm6627, %v6568
        %6671 = vst.msk [vmem:[%s443 + $0x158] sm:$0xff] %vm6627, %v6570
        %6672 = vst.msk [vmem:[%s443 + $0x160] sm:$0xff] %vm6627, %v6572
        %6673 = vst.msk [vmem:[%s443 + $0x168] sm:$0xff] %vm6627, %v6574
        %6674 = vst.msk [vmem:[%s443 + $0x170] sm:$0xff] %vm6627, %v6576
        %6675 = vst.msk [vmem:[%s443 + $0x178] sm:$0xff] %vm6627, %v6578
        %s6676 = smul.u32 24, %s22
        %p6677 = scmp.lt.s32.totalorder %s21, 1
        %s6678 = scalar_select %p6677, %s21, 1
        %p6679 = scmp.lt.s32.totalorder %s6676, 71
        %s6680 = scalar_select %p6679, %s6676, 71
        %s6681 = smul.addr %s6680, 2
        %s6682 = smul.addr %s6678, 144
        %s6683 = sadd.s32 %s6681, %s6682
        %s6684 = smul.addr %s6683, 8
        %s6685 = scalar_lea.vmem %s6, %s6684
        // Predicated region
        $region68: #{tpu_custom_call.1} parent=62 // pred_check
          %p6686 = pneg %p202
        $region69: #{tpu_custom_call.1} parent=62 // pred_check_branch
          %6688 = sbr.rel (%p6686) target = $region71
        $region70: #{tpu_custom_call.1} parent=62 // pred_region
          %s6689 = smul.u32 24, %s22
        $region71: #{tpu_custom_call.1} parent=62 // pred_fallthru
          _
      $region63: #{tpu_custom_call.1} parent=5 // pred_fallthru
        _
      %p6690 = scmp.le.s32.totalorder 2, %s12
      // Predicated region
      $region72: #{tpu_custom_call.1} parent=5 // pred_check
        %p6691 = pneg %p6690
      $region73: #{tpu_custom_call.1} parent=5 // pred_check_branch
        %6693 = sbr.rel (%p6691) target = $region75
      $region74: #{tpu_custom_call.1} parent=5 // pred_region
        %s6694 = ssub.s32 %s12, 2
        // Predicated region
        $region76: #{tpu_custom_call.1} parent=74 // pred_check
          %p6695 = pneg %p208
        $region77: #{tpu_custom_call.1} parent=74 // pred_check_branch
          %6697 = sbr.rel (%p6695) target = $region79
        $region78: #{tpu_custom_call.1} parent=74 // pred_region
          %s6698 = smul.u32 24, %s24
          %p6699 = scmp.lt.s32.totalorder %s23, 1
          %s6700 = scalar_select %p6699, %s23, 1
          %p6701 = scmp.lt.s32.totalorder %s6698, 71
          %s6702 = scalar_select %p6701, %s6698, 71
          %s6703 = smul.addr %s6702, 2
          %s6704 = smul.addr %s6700, 144
          %s6705 = sadd.s32 %s6703, %s6704
          %s6706 = smul.addr %s6705, 8
          %s6707 = scalar_lea.vmem %s6, %s6706
        $region79: #{tpu_custom_call.1} parent=74 // pred_fallthru
          _
      $region75: #{tpu_custom_call.1} parent=5 // pred_fallthru
        _
    $region6: #{tpu_custom_call.1} parent=1 // loop_footer
      %s16 = sadd.s32 1, %s12
    $region7: #{tpu_custom_call.1} parent=1 // loop_footer_branch
      %11 = sbr.rel target = $region3
    $region8: #{tpu_custom_call.1} parent=1 // loop_exit
      _

</llo_original>
